<compile_context>
chip_gen: v7x
topology: tpu7x:2x2x1
jax: 0.10.0
libtpu: 0.0.40
codegen_flags: <defaults>
</compile_context>

<pallas_src>
import functools

import jax
import jax.numpy as jnp
from jax.experimental import pallas as pl
from jax.experimental.pallas import tpu as pltpu


def _contextual_embedding_kernel(
    x_ref,                            # [S*Bt, D]   time-major, batch-padded rows
    wih_f_ref, whh_f_ref, b_f_ref,    # fwd LSTM: [D,4H], [H,4H], [1,4H]
    wih_b_ref, whh_b_ref, b_b_ref,    # rev LSTM: [D,4H], [H,4H], [1,4H]
    w1f_ref, w1b_ref, b1_ref,         # fc1 split: [H,F1], [H,F1], [1,F1]
    w2_ref, b2_ref,                   # fc2: [F1,Dout], [1,Dout]
    out_ref,                          # [S*Bt, Dout]
    gxf_buf, gxb_buf,                 # VMEM scratch [S*Bt, 4H] f32 (x-proj + bias)
    hf_buf, hb_buf,                   # VMEM scratch [S*Bt, H]  f32 (hidden states)
    *, seq_len, batch_tile,
):
    S, Bt = seq_len, batch_tile
    H = whh_f_ref.shape[0]
    mm_dtype = whh_f_ref.dtype        # matmul operand dtype (f32 or bf16)
    f32 = jnp.float32

    # ---- Hoisted input projections: one MXU-shaped matmul per direction. ----
    x2 = x_ref[...].astype(mm_dtype)                              # [S*Bt, D]
    gxf_buf[...] = jnp.dot(x2, wih_f_ref[...],
                           preferred_element_type=f32) + b_f_ref[...]
    gxb_buf[...] = jnp.dot(x2, wih_b_ref[...],
                           preferred_element_type=f32) + b_b_ref[...]

    # Loop-invariant recurrent weights, loaded once (hoisted out of the loops).
    whh_f = whh_f_ref[...]
    whh_b = whh_b_ref[...]

    def sigmoid(z):
        # 1/(1+exp(-z)) == 0.5*(tanh(z/2)+1): transcendental goes to the EUP,
        # no VALU divide on the recurrent critical path.
        return 0.5 * (jnp.tanh(0.5 * z) + 1.0)

    def lstm_step(gx_t, h, c, whh):
        gates = gx_t + jnp.dot(h.astype(mm_dtype), whh,
                               preferred_element_type=f32)        # [Bt, 4H]
        # Gate columns pre-ordered (i, f, o, g) on the host:
        ifo = sigmoid(gates[:, :3 * H])
        g = jnp.tanh(gates[:, 3 * H:])
        i, f, o = ifo[:, :H], ifo[:, H:2 * H], ifo[:, 2 * H:]
        c_new = f * c + i * g
        h_new = o * jnp.tanh(c_new)
        return h_new, c_new

    zeros = jnp.zeros((Bt, H), f32)

    # ---- Pass 1: reverse direction; store hidden states into hb_buf. ----
    def bwd_body(step, carry):
        h, c = carry
        t = S - 1 - step
        row = pl.multiple_of(t * Bt, Bt)
        h, c = lstm_step(gxb_buf[pl.ds(row, Bt), :], h, c, whh_b)
        hb_buf[pl.ds(row, Bt), :] = h
        return (h, c)

    jax.lax.fori_loop(0, S, bwd_body, (zeros, zeros), unroll=True)

    # ---- Pass 2: forward direction; store hidden states into hf_buf. ----
    def fwd_body(t, carry):
        h, c = carry
        row = pl.multiple_of(t * Bt, Bt)
        h, c = lstm_step(gxf_buf[pl.ds(row, Bt), :], h, c, whh_f)
        hf_buf[pl.ds(row, Bt), :] = h
        return (h, c)

    jax.lax.fori_loop(0, S, fwd_body, (zeros, zeros), unroll=True)

    # ---- Deferred FC head: batched matmuls + one contiguous slab store. ----
    hf = hf_buf[...].astype(mm_dtype)                             # [S*Bt, H]
    hb = hb_buf[...].astype(mm_dtype)                             # [S*Bt, H]
    hid = (jnp.dot(hf, w1f_ref[...], preferred_element_type=f32)
           + jnp.dot(hb, w1b_ref[...], preferred_element_type=f32)
           + b1_ref[...])
    hid = jnp.maximum(hid, 0.0).astype(mm_dtype)                  # ReLU
    y = jnp.dot(hid, w2_ref[...], preferred_element_type=f32) + b2_ref[...]
    out_ref[...] = y.astype(out_ref.dtype)


def contextual_embedding(x, params, *, matmul_dtype=jnp.float32, batch_tile=None):
    """x: [B, S, D] float32. params: PyTorch-layout biLSTM + FC weights.
    Returns [B, S, Dout] (Dout = input_dim). `matmul_dtype=jnp.bfloat16` casts
    only the MXU operands; recurrence/gates/accumulation stay f32."""
    B, S, D = x.shape
    H = params["w_hh_f"].shape[1]
    F1 = params["fc1_w"].shape[0]
    Dout = params["fc2_w"].shape[0]
    assert params["fc1_w"].shape[1] == 2 * H, "fc1 must take the 2H biLSTM output"
    f32 = jnp.float32

    # Pad batch to a multiple of 8 (f32 sublane): aligned per-step row slices,
    # padded rows ride along for free inside otherwise-underfilled vregs.
    Bp = max(8, ((B + 7) // 8) * 8)
    # Split the padded batch across >= 2 grid blocks when big enough so the
    # "parallel" grid axis shards across v7x's two TensorCores (serial / free
    # on v5e/v6e).
    if batch_tile is None:
        batch_tile = Bp // 2 if (Bp >= 16 and Bp % 16 == 0) else Bp
    Bt = batch_tile
    assert Bp % Bt == 0 and Bt % 8 == 0
    nb = Bp // Bt

    def reorder_gates(w):
        # PyTorch fused-gate order (i, f, g, o) -> (i, f, o, g) so the three
        # sigmoid gates are contiguous in the kernel.
        i, f, g, o = jnp.split(w, 4, axis=0)
        return jnp.concatenate([i, f, o, g], axis=0)

    # --- Host-side layout plumbing (plain XLA; no kernel compute hoisted) ----
    x_p = jnp.pad(x.astype(f32), ((0, Bp - B), (0, 0), (0, 0)))   # [Bp, S, D]
    x_tm = jnp.transpose(x_p, (1, 0, 2))                          # [S, Bp, D]
    x_blk = (x_tm.reshape(S, nb, Bt, D)
             .transpose(1, 0, 2, 3)
             .reshape(nb, S * Bt, D))                             # [nb, S*Bt, D]

    wih_f = reorder_gates(params["w_ih_f"]).T.astype(matmul_dtype)   # [D, 4H]
    whh_f = reorder_gates(params["w_hh_f"]).T.astype(matmul_dtype)   # [H, 4H]
    b_f = reorder_gates(params["b_ih_f"] + params["b_hh_f"]
                        ).reshape(1, 4 * H).astype(f32)
    wih_b = reorder_gates(params["w_ih_b"]).T.astype(matmul_dtype)
    whh_b = reorder_gates(params["w_hh_b"]).T.astype(matmul_dtype)
    b_b = reorder_gates(params["b_ih_b"] + params["b_hh_b"]
                        ).reshape(1, 4 * H).astype(f32)

    w1 = params["fc1_w"].T                                        # [2H, F1]
    w1f = w1[:H].astype(matmul_dtype)                             # fwd-half rows
    w1b = w1[H:].astype(matmul_dtype)                             # bwd-half rows
    b1 = params["fc1_b"].reshape(1, F1).astype(f32)
    w2 = params["fc2_w"].T.astype(matmul_dtype)                   # [F1, Dout]
    b2 = params["fc2_b"].reshape(1, Dout).astype(f32)

    def full(shape):
        return pl.BlockSpec(shape, lambda i: (0,) * len(shape))

    kernel = functools.partial(_contextual_embedding_kernel,
                               seq_len=S, batch_tile=Bt)

    out_blk = pl.pallas_call(
        kernel,
        out_shape=jax.ShapeDtypeStruct((nb, S * Bt, Dout), f32),
        grid_spec=pltpu.PrefetchScalarGridSpec(
            num_scalar_prefetch=0,
            grid=(nb,),
            in_specs=[pl.BlockSpec((None, S * Bt, D), lambda i: (i, 0, 0)),
                      full((D, 4 * H)), full((H, 4 * H)), full((1, 4 * H)),
                      full((D, 4 * H)), full((H, 4 * H)), full((1, 4 * H)),
                      full((H, F1)), full((H, F1)), full((1, F1)),
                      full((F1, Dout)), full((1, Dout))],
            out_specs=pl.BlockSpec((None, S * Bt, Dout), lambda i: (i, 0, 0)),
            scratch_shapes=[pltpu.VMEM((S * Bt, 4 * H), f32),
                            pltpu.VMEM((S * Bt, 4 * H), f32),
                            pltpu.VMEM((S * Bt, H), f32),
                            pltpu.VMEM((S * Bt, H), f32)],
        ),
        compiler_params=pltpu.CompilerParams(
            dimension_semantics=("parallel",)),
    )(x_blk, wih_f, whh_f, b_f, wih_b, whh_b, b_b, w1f, w1b, b1, w2, b2)

    # Undo host-side layout: [nb, S*Bt, Dout] -> [B, S, Dout]
    out_tm = (out_blk.reshape(nb, S, Bt, Dout)
              .transpose(1, 0, 2, 3)
              .reshape(S, Bp, Dout))
    return jnp.transpose(out_tm, (1, 0, 2))[:B]


def _reference(x, params):
    """Plain-JAX reference matching the PyTorch forward."""
    B, S, D = x.shape
    H = params["w_hh_f"].shape[1]

    def run_dir(x_seq, wih, whh, bih, bhh):
        def step(carry, x_t):
            h, c = carry
            gates = x_t @ wih.T + bih + h @ whh.T + bhh
            i = jax.nn.sigmoid(gates[:, 0:H])
            f = jax.nn.sigmoid(gates[:, H:2 * H])
            g = jnp.tanh(gates[:, 2 * H:3 * H])
            o = jax.nn.sigmoid(gates[:, 3 * H:4 * H])
            c = f * c + i * g
            h = o * jnp.tanh(c)
            return (h, c), h
        z = jnp.zeros((B, H), x.dtype)
        _, hs = jax.lax.scan(step, (z, z), x_seq)
        return hs                                            # [S, B, H]

    x_tm = jnp.transpose(x, (1, 0, 2))
    h_f = run_dir(x_tm, params["w_ih_f"], params["w_hh_f"],
                  params["b_ih_f"], params["b_hh_f"])
    h_b = run_dir(x_tm[::-1], params["w_ih_b"], params["w_hh_b"],
                  params["b_ih_b"], params["b_hh_b"])[::-1]
    outputs = jnp.concatenate([h_f, h_b], axis=-1)           # [S, B, 2H]
    outputs = jnp.transpose(outputs, (1, 0, 2))              # [B, S, 2H]
    h1 = jnp.maximum(outputs @ params["fc1_w"].T + params["fc1_b"], 0.0)
    return h1 @ params["fc2_w"].T + params["fc2_b"]


if __name__ == "__main__":
    B, S, D = 2, 8, 32
    H = D  # ContextualEmbedding requires hidden_dim == input_dim

    key = jax.random.PRNGKey(0)
    ks = jax.random.split(key, 13)

    def w(k, shape, scale=0.1):
        return jax.random.normal(k, shape, dtype=jnp.float32) * scale

    params = {
        "w_ih_f": w(ks[0], (4 * H, D)), "w_hh_f": w(ks[1], (4 * H, H)),
        "b_ih_f": w(ks[2], (4 * H,)),   "b_hh_f": w(ks[3], (4 * H,)),
        "w_ih_b": w(ks[4], (4 * H, D)), "w_hh_b": w(ks[5], (4 * H, H)),
        "b_ih_b": w(ks[6], (4 * H,)),   "b_hh_b": w(ks[7], (4 * H,)),
        "fc1_w":  w(ks[8], (2 * D, 2 * D)), "fc1_b": w(ks[9], (2 * D,)),
        "fc2_w":  w(ks[10], (D, 2 * D)),    "fc2_b": w(ks[11], (D,)),
    }

    x = jax.random.normal(ks[12], (B, S, D), dtype=jnp.float32)

    y_ref = _reference(x, params)

    # f32 matmul path: should match the reference tightly.
    y = contextual_embedding(x, params)
    jax.block_until_ready(y)
    assert y.shape == (B, S, D)
    assert jnp.allclose(y, y_ref, atol=2e-4, rtol=2e-4), (
        "f32 mismatch, max abs err = %g" % float(jnp.max(jnp.abs(y - y_ref))))

    # bf16 matmul operands (f32 accumulation / recurrence): looser tolerance.
    y16 = contextual_embedding(x, params, matmul_dtype=jnp.bfloat16)
    jax.block_until_ready(y16)
    assert jnp.allclose(y16, y_ref, atol=5e-2, rtol=5e-2), (
        "bf16 mismatch, max abs err = %g" % float(jnp.max(jnp.abs(y16 - y_ref))))

    print("KERNEL_OK")
</pallas_src>

<mosaic_0001>
module attributes {stable_mosaic.version = 11 : i64} {
  func.func @_contextual_embedding_kernel(%arg0: i32, %arg1: memref<1x64x32xf32, #tpu.memory_space<vmem>>, %arg2: memref<32x128xf32, #tpu.memory_space<vmem>>, %arg3: memref<32x128xf32, #tpu.memory_space<vmem>>, %arg4: memref<1x128xf32, #tpu.memory_space<vmem>>, %arg5: memref<32x128xf32, #tpu.memory_space<vmem>>, %arg6: memref<32x128xf32, #tpu.memory_space<vmem>>, %arg7: memref<1x128xf32, #tpu.memory_space<vmem>>, %arg8: memref<32x64xf32, #tpu.memory_space<vmem>>, %arg9: memref<32x64xf32, #tpu.memory_space<vmem>>, %arg10: memref<1x64xf32, #tpu.memory_space<vmem>>, %arg11: memref<64x32xf32, #tpu.memory_space<vmem>>, %arg12: memref<1x32xf32, #tpu.memory_space<vmem>>, %arg13: memref<1x64x32xf32, #tpu.memory_space<vmem>>, %arg14: memref<64x128xf32, #tpu.memory_space<vmem>>, %arg15: memref<64x128xf32, #tpu.memory_space<vmem>>, %arg16: memref<64x32xf32, #tpu.memory_space<vmem>>, %arg17: memref<64x32xf32, #tpu.memory_space<vmem>>) attributes {dimension_semantics = [#tpu.dimension_semantics<parallel>], iteration_bounds = array<i64: 1>, scalar_prefetch = 0 : i64, scratch_operands = 4 : i64, tpu.core_type = #tpu.core_type<tc>, window_params = [{transform_indices = @transform_0, window_bounds = array<i64: 1, 64, 32>}, {pipeline_mode = #tpu.pipeline_mode<synchronous>, transform_indices = @transform_1, window_bounds = array<i64: 32, 128>}, {pipeline_mode = #tpu.pipeline_mode<synchronous>, transform_indices = @transform_2, window_bounds = array<i64: 32, 128>}, {pipeline_mode = #tpu.pipeline_mode<synchronous>, transform_indices = @transform_3, window_bounds = array<i64: 1, 128>}, {pipeline_mode = #tpu.pipeline_mode<synchronous>, transform_indices = @transform_4, window_bounds = array<i64: 32, 128>}, {pipeline_mode = #tpu.pipeline_mode<synchronous>, transform_indices = @transform_5, window_bounds = array<i64: 32, 128>}, {pipeline_mode = #tpu.pipeline_mode<synchronous>, transform_indices = @transform_6, window_bounds = array<i64: 1, 128>}, {pipeline_mode = #tpu.pipeline_mode<synchronous>, transform_indices = @transform_7, window_bounds = array<i64: 32, 64>}, {pipeline_mode = #tpu.pipeline_mode<synchronous>, transform_indices = @transform_8, window_bounds = array<i64: 32, 64>}, {pipeline_mode = #tpu.pipeline_mode<synchronous>, transform_indices = @transform_9, window_bounds = array<i64: 1, 64>}, {pipeline_mode = #tpu.pipeline_mode<synchronous>, transform_indices = @transform_10, window_bounds = array<i64: 64, 32>}, {pipeline_mode = #tpu.pipeline_mode<synchronous>, transform_indices = @transform_11, window_bounds = array<i64: 1, 32>}, {transform_indices = @transform_12, window_bounds = array<i64: 1, 64, 32>}]} {
    %c0 = arith.constant 0 : index
    %c0_0 = arith.constant 0 : index
    %c0_1 = arith.constant 0 : index
    %0 = vector.load %arg1[%c0, %c0_0, %c0_1] : memref<1x64x32xf32, #tpu.memory_space<vmem>>, vector<1x64x32xf32>
    %1 = vector.shape_cast %0 : vector<1x64x32xf32> to vector<64x32xf32>
    %c0_2 = arith.constant 0 : index
    %c0_3 = arith.constant 0 : index
    %2 = vector.load %arg2[%c0_2, %c0_3] : memref<32x128xf32, #tpu.memory_space<vmem>>, vector<32x128xf32>
    %cst = arith.constant dense<0.000000e+00> : vector<64x128xf32>
    %3 = tpu.matmul %1, %2, %cst {dimension_numbers = #tpu.dot_dimension_numbers<[1], [0], [0], [1], [0, 0, 1, 1], [], []>} : vector<64x32xf32>, vector<32x128xf32>, vector<64x128xf32> -> vector<64x128xf32>
    %c0_4 = arith.constant 0 : index
    %c0_5 = arith.constant 0 : index
    %4 = vector.load %arg4[%c0_4, %c0_5] : memref<1x128xf32, #tpu.memory_space<vmem>>, vector<1x128xf32>
    %5 = vector.broadcast %4 : vector<1x128xf32> to vector<64x128xf32>
    %6 = arith.addf %3, %5 : vector<64x128xf32>
    %c0_6 = arith.constant 0 : index
    %c0_7 = arith.constant 0 : index
    %7 = vector.load %arg14[%c0_6, %c0_7] : memref<64x128xf32, #tpu.memory_space<vmem>>, vector<64x128xf32>
    tpu.vector_store %arg14[%c0_6, %c0_7], %6 {strides = array<i32>} : memref<64x128xf32, #tpu.memory_space<vmem>>, vector<64x128xf32>,
    %c0_8 = arith.constant 0 : index
    %c0_9 = arith.constant 0 : index
    %8 = vector.load %arg5[%c0_8, %c0_9] : memref<32x128xf32, #tpu.memory_space<vmem>>, vector<32x128xf32>
    %cst_10 = arith.constant dense<0.000000e+00> : vector<64x128xf32>
    %9 = tpu.matmul %1, %8, %cst_10 {dimension_numbers = #tpu.dot_dimension_numbers<[1], [0], [0], [1], [0, 0, 1, 1], [], []>} : vector<64x32xf32>, vector<32x128xf32>, vector<64x128xf32> -> vector<64x128xf32>
    %c0_11 = arith.constant 0 : index
    %c0_12 = arith.constant 0 : index
    %10 = vector.load %arg7[%c0_11, %c0_12] : memref<1x128xf32, #tpu.memory_space<vmem>>, vector<1x128xf32>
    %11 = vector.broadcast %10 : vector<1x128xf32> to vector<64x128xf32>
    %12 = arith.addf %9, %11 : vector<64x128xf32>
    %c0_13 = arith.constant 0 : index
    %c0_14 = arith.constant 0 : index
    %13 = vector.load %arg15[%c0_13, %c0_14] : memref<64x128xf32, #tpu.memory_space<vmem>>, vector<64x128xf32>
    tpu.vector_store %arg15[%c0_13, %c0_14], %12 {strides = array<i32>} : memref<64x128xf32, #tpu.memory_space<vmem>>, vector<64x128xf32>,
    %c0_15 = arith.constant 0 : index
    %c0_16 = arith.constant 0 : index
    %14 = vector.load %arg3[%c0_15, %c0_16] : memref<32x128xf32, #tpu.memory_space<vmem>>, vector<32x128xf32>
    %c0_17 = arith.constant 0 : index
    %c0_18 = arith.constant 0 : index
    %15 = vector.load %arg6[%c0_17, %c0_18] : memref<32x128xf32, #tpu.memory_space<vmem>>, vector<32x128xf32>
    %cst_19 = arith.constant 0.000000e+00 : f32
    %16 = vector.broadcast %cst_19 : f32 to vector<8x32xf32>
    %c0_i32 = arith.constant 0 : i32
    %c7_i32 = arith.constant 7 : i32
    %17 = arith.subi %c7_i32, %c0_i32 : i32
    %c8_i32 = arith.constant 8 : i32
    %18 = arith.muli %17, %c8_i32 : i32
    %19 = tpu.assume_multiple %18, 8 : i32
    %20 = arith.index_cast %19 : i32 to index
    %c0_20 = arith.constant 0 : index
    %21 = vector.load %arg15[%20, %c0_20] : memref<64x128xf32, #tpu.memory_space<vmem>>, vector<8x128xf32>
    %cst_21 = arith.constant dense<0.000000e+00> : vector<8x128xf32>
    %22 = tpu.matmul %16, %15, %cst_21 {dimension_numbers = #tpu.dot_dimension_numbers<[1], [0], [0], [1], [0, 0, 1, 1], [], []>} : vector<8x32xf32>, vector<32x128xf32>, vector<8x128xf32> -> vector<8x128xf32>
    %23 = arith.addf %21, %22 : vector<8x128xf32>
    %24 = vector.extract_strided_slice %23 {offsets = [0, 0], sizes = [8, 96], strides = [1, 1]} : vector<8x128xf32> to vector<8x96xf32>
    %cst_22 = arith.constant 5.000000e-01 : f32
    %25 = vector.broadcast %cst_22 : f32 to vector<8x96xf32>
    %26 = arith.mulf %25, %24 : vector<8x96xf32>
    %27 = math.tanh %26 : vector<8x96xf32>
    %cst_23 = arith.constant 1.000000e+00 : f32
    %28 = vector.broadcast %cst_23 : f32 to vector<8x96xf32>
    %29 = arith.addf %27, %28 : vector<8x96xf32>
    %cst_24 = arith.constant 5.000000e-01 : f32
    %30 = vector.broadcast %cst_24 : f32 to vector<8x96xf32>
    %31 = arith.mulf %30, %29 : vector<8x96xf32>
    %32 = vector.extract_strided_slice %23 {offsets = [0, 96], sizes = [8, 32], strides = [1, 1]} : vector<8x128xf32> to vector<8x32xf32>
    %33 = math.tanh %32 : vector<8x32xf32>
    %34 = vector.extract_strided_slice %31 {offsets = [0, 0], sizes = [8, 32], strides = [1, 1]} : vector<8x96xf32> to vector<8x32xf32>
    %35 = vector.extract_strided_slice %31 {offsets = [0, 32], sizes = [8, 32], strides = [1, 1]} : vector<8x96xf32> to vector<8x32xf32>
    %36 = vector.extract_strided_slice %31 {offsets = [0, 64], sizes = [8, 32], strides = [1, 1]} : vector<8x96xf32> to vector<8x32xf32>
    %37 = arith.mulf %35, %16 : vector<8x32xf32>
    %38 = arith.mulf %34, %33 : vector<8x32xf32>
    %39 = arith.addf %37, %38 : vector<8x32xf32>
    %40 = math.tanh %39 : vector<8x32xf32>
    %41 = arith.mulf %36, %40 : vector<8x32xf32>
    %42 = arith.index_cast %19 : i32 to index
    %c0_25 = arith.constant 0 : index
    %43 = vector.load %arg17[%42, %c0_25] : memref<64x32xf32, #tpu.memory_space<vmem>>, vector<8x32xf32>
    tpu.vector_store %arg17[%42, %c0_25], %41 {strides = array<i32>} : memref<64x32xf32, #tpu.memory_space<vmem>>, vector<8x32xf32>,
    %c1_i32 = arith.constant 1 : i32
    %c7_i32_26 = arith.constant 7 : i32
    %44 = arith.subi %c7_i32_26, %c1_i32 : i32
    %c8_i32_27 = arith.constant 8 : i32
    %45 = arith.muli %44, %c8_i32_27 : i32
    %46 = tpu.assume_multiple %45, 8 : i32
    %47 = arith.index_cast %46 : i32 to index
    %c0_28 = arith.constant 0 : index
    %48 = vector.load %arg15[%47, %c0_28] : memref<64x128xf32, #tpu.memory_space<vmem>>, vector<8x128xf32>
    %cst_29 = arith.constant dense<0.000000e+00> : vector<8x128xf32>
    %49 = tpu.matmul %41, %15, %cst_29 {dimension_numbers = #tpu.dot_dimension_numbers<[1], [0], [0], [1], [0, 0, 1, 1], [], []>} : vector<8x32xf32>, vector<32x128xf32>, vector<8x128xf32> -> vector<8x128xf32>
    %50 = arith.addf %48, %49 : vector<8x128xf32>
    %51 = vector.extract_strided_slice %50 {offsets = [0, 0], sizes = [8, 96], strides = [1, 1]} : vector<8x128xf32> to vector<8x96xf32>
    %cst_30 = arith.constant 5.000000e-01 : f32
    %52 = vector.broadcast %cst_30 : f32 to vector<8x96xf32>
    %53 = arith.mulf %52, %51 : vector<8x96xf32>
    %54 = math.tanh %53 : vector<8x96xf32>
    %cst_31 = arith.constant 1.000000e+00 : f32
    %55 = vector.broadcast %cst_31 : f32 to vector<8x96xf32>
    %56 = arith.addf %54, %55 : vector<8x96xf32>
    %cst_32 = arith.constant 5.000000e-01 : f32
    %57 = vector.broadcast %cst_32 : f32 to vector<8x96xf32>
    %58 = arith.mulf %57, %56 : vector<8x96xf32>
    %59 = vector.extract_strided_slice %50 {offsets = [0, 96], sizes = [8, 32], strides = [1, 1]} : vector<8x128xf32> to vector<8x32xf32>
    %60 = math.tanh %59 : vector<8x32xf32>
    %61 = vector.extract_strided_slice %58 {offsets = [0, 0], sizes = [8, 32], strides = [1, 1]} : vector<8x96xf32> to vector<8x32xf32>
    %62 = vector.extract_strided_slice %58 {offsets = [0, 32], sizes = [8, 32], strides = [1, 1]} : vector<8x96xf32> to vector<8x32xf32>
    %63 = vector.extract_strided_slice %58 {offsets = [0, 64], sizes = [8, 32], strides = [1, 1]} : vector<8x96xf32> to vector<8x32xf32>
    %64 = arith.mulf %62, %39 : vector<8x32xf32>
    %65 = arith.mulf %61, %60 : vector<8x32xf32>
    %66 = arith.addf %64, %65 : vector<8x32xf32>
    %67 = math.tanh %66 : vector<8x32xf32>
    %68 = arith.mulf %63, %67 : vector<8x32xf32>
    %69 = arith.index_cast %46 : i32 to index
    %c0_33 = arith.constant 0 : index
    %70 = vector.load %arg17[%69, %c0_33] : memref<64x32xf32, #tpu.memory_space<vmem>>, vector<8x32xf32>
    tpu.vector_store %arg17[%69, %c0_33], %68 {strides = array<i32>} : memref<64x32xf32, #tpu.memory_space<vmem>>, vector<8x32xf32>,
    %c2_i32 = arith.constant 2 : i32
    %c7_i32_34 = arith.constant 7 : i32
    %71 = arith.subi %c7_i32_34, %c2_i32 : i32
    %c8_i32_35 = arith.constant 8 : i32
    %72 = arith.muli %71, %c8_i32_35 : i32
    %73 = tpu.assume_multiple %72, 8 : i32
    %74 = arith.index_cast %73 : i32 to index
    %c0_36 = arith.constant 0 : index
    %75 = vector.load %arg15[%74, %c0_36] : memref<64x128xf32, #tpu.memory_space<vmem>>, vector<8x128xf32>
    %cst_37 = arith.constant dense<0.000000e+00> : vector<8x128xf32>
    %76 = tpu.matmul %68, %15, %cst_37 {dimension_numbers = #tpu.dot_dimension_numbers<[1], [0], [0], [1], [0, 0, 1, 1], [], []>} : vector<8x32xf32>, vector<32x128xf32>, vector<8x128xf32> -> vector<8x128xf32>
    %77 = arith.addf %75, %76 : vector<8x128xf32>
    %78 = vector.extract_strided_slice %77 {offsets = [0, 0], sizes = [8, 96], strides = [1, 1]} : vector<8x128xf32> to vector<8x96xf32>
    %cst_38 = arith.constant 5.000000e-01 : f32
    %79 = vector.broadcast %cst_38 : f32 to vector<8x96xf32>
    %80 = arith.mulf %79, %78 : vector<8x96xf32>
    %81 = math.tanh %80 : vector<8x96xf32>
    %cst_39 = arith.constant 1.000000e+00 : f32
    %82 = vector.broadcast %cst_39 : f32 to vector<8x96xf32>
    %83 = arith.addf %81, %82 : vector<8x96xf32>
    %cst_40 = arith.constant 5.000000e-01 : f32
    %84 = vector.broadcast %cst_40 : f32 to vector<8x96xf32>
    %85 = arith.mulf %84, %83 : vector<8x96xf32>
    %86 = vector.extract_strided_slice %77 {offsets = [0, 96], sizes = [8, 32], strides = [1, 1]} : vector<8x128xf32> to vector<8x32xf32>
    %87 = math.tanh %86 : vector<8x32xf32>
    %88 = vector.extract_strided_slice %85 {offsets = [0, 0], sizes = [8, 32], strides = [1, 1]} : vector<8x96xf32> to vector<8x32xf32>
    %89 = vector.extract_strided_slice %85 {offsets = [0, 32], sizes = [8, 32], strides = [1, 1]} : vector<8x96xf32> to vector<8x32xf32>
    %90 = vector.extract_strided_slice %85 {offsets = [0, 64], sizes = [8, 32], strides = [1, 1]} : vector<8x96xf32> to vector<8x32xf32>
    %91 = arith.mulf %89, %66 : vector<8x32xf32>
    %92 = arith.mulf %88, %87 : vector<8x32xf32>
    %93 = arith.addf %91, %92 : vector<8x32xf32>
    %94 = math.tanh %93 : vector<8x32xf32>
    %95 = arith.mulf %90, %94 : vector<8x32xf32>
    %96 = arith.index_cast %73 : i32 to index
    %c0_41 = arith.constant 0 : index
    %97 = vector.load %arg17[%96, %c0_41] : memref<64x32xf32, #tpu.memory_space<vmem>>, vector<8x32xf32>
    tpu.vector_store %arg17[%96, %c0_41], %95 {strides = array<i32>} : memref<64x32xf32, #tpu.memory_space<vmem>>, vector<8x32xf32>,
    %c3_i32 = arith.constant 3 : i32
    %c7_i32_42 = arith.constant 7 : i32
    %98 = arith.subi %c7_i32_42, %c3_i32 : i32
    %c8_i32_43 = arith.constant 8 : i32
    %99 = arith.muli %98, %c8_i32_43 : i32
    %100 = tpu.assume_multiple %99, 8 : i32
    %101 = arith.index_cast %100 : i32 to index
    %c0_44 = arith.constant 0 : index
    %102 = vector.load %arg15[%101, %c0_44] : memref<64x128xf32, #tpu.memory_space<vmem>>, vector<8x128xf32>
    %cst_45 = arith.constant dense<0.000000e+00> : vector<8x128xf32>
    %103 = tpu.matmul %95, %15, %cst_45 {dimension_numbers = #tpu.dot_dimension_numbers<[1], [0], [0], [1], [0, 0, 1, 1], [], []>} : vector<8x32xf32>, vector<32x128xf32>, vector<8x128xf32> -> vector<8x128xf32>
    %104 = arith.addf %102, %103 : vector<8x128xf32>
    %105 = vector.extract_strided_slice %104 {offsets = [0, 0], sizes = [8, 96], strides = [1, 1]} : vector<8x128xf32> to vector<8x96xf32>
    %cst_46 = arith.constant 5.000000e-01 : f32
    %106 = vector.broadcast %cst_46 : f32 to vector<8x96xf32>
    %107 = arith.mulf %106, %105 : vector<8x96xf32>
    %108 = math.tanh %107 : vector<8x96xf32>
    %cst_47 = arith.constant 1.000000e+00 : f32
    %109 = vector.broadcast %cst_47 : f32 to vector<8x96xf32>
    %110 = arith.addf %108, %109 : vector<8x96xf32>
    %cst_48 = arith.constant 5.000000e-01 : f32
    %111 = vector.broadcast %cst_48 : f32 to vector<8x96xf32>
    %112 = arith.mulf %111, %110 : vector<8x96xf32>
    %113 = vector.extract_strided_slice %104 {offsets = [0, 96], sizes = [8, 32], strides = [1, 1]} : vector<8x128xf32> to vector<8x32xf32>
    %114 = math.tanh %113 : vector<8x32xf32>
    %115 = vector.extract_strided_slice %112 {offsets = [0, 0], sizes = [8, 32], strides = [1, 1]} : vector<8x96xf32> to vector<8x32xf32>
    %116 = vector.extract_strided_slice %112 {offsets = [0, 32], sizes = [8, 32], strides = [1, 1]} : vector<8x96xf32> to vector<8x32xf32>
    %117 = vector.extract_strided_slice %112 {offsets = [0, 64], sizes = [8, 32], strides = [1, 1]} : vector<8x96xf32> to vector<8x32xf32>
    %118 = arith.mulf %116, %93 : vector<8x32xf32>
    %119 = arith.mulf %115, %114 : vector<8x32xf32>
    %120 = arith.addf %118, %119 : vector<8x32xf32>
    %121 = math.tanh %120 : vector<8x32xf32>
    %122 = arith.mulf %117, %121 : vector<8x32xf32>
    %123 = arith.index_cast %100 : i32 to index
    %c0_49 = arith.constant 0 : index
    %124 = vector.load %arg17[%123, %c0_49] : memref<64x32xf32, #tpu.memory_space<vmem>>, vector<8x32xf32>
    tpu.vector_store %arg17[%123, %c0_49], %122 {strides = array<i32>} : memref<64x32xf32, #tpu.memory_space<vmem>>, vector<8x32xf32>,
    %c4_i32 = arith.constant 4 : i32
    %c7_i32_50 = arith.constant 7 : i32
    %125 = arith.subi %c7_i32_50, %c4_i32 : i32
    %c8_i32_51 = arith.constant 8 : i32
    %126 = arith.muli %125, %c8_i32_51 : i32
    %127 = tpu.assume_multiple %126, 8 : i32
    %128 = arith.index_cast %127 : i32 to index
    %c0_52 = arith.constant 0 : index
    %129 = vector.load %arg15[%128, %c0_52] : memref<64x128xf32, #tpu.memory_space<vmem>>, vector<8x128xf32>
    %cst_53 = arith.constant dense<0.000000e+00> : vector<8x128xf32>
    %130 = tpu.matmul %122, %15, %cst_53 {dimension_numbers = #tpu.dot_dimension_numbers<[1], [0], [0], [1], [0, 0, 1, 1], [], []>} : vector<8x32xf32>, vector<32x128xf32>, vector<8x128xf32> -> vector<8x128xf32>
    %131 = arith.addf %129, %130 : vector<8x128xf32>
    %132 = vector.extract_strided_slice %131 {offsets = [0, 0], sizes = [8, 96], strides = [1, 1]} : vector<8x128xf32> to vector<8x96xf32>
    %cst_54 = arith.constant 5.000000e-01 : f32
    %133 = vector.broadcast %cst_54 : f32 to vector<8x96xf32>
    %134 = arith.mulf %133, %132 : vector<8x96xf32>
    %135 = math.tanh %134 : vector<8x96xf32>
    %cst_55 = arith.constant 1.000000e+00 : f32
    %136 = vector.broadcast %cst_55 : f32 to vector<8x96xf32>
    %137 = arith.addf %135, %136 : vector<8x96xf32>
    %cst_56 = arith.constant 5.000000e-01 : f32
    %138 = vector.broadcast %cst_56 : f32 to vector<8x96xf32>
    %139 = arith.mulf %138, %137 : vector<8x96xf32>
    %140 = vector.extract_strided_slice %131 {offsets = [0, 96], sizes = [8, 32], strides = [1, 1]} : vector<8x128xf32> to vector<8x32xf32>
    %141 = math.tanh %140 : vector<8x32xf32>
    %142 = vector.extract_strided_slice %139 {offsets = [0, 0], sizes = [8, 32], strides = [1, 1]} : vector<8x96xf32> to vector<8x32xf32>
    %143 = vector.extract_strided_slice %139 {offsets = [0, 32], sizes = [8, 32], strides = [1, 1]} : vector<8x96xf32> to vector<8x32xf32>
    %144 = vector.extract_strided_slice %139 {offsets = [0, 64], sizes = [8, 32], strides = [1, 1]} : vector<8x96xf32> to vector<8x32xf32>
    %145 = arith.mulf %143, %120 : vector<8x32xf32>
    %146 = arith.mulf %142, %141 : vector<8x32xf32>
    %147 = arith.addf %145, %146 : vector<8x32xf32>
    %148 = math.tanh %147 : vector<8x32xf32>
    %149 = arith.mulf %144, %148 : vector<8x32xf32>
    %150 = arith.index_cast %127 : i32 to index
    %c0_57 = arith.constant 0 : index
    %151 = vector.load %arg17[%150, %c0_57] : memref<64x32xf32, #tpu.memory_space<vmem>>, vector<8x32xf32>
    tpu.vector_store %arg17[%150, %c0_57], %149 {strides = array<i32>} : memref<64x32xf32, #tpu.memory_space<vmem>>, vector<8x32xf32>,
    %c5_i32 = arith.constant 5 : i32
    %c7_i32_58 = arith.constant 7 : i32
    %152 = arith.subi %c7_i32_58, %c5_i32 : i32
    %c8_i32_59 = arith.constant 8 : i32
    %153 = arith.muli %152, %c8_i32_59 : i32
    %154 = tpu.assume_multiple %153, 8 : i32
    %155 = arith.index_cast %154 : i32 to index
    %c0_60 = arith.constant 0 : index
    %156 = vector.load %arg15[%155, %c0_60] : memref<64x128xf32, #tpu.memory_space<vmem>>, vector<8x128xf32>
    %cst_61 = arith.constant dense<0.000000e+00> : vector<8x128xf32>
    %157 = tpu.matmul %149, %15, %cst_61 {dimension_numbers = #tpu.dot_dimension_numbers<[1], [0], [0], [1], [0, 0, 1, 1], [], []>} : vector<8x32xf32>, vector<32x128xf32>, vector<8x128xf32> -> vector<8x128xf32>
    %158 = arith.addf %156, %157 : vector<8x128xf32>
    %159 = vector.extract_strided_slice %158 {offsets = [0, 0], sizes = [8, 96], strides = [1, 1]} : vector<8x128xf32> to vector<8x96xf32>
    %cst_62 = arith.constant 5.000000e-01 : f32
    %160 = vector.broadcast %cst_62 : f32 to vector<8x96xf32>
    %161 = arith.mulf %160, %159 : vector<8x96xf32>
    %162 = math.tanh %161 : vector<8x96xf32>
    %cst_63 = arith.constant 1.000000e+00 : f32
    %163 = vector.broadcast %cst_63 : f32 to vector<8x96xf32>
    %164 = arith.addf %162, %163 : vector<8x96xf32>
    %cst_64 = arith.constant 5.000000e-01 : f32
    %165 = vector.broadcast %cst_64 : f32 to vector<8x96xf32>
    %166 = arith.mulf %165, %164 : vector<8x96xf32>
    %167 = vector.extract_strided_slice %158 {offsets = [0, 96], sizes = [8, 32], strides = [1, 1]} : vector<8x128xf32> to vector<8x32xf32>
    %168 = math.tanh %167 : vector<8x32xf32>
    %169 = vector.extract_strided_slice %166 {offsets = [0, 0], sizes = [8, 32], strides = [1, 1]} : vector<8x96xf32> to vector<8x32xf32>
    %170 = vector.extract_strided_slice %166 {offsets = [0, 32], sizes = [8, 32], strides = [1, 1]} : vector<8x96xf32> to vector<8x32xf32>
    %171 = vector.extract_strided_slice %166 {offsets = [0, 64], sizes = [8, 32], strides = [1, 1]} : vector<8x96xf32> to vector<8x32xf32>
    %172 = arith.mulf %170, %147 : vector<8x32xf32>
    %173 = arith.mulf %169, %168 : vector<8x32xf32>
    %174 = arith.addf %172, %173 : vector<8x32xf32>
    %175 = math.tanh %174 : vector<8x32xf32>
    %176 = arith.mulf %171, %175 : vector<8x32xf32>
    %177 = arith.index_cast %154 : i32 to index
    %c0_65 = arith.constant 0 : index
    %178 = vector.load %arg17[%177, %c0_65] : memref<64x32xf32, #tpu.memory_space<vmem>>, vector<8x32xf32>
    tpu.vector_store %arg17[%177, %c0_65], %176 {strides = array<i32>} : memref<64x32xf32, #tpu.memory_space<vmem>>, vector<8x32xf32>,
    %c6_i32 = arith.constant 6 : i32
    %c7_i32_66 = arith.constant 7 : i32
    %179 = arith.subi %c7_i32_66, %c6_i32 : i32
    %c8_i32_67 = arith.constant 8 : i32
    %180 = arith.muli %179, %c8_i32_67 : i32
    %181 = tpu.assume_multiple %180, 8 : i32
    %182 = arith.index_cast %181 : i32 to index
    %c0_68 = arith.constant 0 : index
    %183 = vector.load %arg15[%182, %c0_68] : memref<64x128xf32, #tpu.memory_space<vmem>>, vector<8x128xf32>
    %cst_69 = arith.constant dense<0.000000e+00> : vector<8x128xf32>
    %184 = tpu.matmul %176, %15, %cst_69 {dimension_numbers = #tpu.dot_dimension_numbers<[1], [0], [0], [1], [0, 0, 1, 1], [], []>} : vector<8x32xf32>, vector<32x128xf32>, vector<8x128xf32> -> vector<8x128xf32>
    %185 = arith.addf %183, %184 : vector<8x128xf32>
    %186 = vector.extract_strided_slice %185 {offsets = [0, 0], sizes = [8, 96], strides = [1, 1]} : vector<8x128xf32> to vector<8x96xf32>
    %cst_70 = arith.constant 5.000000e-01 : f32
    %187 = vector.broadcast %cst_70 : f32 to vector<8x96xf32>
    %188 = arith.mulf %187, %186 : vector<8x96xf32>
    %189 = math.tanh %188 : vector<8x96xf32>
    %cst_71 = arith.constant 1.000000e+00 : f32
    %190 = vector.broadcast %cst_71 : f32 to vector<8x96xf32>
    %191 = arith.addf %189, %190 : vector<8x96xf32>
    %cst_72 = arith.constant 5.000000e-01 : f32
    %192 = vector.broadcast %cst_72 : f32 to vector<8x96xf32>
    %193 = arith.mulf %192, %191 : vector<8x96xf32>
    %194 = vector.extract_strided_slice %185 {offsets = [0, 96], sizes = [8, 32], strides = [1, 1]} : vector<8x128xf32> to vector<8x32xf32>
    %195 = math.tanh %194 : vector<8x32xf32>
    %196 = vector.extract_strided_slice %193 {offsets = [0, 0], sizes = [8, 32], strides = [1, 1]} : vector<8x96xf32> to vector<8x32xf32>
    %197 = vector.extract_strided_slice %193 {offsets = [0, 32], sizes = [8, 32], strides = [1, 1]} : vector<8x96xf32> to vector<8x32xf32>
    %198 = vector.extract_strided_slice %193 {offsets = [0, 64], sizes = [8, 32], strides = [1, 1]} : vector<8x96xf32> to vector<8x32xf32>
    %199 = arith.mulf %197, %174 : vector<8x32xf32>
    %200 = arith.mulf %196, %195 : vector<8x32xf32>
    %201 = arith.addf %199, %200 : vector<8x32xf32>
    %202 = math.tanh %201 : vector<8x32xf32>
    %203 = arith.mulf %198, %202 : vector<8x32xf32>
    %204 = arith.index_cast %181 : i32 to index
    %c0_73 = arith.constant 0 : index
    %205 = vector.load %arg17[%204, %c0_73] : memref<64x32xf32, #tpu.memory_space<vmem>>, vector<8x32xf32>
    tpu.vector_store %arg17[%204, %c0_73], %203 {strides = array<i32>} : memref<64x32xf32, #tpu.memory_space<vmem>>, vector<8x32xf32>,
    %c7_i32_74 = arith.constant 7 : i32
    %c7_i32_75 = arith.constant 7 : i32
    %206 = arith.subi %c7_i32_75, %c7_i32_74 : i32
    %c8_i32_76 = arith.constant 8 : i32
    %207 = arith.muli %206, %c8_i32_76 : i32
    %208 = tpu.assume_multiple %207, 8 : i32
    %209 = arith.index_cast %208 : i32 to index
    %c0_77 = arith.constant 0 : index
    %210 = vector.load %arg15[%209, %c0_77] : memref<64x128xf32, #tpu.memory_space<vmem>>, vector<8x128xf32>
    %cst_78 = arith.constant dense<0.000000e+00> : vector<8x128xf32>
    %211 = tpu.matmul %203, %15, %cst_78 {dimension_numbers = #tpu.dot_dimension_numbers<[1], [0], [0], [1], [0, 0, 1, 1], [], []>} : vector<8x32xf32>, vector<32x128xf32>, vector<8x128xf32> -> vector<8x128xf32>
    %212 = arith.addf %210, %211 : vector<8x128xf32>
    %213 = vector.extract_strided_slice %212 {offsets = [0, 0], sizes = [8, 96], strides = [1, 1]} : vector<8x128xf32> to vector<8x96xf32>
    %cst_79 = arith.constant 5.000000e-01 : f32
    %214 = vector.broadcast %cst_79 : f32 to vector<8x96xf32>
    %215 = arith.mulf %214, %213 : vector<8x96xf32>
    %216 = math.tanh %215 : vector<8x96xf32>
    %cst_80 = arith.constant 1.000000e+00 : f32
    %217 = vector.broadcast %cst_80 : f32 to vector<8x96xf32>
    %218 = arith.addf %216, %217 : vector<8x96xf32>
    %cst_81 = arith.constant 5.000000e-01 : f32
    %219 = vector.broadcast %cst_81 : f32 to vector<8x96xf32>
    %220 = arith.mulf %219, %218 : vector<8x96xf32>
    %221 = vector.extract_strided_slice %212 {offsets = [0, 96], sizes = [8, 32], strides = [1, 1]} : vector<8x128xf32> to vector<8x32xf32>
    %222 = math.tanh %221 : vector<8x32xf32>
    %223 = vector.extract_strided_slice %220 {offsets = [0, 0], sizes = [8, 32], strides = [1, 1]} : vector<8x96xf32> to vector<8x32xf32>
    %224 = vector.extract_strided_slice %220 {offsets = [0, 32], sizes = [8, 32], strides = [1, 1]} : vector<8x96xf32> to vector<8x32xf32>
    %225 = vector.extract_strided_slice %220 {offsets = [0, 64], sizes = [8, 32], strides = [1, 1]} : vector<8x96xf32> to vector<8x32xf32>
    %226 = arith.mulf %224, %201 : vector<8x32xf32>
    %227 = arith.mulf %223, %222 : vector<8x32xf32>
    %228 = arith.addf %226, %227 : vector<8x32xf32>
    %229 = math.tanh %228 : vector<8x32xf32>
    %230 = arith.mulf %225, %229 : vector<8x32xf32>
    %231 = arith.index_cast %208 : i32 to index
    %c0_82 = arith.constant 0 : index
    %232 = vector.load %arg17[%231, %c0_82] : memref<64x32xf32, #tpu.memory_space<vmem>>, vector<8x32xf32>
    tpu.vector_store %arg17[%231, %c0_82], %230 {strides = array<i32>} : memref<64x32xf32, #tpu.memory_space<vmem>>, vector<8x32xf32>,
    %c8_i32_83 = arith.constant 8 : i32
    %c0_i32_84 = arith.constant 0 : i32
    %c8_i32_85 = arith.constant 8 : i32
    %233 = arith.muli %c0_i32_84, %c8_i32_85 : i32
    %234 = tpu.assume_multiple %233, 8 : i32
    %235 = arith.index_cast %234 : i32 to index
    %c0_86 = arith.constant 0 : index
    %236 = vector.load %arg14[%235, %c0_86] : memref<64x128xf32, #tpu.memory_space<vmem>>, vector<8x128xf32>
    %cst_87 = arith.constant dense<0.000000e+00> : vector<8x128xf32>
    %237 = tpu.matmul %16, %14, %cst_87 {dimension_numbers = #tpu.dot_dimension_numbers<[1], [0], [0], [1], [0, 0, 1, 1], [], []>} : vector<8x32xf32>, vector<32x128xf32>, vector<8x128xf32> -> vector<8x128xf32>
    %238 = arith.addf %236, %237 : vector<8x128xf32>
    %239 = vector.extract_strided_slice %238 {offsets = [0, 0], sizes = [8, 96], strides = [1, 1]} : vector<8x128xf32> to vector<8x96xf32>
    %cst_88 = arith.constant 5.000000e-01 : f32
    %240 = vector.broadcast %cst_88 : f32 to vector<8x96xf32>
    %241 = arith.mulf %240, %239 : vector<8x96xf32>
    %242 = math.tanh %241 : vector<8x96xf32>
    %cst_89 = arith.constant 1.000000e+00 : f32
    %243 = vector.broadcast %cst_89 : f32 to vector<8x96xf32>
    %244 = arith.addf %242, %243 : vector<8x96xf32>
    %cst_90 = arith.constant 5.000000e-01 : f32
    %245 = vector.broadcast %cst_90 : f32 to vector<8x96xf32>
    %246 = arith.mulf %245, %244 : vector<8x96xf32>
    %247 = vector.extract_strided_slice %238 {offsets = [0, 96], sizes = [8, 32], strides = [1, 1]} : vector<8x128xf32> to vector<8x32xf32>
    %248 = math.tanh %247 : vector<8x32xf32>
    %249 = vector.extract_strided_slice %246 {offsets = [0, 0], sizes = [8, 32], strides = [1, 1]} : vector<8x96xf32> to vector<8x32xf32>
    %250 = vector.extract_strided_slice %246 {offsets = [0, 32], sizes = [8, 32], strides = [1, 1]} : vector<8x96xf32> to vector<8x32xf32>
    %251 = vector.extract_strided_slice %246 {offsets = [0, 64], sizes = [8, 32], strides = [1, 1]} : vector<8x96xf32> to vector<8x32xf32>
    %252 = arith.mulf %250, %16 : vector<8x32xf32>
    %253 = arith.mulf %249, %248 : vector<8x32xf32>
    %254 = arith.addf %252, %253 : vector<8x32xf32>
    %255 = math.tanh %254 : vector<8x32xf32>
    %256 = arith.mulf %251, %255 : vector<8x32xf32>
    %257 = arith.index_cast %234 : i32 to index
    %c0_91 = arith.constant 0 : index
    %258 = vector.load %arg16[%257, %c0_91] : memref<64x32xf32, #tpu.memory_space<vmem>>, vector<8x32xf32>
    tpu.vector_store %arg16[%257, %c0_91], %256 {strides = array<i32>} : memref<64x32xf32, #tpu.memory_space<vmem>>, vector<8x32xf32>,
    %c1_i32_92 = arith.constant 1 : i32
    %c8_i32_93 = arith.constant 8 : i32
    %259 = arith.muli %c1_i32_92, %c8_i32_93 : i32
    %260 = tpu.assume_multiple %259, 8 : i32
    %261 = arith.index_cast %260 : i32 to index
    %c0_94 = arith.constant 0 : index
    %262 = vector.load %arg14[%261, %c0_94] : memref<64x128xf32, #tpu.memory_space<vmem>>, vector<8x128xf32>
    %cst_95 = arith.constant dense<0.000000e+00> : vector<8x128xf32>
    %263 = tpu.matmul %256, %14, %cst_95 {dimension_numbers = #tpu.dot_dimension_numbers<[1], [0], [0], [1], [0, 0, 1, 1], [], []>} : vector<8x32xf32>, vector<32x128xf32>, vector<8x128xf32> -> vector<8x128xf32>
    %264 = arith.addf %262, %263 : vector<8x128xf32>
    %265 = vector.extract_strided_slice %264 {offsets = [0, 0], sizes = [8, 96], strides = [1, 1]} : vector<8x128xf32> to vector<8x96xf32>
    %cst_96 = arith.constant 5.000000e-01 : f32
    %266 = vector.broadcast %cst_96 : f32 to vector<8x96xf32>
    %267 = arith.mulf %266, %265 : vector<8x96xf32>
    %268 = math.tanh %267 : vector<8x96xf32>
    %cst_97 = arith.constant 1.000000e+00 : f32
    %269 = vector.broadcast %cst_97 : f32 to vector<8x96xf32>
    %270 = arith.addf %268, %269 : vector<8x96xf32>
    %cst_98 = arith.constant 5.000000e-01 : f32
    %271 = vector.broadcast %cst_98 : f32 to vector<8x96xf32>
    %272 = arith.mulf %271, %270 : vector<8x96xf32>
    %273 = vector.extract_strided_slice %264 {offsets = [0, 96], sizes = [8, 32], strides = [1, 1]} : vector<8x128xf32> to vector<8x32xf32>
    %274 = math.tanh %273 : vector<8x32xf32>
    %275 = vector.extract_strided_slice %272 {offsets = [0, 0], sizes = [8, 32], strides = [1, 1]} : vector<8x96xf32> to vector<8x32xf32>
    %276 = vector.extract_strided_slice %272 {offsets = [0, 32], sizes = [8, 32], strides = [1, 1]} : vector<8x96xf32> to vector<8x32xf32>
    %277 = vector.extract_strided_slice %272 {offsets = [0, 64], sizes = [8, 32], strides = [1, 1]} : vector<8x96xf32> to vector<8x32xf32>
    %278 = arith.mulf %276, %254 : vector<8x32xf32>
    %279 = arith.mulf %275, %274 : vector<8x32xf32>
    %280 = arith.addf %278, %279 : vector<8x32xf32>
    %281 = math.tanh %280 : vector<8x32xf32>
    %282 = arith.mulf %277, %281 : vector<8x32xf32>
    %283 = arith.index_cast %260 : i32 to index
    %c0_99 = arith.constant 0 : index
    %284 = vector.load %arg16[%283, %c0_99] : memref<64x32xf32, #tpu.memory_space<vmem>>, vector<8x32xf32>
    tpu.vector_store %arg16[%283, %c0_99], %282 {strides = array<i32>} : memref<64x32xf32, #tpu.memory_space<vmem>>, vector<8x32xf32>,
    %c2_i32_100 = arith.constant 2 : i32
    %c8_i32_101 = arith.constant 8 : i32
    %285 = arith.muli %c2_i32_100, %c8_i32_101 : i32
    %286 = tpu.assume_multiple %285, 8 : i32
    %287 = arith.index_cast %286 : i32 to index
    %c0_102 = arith.constant 0 : index
    %288 = vector.load %arg14[%287, %c0_102] : memref<64x128xf32, #tpu.memory_space<vmem>>, vector<8x128xf32>
    %cst_103 = arith.constant dense<0.000000e+00> : vector<8x128xf32>
    %289 = tpu.matmul %282, %14, %cst_103 {dimension_numbers = #tpu.dot_dimension_numbers<[1], [0], [0], [1], [0, 0, 1, 1], [], []>} : vector<8x32xf32>, vector<32x128xf32>, vector<8x128xf32> -> vector<8x128xf32>
    %290 = arith.addf %288, %289 : vector<8x128xf32>
    %291 = vector.extract_strided_slice %290 {offsets = [0, 0], sizes = [8, 96], strides = [1, 1]} : vector<8x128xf32> to vector<8x96xf32>
    %cst_104 = arith.constant 5.000000e-01 : f32
    %292 = vector.broadcast %cst_104 : f32 to vector<8x96xf32>
    %293 = arith.mulf %292, %291 : vector<8x96xf32>
    %294 = math.tanh %293 : vector<8x96xf32>
    %cst_105 = arith.constant 1.000000e+00 : f32
    %295 = vector.broadcast %cst_105 : f32 to vector<8x96xf32>
    %296 = arith.addf %294, %295 : vector<8x96xf32>
    %cst_106 = arith.constant 5.000000e-01 : f32
    %297 = vector.broadcast %cst_106 : f32 to vector<8x96xf32>
    %298 = arith.mulf %297, %296 : vector<8x96xf32>
    %299 = vector.extract_strided_slice %290 {offsets = [0, 96], sizes = [8, 32], strides = [1, 1]} : vector<8x128xf32> to vector<8x32xf32>
    %300 = math.tanh %299 : vector<8x32xf32>
    %301 = vector.extract_strided_slice %298 {offsets = [0, 0], sizes = [8, 32], strides = [1, 1]} : vector<8x96xf32> to vector<8x32xf32>
    %302 = vector.extract_strided_slice %298 {offsets = [0, 32], sizes = [8, 32], strides = [1, 1]} : vector<8x96xf32> to vector<8x32xf32>
    %303 = vector.extract_strided_slice %298 {offsets = [0, 64], sizes = [8, 32], strides = [1, 1]} : vector<8x96xf32> to vector<8x32xf32>
    %304 = arith.mulf %302, %280 : vector<8x32xf32>
    %305 = arith.mulf %301, %300 : vector<8x32xf32>
    %306 = arith.addf %304, %305 : vector<8x32xf32>
    %307 = math.tanh %306 : vector<8x32xf32>
    %308 = arith.mulf %303, %307 : vector<8x32xf32>
    %309 = arith.index_cast %286 : i32 to index
    %c0_107 = arith.constant 0 : index
    %310 = vector.load %arg16[%309, %c0_107] : memref<64x32xf32, #tpu.memory_space<vmem>>, vector<8x32xf32>
    tpu.vector_store %arg16[%309, %c0_107], %308 {strides = array<i32>} : memref<64x32xf32, #tpu.memory_space<vmem>>, vector<8x32xf32>,
    %c3_i32_108 = arith.constant 3 : i32
    %c8_i32_109 = arith.constant 8 : i32
    %311 = arith.muli %c3_i32_108, %c8_i32_109 : i32
    %312 = tpu.assume_multiple %311, 8 : i32
    %313 = arith.index_cast %312 : i32 to index
    %c0_110 = arith.constant 0 : index
    %314 = vector.load %arg14[%313, %c0_110] : memref<64x128xf32, #tpu.memory_space<vmem>>, vector<8x128xf32>
    %cst_111 = arith.constant dense<0.000000e+00> : vector<8x128xf32>
    %315 = tpu.matmul %308, %14, %cst_111 {dimension_numbers = #tpu.dot_dimension_numbers<[1], [0], [0], [1], [0, 0, 1, 1], [], []>} : vector<8x32xf32>, vector<32x128xf32>, vector<8x128xf32> -> vector<8x128xf32>
    %316 = arith.addf %314, %315 : vector<8x128xf32>
    %317 = vector.extract_strided_slice %316 {offsets = [0, 0], sizes = [8, 96], strides = [1, 1]} : vector<8x128xf32> to vector<8x96xf32>
    %cst_112 = arith.constant 5.000000e-01 : f32
    %318 = vector.broadcast %cst_112 : f32 to vector<8x96xf32>
    %319 = arith.mulf %318, %317 : vector<8x96xf32>
    %320 = math.tanh %319 : vector<8x96xf32>
    %cst_113 = arith.constant 1.000000e+00 : f32
    %321 = vector.broadcast %cst_113 : f32 to vector<8x96xf32>
    %322 = arith.addf %320, %321 : vector<8x96xf32>
    %cst_114 = arith.constant 5.000000e-01 : f32
    %323 = vector.broadcast %cst_114 : f32 to vector<8x96xf32>
    %324 = arith.mulf %323, %322 : vector<8x96xf32>
    %325 = vector.extract_strided_slice %316 {offsets = [0, 96], sizes = [8, 32], strides = [1, 1]} : vector<8x128xf32> to vector<8x32xf32>
    %326 = math.tanh %325 : vector<8x32xf32>
    %327 = vector.extract_strided_slice %324 {offsets = [0, 0], sizes = [8, 32], strides = [1, 1]} : vector<8x96xf32> to vector<8x32xf32>
    %328 = vector.extract_strided_slice %324 {offsets = [0, 32], sizes = [8, 32], strides = [1, 1]} : vector<8x96xf32> to vector<8x32xf32>
    %329 = vector.extract_strided_slice %324 {offsets = [0, 64], sizes = [8, 32], strides = [1, 1]} : vector<8x96xf32> to vector<8x32xf32>
    %330 = arith.mulf %328, %306 : vector<8x32xf32>
    %331 = arith.mulf %327, %326 : vector<8x32xf32>
    %332 = arith.addf %330, %331 : vector<8x32xf32>
    %333 = math.tanh %332 : vector<8x32xf32>
    %334 = arith.mulf %329, %333 : vector<8x32xf32>
    %335 = arith.index_cast %312 : i32 to index
    %c0_115 = arith.constant 0 : index
    %336 = vector.load %arg16[%335, %c0_115] : memref<64x32xf32, #tpu.memory_space<vmem>>, vector<8x32xf32>
    tpu.vector_store %arg16[%335, %c0_115], %334 {strides = array<i32>} : memref<64x32xf32, #tpu.memory_space<vmem>>, vector<8x32xf32>,
    %c4_i32_116 = arith.constant 4 : i32
    %c8_i32_117 = arith.constant 8 : i32
    %337 = arith.muli %c4_i32_116, %c8_i32_117 : i32
    %338 = tpu.assume_multiple %337, 8 : i32
    %339 = arith.index_cast %338 : i32 to index
    %c0_118 = arith.constant 0 : index
    %340 = vector.load %arg14[%339, %c0_118] : memref<64x128xf32, #tpu.memory_space<vmem>>, vector<8x128xf32>
    %cst_119 = arith.constant dense<0.000000e+00> : vector<8x128xf32>
    %341 = tpu.matmul %334, %14, %cst_119 {dimension_numbers = #tpu.dot_dimension_numbers<[1], [0], [0], [1], [0, 0, 1, 1], [], []>} : vector<8x32xf32>, vector<32x128xf32>, vector<8x128xf32> -> vector<8x128xf32>
    %342 = arith.addf %340, %341 : vector<8x128xf32>
    %343 = vector.extract_strided_slice %342 {offsets = [0, 0], sizes = [8, 96], strides = [1, 1]} : vector<8x128xf32> to vector<8x96xf32>
    %cst_120 = arith.constant 5.000000e-01 : f32
    %344 = vector.broadcast %cst_120 : f32 to vector<8x96xf32>
    %345 = arith.mulf %344, %343 : vector<8x96xf32>
    %346 = math.tanh %345 : vector<8x96xf32>
    %cst_121 = arith.constant 1.000000e+00 : f32
    %347 = vector.broadcast %cst_121 : f32 to vector<8x96xf32>
    %348 = arith.addf %346, %347 : vector<8x96xf32>
    %cst_122 = arith.constant 5.000000e-01 : f32
    %349 = vector.broadcast %cst_122 : f32 to vector<8x96xf32>
    %350 = arith.mulf %349, %348 : vector<8x96xf32>
    %351 = vector.extract_strided_slice %342 {offsets = [0, 96], sizes = [8, 32], strides = [1, 1]} : vector<8x128xf32> to vector<8x32xf32>
    %352 = math.tanh %351 : vector<8x32xf32>
    %353 = vector.extract_strided_slice %350 {offsets = [0, 0], sizes = [8, 32], strides = [1, 1]} : vector<8x96xf32> to vector<8x32xf32>
    %354 = vector.extract_strided_slice %350 {offsets = [0, 32], sizes = [8, 32], strides = [1, 1]} : vector<8x96xf32> to vector<8x32xf32>
    %355 = vector.extract_strided_slice %350 {offsets = [0, 64], sizes = [8, 32], strides = [1, 1]} : vector<8x96xf32> to vector<8x32xf32>
    %356 = arith.mulf %354, %332 : vector<8x32xf32>
    %357 = arith.mulf %353, %352 : vector<8x32xf32>
    %358 = arith.addf %356, %357 : vector<8x32xf32>
    %359 = math.tanh %358 : vector<8x32xf32>
    %360 = arith.mulf %355, %359 : vector<8x32xf32>
    %361 = arith.index_cast %338 : i32 to index
    %c0_123 = arith.constant 0 : index
    %362 = vector.load %arg16[%361, %c0_123] : memref<64x32xf32, #tpu.memory_space<vmem>>, vector<8x32xf32>
    tpu.vector_store %arg16[%361, %c0_123], %360 {strides = array<i32>} : memref<64x32xf32, #tpu.memory_space<vmem>>, vector<8x32xf32>,
    %c5_i32_124 = arith.constant 5 : i32
    %c8_i32_125 = arith.constant 8 : i32
    %363 = arith.muli %c5_i32_124, %c8_i32_125 : i32
    %364 = tpu.assume_multiple %363, 8 : i32
    %365 = arith.index_cast %364 : i32 to index
    %c0_126 = arith.constant 0 : index
    %366 = vector.load %arg14[%365, %c0_126] : memref<64x128xf32, #tpu.memory_space<vmem>>, vector<8x128xf32>
    %cst_127 = arith.constant dense<0.000000e+00> : vector<8x128xf32>
    %367 = tpu.matmul %360, %14, %cst_127 {dimension_numbers = #tpu.dot_dimension_numbers<[1], [0], [0], [1], [0, 0, 1, 1], [], []>} : vector<8x32xf32>, vector<32x128xf32>, vector<8x128xf32> -> vector<8x128xf32>
    %368 = arith.addf %366, %367 : vector<8x128xf32>
    %369 = vector.extract_strided_slice %368 {offsets = [0, 0], sizes = [8, 96], strides = [1, 1]} : vector<8x128xf32> to vector<8x96xf32>
    %cst_128 = arith.constant 5.000000e-01 : f32
    %370 = vector.broadcast %cst_128 : f32 to vector<8x96xf32>
    %371 = arith.mulf %370, %369 : vector<8x96xf32>
    %372 = math.tanh %371 : vector<8x96xf32>
    %cst_129 = arith.constant 1.000000e+00 : f32
    %373 = vector.broadcast %cst_129 : f32 to vector<8x96xf32>
    %374 = arith.addf %372, %373 : vector<8x96xf32>
    %cst_130 = arith.constant 5.000000e-01 : f32
    %375 = vector.broadcast %cst_130 : f32 to vector<8x96xf32>
    %376 = arith.mulf %375, %374 : vector<8x96xf32>
    %377 = vector.extract_strided_slice %368 {offsets = [0, 96], sizes = [8, 32], strides = [1, 1]} : vector<8x128xf32> to vector<8x32xf32>
    %378 = math.tanh %377 : vector<8x32xf32>
    %379 = vector.extract_strided_slice %376 {offsets = [0, 0], sizes = [8, 32], strides = [1, 1]} : vector<8x96xf32> to vector<8x32xf32>
    %380 = vector.extract_strided_slice %376 {offsets = [0, 32], sizes = [8, 32], strides = [1, 1]} : vector<8x96xf32> to vector<8x32xf32>
    %381 = vector.extract_strided_slice %376 {offsets = [0, 64], sizes = [8, 32], strides = [1, 1]} : vector<8x96xf32> to vector<8x32xf32>
    %382 = arith.mulf %380, %358 : vector<8x32xf32>
    %383 = arith.mulf %379, %378 : vector<8x32xf32>
    %384 = arith.addf %382, %383 : vector<8x32xf32>
    %385 = math.tanh %384 : vector<8x32xf32>
    %386 = arith.mulf %381, %385 : vector<8x32xf32>
    %387 = arith.index_cast %364 : i32 to index
    %c0_131 = arith.constant 0 : index
    %388 = vector.load %arg16[%387, %c0_131] : memref<64x32xf32, #tpu.memory_space<vmem>>, vector<8x32xf32>
    tpu.vector_store %arg16[%387, %c0_131], %386 {strides = array<i32>} : memref<64x32xf32, #tpu.memory_space<vmem>>, vector<8x32xf32>,
    %c6_i32_132 = arith.constant 6 : i32
    %c8_i32_133 = arith.constant 8 : i32
    %389 = arith.muli %c6_i32_132, %c8_i32_133 : i32
    %390 = tpu.assume_multiple %389, 8 : i32
    %391 = arith.index_cast %390 : i32 to index
    %c0_134 = arith.constant 0 : index
    %392 = vector.load %arg14[%391, %c0_134] : memref<64x128xf32, #tpu.memory_space<vmem>>, vector<8x128xf32>
    %cst_135 = arith.constant dense<0.000000e+00> : vector<8x128xf32>
    %393 = tpu.matmul %386, %14, %cst_135 {dimension_numbers = #tpu.dot_dimension_numbers<[1], [0], [0], [1], [0, 0, 1, 1], [], []>} : vector<8x32xf32>, vector<32x128xf32>, vector<8x128xf32> -> vector<8x128xf32>
    %394 = arith.addf %392, %393 : vector<8x128xf32>
    %395 = vector.extract_strided_slice %394 {offsets = [0, 0], sizes = [8, 96], strides = [1, 1]} : vector<8x128xf32> to vector<8x96xf32>
    %cst_136 = arith.constant 5.000000e-01 : f32
    %396 = vector.broadcast %cst_136 : f32 to vector<8x96xf32>
    %397 = arith.mulf %396, %395 : vector<8x96xf32>
    %398 = math.tanh %397 : vector<8x96xf32>
    %cst_137 = arith.constant 1.000000e+00 : f32
    %399 = vector.broadcast %cst_137 : f32 to vector<8x96xf32>
    %400 = arith.addf %398, %399 : vector<8x96xf32>
    %cst_138 = arith.constant 5.000000e-01 : f32
    %401 = vector.broadcast %cst_138 : f32 to vector<8x96xf32>
    %402 = arith.mulf %401, %400 : vector<8x96xf32>
    %403 = vector.extract_strided_slice %394 {offsets = [0, 96], sizes = [8, 32], strides = [1, 1]} : vector<8x128xf32> to vector<8x32xf32>
    %404 = math.tanh %403 : vector<8x32xf32>
    %405 = vector.extract_strided_slice %402 {offsets = [0, 0], sizes = [8, 32], strides = [1, 1]} : vector<8x96xf32> to vector<8x32xf32>
    %406 = vector.extract_strided_slice %402 {offsets = [0, 32], sizes = [8, 32], strides = [1, 1]} : vector<8x96xf32> to vector<8x32xf32>
    %407 = vector.extract_strided_slice %402 {offsets = [0, 64], sizes = [8, 32], strides = [1, 1]} : vector<8x96xf32> to vector<8x32xf32>
    %408 = arith.mulf %406, %384 : vector<8x32xf32>
    %409 = arith.mulf %405, %404 : vector<8x32xf32>
    %410 = arith.addf %408, %409 : vector<8x32xf32>
    %411 = math.tanh %410 : vector<8x32xf32>
    %412 = arith.mulf %407, %411 : vector<8x32xf32>
    %413 = arith.index_cast %390 : i32 to index
    %c0_139 = arith.constant 0 : index
    %414 = vector.load %arg16[%413, %c0_139] : memref<64x32xf32, #tpu.memory_space<vmem>>, vector<8x32xf32>
    tpu.vector_store %arg16[%413, %c0_139], %412 {strides = array<i32>} : memref<64x32xf32, #tpu.memory_space<vmem>>, vector<8x32xf32>,
    %c7_i32_140 = arith.constant 7 : i32
    %c8_i32_141 = arith.constant 8 : i32
    %415 = arith.muli %c7_i32_140, %c8_i32_141 : i32
    %416 = tpu.assume_multiple %415, 8 : i32
    %417 = arith.index_cast %416 : i32 to index
    %c0_142 = arith.constant 0 : index
    %418 = vector.load %arg14[%417, %c0_142] : memref<64x128xf32, #tpu.memory_space<vmem>>, vector<8x128xf32>
    %cst_143 = arith.constant dense<0.000000e+00> : vector<8x128xf32>
    %419 = tpu.matmul %412, %14, %cst_143 {dimension_numbers = #tpu.dot_dimension_numbers<[1], [0], [0], [1], [0, 0, 1, 1], [], []>} : vector<8x32xf32>, vector<32x128xf32>, vector<8x128xf32> -> vector<8x128xf32>
    %420 = arith.addf %418, %419 : vector<8x128xf32>
    %421 = vector.extract_strided_slice %420 {offsets = [0, 0], sizes = [8, 96], strides = [1, 1]} : vector<8x128xf32> to vector<8x96xf32>
    %cst_144 = arith.constant 5.000000e-01 : f32
    %422 = vector.broadcast %cst_144 : f32 to vector<8x96xf32>
    %423 = arith.mulf %422, %421 : vector<8x96xf32>
    %424 = math.tanh %423 : vector<8x96xf32>
    %cst_145 = arith.constant 1.000000e+00 : f32
    %425 = vector.broadcast %cst_145 : f32 to vector<8x96xf32>
    %426 = arith.addf %424, %425 : vector<8x96xf32>
    %cst_146 = arith.constant 5.000000e-01 : f32
    %427 = vector.broadcast %cst_146 : f32 to vector<8x96xf32>
    %428 = arith.mulf %427, %426 : vector<8x96xf32>
    %429 = vector.extract_strided_slice %420 {offsets = [0, 96], sizes = [8, 32], strides = [1, 1]} : vector<8x128xf32> to vector<8x32xf32>
    %430 = math.tanh %429 : vector<8x32xf32>
    %431 = vector.extract_strided_slice %428 {offsets = [0, 0], sizes = [8, 32], strides = [1, 1]} : vector<8x96xf32> to vector<8x32xf32>
    %432 = vector.extract_strided_slice %428 {offsets = [0, 32], sizes = [8, 32], strides = [1, 1]} : vector<8x96xf32> to vector<8x32xf32>
    %433 = vector.extract_strided_slice %428 {offsets = [0, 64], sizes = [8, 32], strides = [1, 1]} : vector<8x96xf32> to vector<8x32xf32>
    %434 = arith.mulf %432, %410 : vector<8x32xf32>
    %435 = arith.mulf %431, %430 : vector<8x32xf32>
    %436 = arith.addf %434, %435 : vector<8x32xf32>
    %437 = math.tanh %436 : vector<8x32xf32>
    %438 = arith.mulf %433, %437 : vector<8x32xf32>
    %439 = arith.index_cast %416 : i32 to index
    %c0_147 = arith.constant 0 : index
    %440 = vector.load %arg16[%439, %c0_147] : memref<64x32xf32, #tpu.memory_space<vmem>>, vector<8x32xf32>
    tpu.vector_store %arg16[%439, %c0_147], %438 {strides = array<i32>} : memref<64x32xf32, #tpu.memory_space<vmem>>, vector<8x32xf32>,
    %c8_i32_148 = arith.constant 8 : i32
    %c0_149 = arith.constant 0 : index
    %c0_150 = arith.constant 0 : index
    %441 = vector.load %arg16[%c0_149, %c0_150] : memref<64x32xf32, #tpu.memory_space<vmem>>, vector<64x32xf32>
    %c0_151 = arith.constant 0 : index
    %c0_152 = arith.constant 0 : index
    %442 = vector.load %arg17[%c0_151, %c0_152] : memref<64x32xf32, #tpu.memory_space<vmem>>, vector<64x32xf32>
    %c0_153 = arith.constant 0 : index
    %c0_154 = arith.constant 0 : index
    %443 = vector.load %arg8[%c0_153, %c0_154] : memref<32x64xf32, #tpu.memory_space<vmem>>, vector<32x64xf32>
    %cst_155 = arith.constant dense<0.000000e+00> : vector<64x64xf32>
    %444 = tpu.matmul %441, %443, %cst_155 {dimension_numbers = #tpu.dot_dimension_numbers<[1], [0], [0], [1], [0, 0, 1, 1], [], []>} : vector<64x32xf32>, vector<32x64xf32>, vector<64x64xf32> -> vector<64x64xf32>
    %c0_156 = arith.constant 0 : index
    %c0_157 = arith.constant 0 : index
    %445 = vector.load %arg9[%c0_156, %c0_157] : memref<32x64xf32, #tpu.memory_space<vmem>>, vector<32x64xf32>
    %cst_158 = arith.constant dense<0.000000e+00> : vector<64x64xf32>
    %446 = tpu.matmul %442, %445, %cst_158 {dimension_numbers = #tpu.dot_dimension_numbers<[1], [0], [0], [1], [0, 0, 1, 1], [], []>} : vector<64x32xf32>, vector<32x64xf32>, vector<64x64xf32> -> vector<64x64xf32>
    %447 = arith.addf %444, %446 : vector<64x64xf32>
    %c0_159 = arith.constant 0 : index
    %c0_160 = arith.constant 0 : index
    %448 = vector.load %arg10[%c0_159, %c0_160] : memref<1x64xf32, #tpu.memory_space<vmem>>, vector<1x64xf32>
    %449 = vector.broadcast %448 : vector<1x64xf32> to vector<64x64xf32>
    %450 = arith.addf %447, %449 : vector<64x64xf32>
    %cst_161 = arith.constant 0.000000e+00 : f32
    %451 = vector.broadcast %cst_161 : f32 to vector<64x64xf32>
    %452 = arith.maximumf %450, %451 : vector<64x64xf32>
    %c0_162 = arith.constant 0 : index
    %c0_163 = arith.constant 0 : index
    %453 = vector.load %arg11[%c0_162, %c0_163] : memref<64x32xf32, #tpu.memory_space<vmem>>, vector<64x32xf32>
    %cst_164 = arith.constant dense<0.000000e+00> : vector<64x32xf32>
    %454 = tpu.matmul %452, %453, %cst_164 {dimension_numbers = #tpu.dot_dimension_numbers<[1], [0], [0], [1], [0, 0, 1, 1], [], []>} : vector<64x64xf32>, vector<64x32xf32>, vector<64x32xf32> -> vector<64x32xf32>
    %c0_165 = arith.constant 0 : index
    %c0_166 = arith.constant 0 : index
    %455 = vector.load %arg12[%c0_165, %c0_166] : memref<1x32xf32, #tpu.memory_space<vmem>>, vector<1x32xf32>
    %456 = vector.broadcast %455 : vector<1x32xf32> to vector<64x32xf32>
    %457 = arith.addf %454, %456 : vector<64x32xf32>
    %c0_167 = arith.constant 0 : index
    %c0_168 = arith.constant 0 : index
    %c0_169 = arith.constant 0 : index
    %458 = vector.load %arg13[%c0_167, %c0_168, %c0_169] : memref<1x64x32xf32, #tpu.memory_space<vmem>>, vector<1x64x32xf32>
    %459 = vector.shape_cast %458 : vector<1x64x32xf32> to vector<64x32xf32>
    %460 = vector.shape_cast %457 : vector<64x32xf32> to vector<1x64x32xf32>
    tpu.vector_store %arg13[%c0_167, %c0_168, %c0_169], %460 {strides = array<i32>} : memref<1x64x32xf32, #tpu.memory_space<vmem>>, vector<1x64x32xf32>,
    return
  }
  func.func @transform_0(%arg0: i32) -> (i32, i32, i32) {
    %c0_i32 = arith.constant 0 : i32
    %c0_i32_0 = arith.constant 0 : i32
    %c0_i32_1 = arith.constant 0 : i32
    return %arg0, %c0_i32, %c0_i32_0 : i32, i32, i32
  }
  func.func @transform_1(%arg0: i32) -> (i32, i32) {
    %c0_i32 = arith.constant 0 : i32
    %c0_i32_0 = arith.constant 0 : i32
    %c0_i32_1 = arith.constant 0 : i32
    return %c0_i32, %c0_i32_0 : i32, i32
  }
  func.func @transform_2(%arg0: i32) -> (i32, i32) {
    %c0_i32 = arith.constant 0 : i32
    %c0_i32_0 = arith.constant 0 : i32
    %c0_i32_1 = arith.constant 0 : i32
    return %c0_i32, %c0_i32_0 : i32, i32
  }
  func.func @transform_3(%arg0: i32) -> (i32, i32) {
    %c0_i32 = arith.constant 0 : i32
    %c0_i32_0 = arith.constant 0 : i32
    %c0_i32_1 = arith.constant 0 : i32
    return %c0_i32, %c0_i32_0 : i32, i32
  }
  func.func @transform_4(%arg0: i32) -> (i32, i32) {
    %c0_i32 = arith.constant 0 : i32
    %c0_i32_0 = arith.constant 0 : i32
    %c0_i32_1 = arith.constant 0 : i32
    return %c0_i32, %c0_i32_0 : i32, i32
  }
  func.func @transform_5(%arg0: i32) -> (i32, i32) {
    %c0_i32 = arith.constant 0 : i32
    %c0_i32_0 = arith.constant 0 : i32
    %c0_i32_1 = arith.constant 0 : i32
    return %c0_i32, %c0_i32_0 : i32, i32
  }
  func.func @transform_6(%arg0: i32) -> (i32, i32) {
    %c0_i32 = arith.constant 0 : i32
    %c0_i32_0 = arith.constant 0 : i32
    %c0_i32_1 = arith.constant 0 : i32
    return %c0_i32, %c0_i32_0 : i32, i32
  }
  func.func @transform_7(%arg0: i32) -> (i32, i32) {
    %c0_i32 = arith.constant 0 : i32
    %c0_i32_0 = arith.constant 0 : i32
    %c0_i32_1 = arith.constant 0 : i32
    return %c0_i32, %c0_i32_0 : i32, i32
  }
  func.func @transform_8(%arg0: i32) -> (i32, i32) {
    %c0_i32 = arith.constant 0 : i32
    %c0_i32_0 = arith.constant 0 : i32
    %c0_i32_1 = arith.constant 0 : i32
    return %c0_i32, %c0_i32_0 : i32, i32
  }
  func.func @transform_9(%arg0: i32) -> (i32, i32) {
    %c0_i32 = arith.constant 0 : i32
    %c0_i32_0 = arith.constant 0 : i32
    %c0_i32_1 = arith.constant 0 : i32
    return %c0_i32, %c0_i32_0 : i32, i32
  }
  func.func @transform_10(%arg0: i32) -> (i32, i32) {
    %c0_i32 = arith.constant 0 : i32
    %c0_i32_0 = arith.constant 0 : i32
    %c0_i32_1 = arith.constant 0 : i32
    return %c0_i32, %c0_i32_0 : i32, i32
  }
  func.func @transform_11(%arg0: i32) -> (i32, i32) {
    %c0_i32 = arith.constant 0 : i32
    %c0_i32_0 = arith.constant 0 : i32
    %c0_i32_1 = arith.constant 0 : i32
    return %c0_i32, %c0_i32_0 : i32, i32
  }
  func.func @transform_12(%arg0: i32) -> (i32, i32, i32) {
    %c0_i32 = arith.constant 0 : i32
    %c0_i32_0 = arith.constant 0 : i32
    %c0_i32_1 = arith.constant 0 : i32
    return %arg0, %c0_i32, %c0_i32_0 : i32, i32, i32
  }
}

</mosaic_0001>

<llo_original>
// kernel: tpu_custom_call.1
$region0: #{tpu_custom_call.1}
  #allocation0 [shape = 'u32[]', space=smem, size = 0x4, offset = 0x4, fixed_abs, tag = 'smem constant byte address 0x4 - core index']
  #allocation1 [shape = 'u32[144,128]{1,0:T(1,128)}', space=vmem, size = 0x12000, scoped, tag = 'internal scratch']
  #allocation2 [shape = 'f32[64,128]{1,0:T(8,128)}', space=vmem, size = 0x8000, scoped, tag = 'scratch operand']
  #allocation3 [shape = 'f32[64,128]{1,0:T(8,128)}', space=vmem, size = 0x8000, scoped, tag = 'scratch operand']
  #allocation4 [shape = 'f32[64,32]{1,0:T(8,128)}', space=vmem, size = 0x8000, scoped, tag = 'scratch operand']
  #allocation5 [shape = 'f32[64,32]{1,0:T(8,128)}', space=vmem, size = 0x8000, scoped, tag = 'scratch operand']
  %s0 = inlined_call_operand.vmem [shape: f32[1,64,32], index: 0, kind: input, shape index: {}]
  %s1 = inlined_call_operand.vmem [shape: f32[32,128], index: 1, kind: input, shape index: {}]
  %s2 = inlined_call_operand.vmem [shape: f32[32,128], index: 2, kind: input, shape index: {}]
  %s3 = inlined_call_operand.vmem [shape: f32[1,128], index: 3, kind: input, shape index: {}]
  %s4 = inlined_call_operand.vmem [shape: f32[32,128], index: 4, kind: input, shape index: {}]
  %s5 = inlined_call_operand.vmem [shape: f32[32,128], index: 5, kind: input, shape index: {}]
  %s6 = inlined_call_operand.vmem [shape: f32[1,128], index: 6, kind: input, shape index: {}]
  %s7 = inlined_call_operand.vmem [shape: f32[32,64], index: 7, kind: input, shape index: {}]
  %s8 = inlined_call_operand.hbm [shape: f32[32,64], index: 8, kind: input, shape index: {}]
  %s9 = inlined_call_operand.vmem [shape: f32[1,64], index: 9, kind: input, shape index: {}]
  %s10 = inlined_call_operand.vmem [shape: f32[64,32], index: 10, kind: input, shape index: {}]
  %s11 = inlined_call_operand.vmem [shape: f32[1,32], index: 11, kind: input, shape index: {}]
  %s12 = inlined_call_operand.vmem [shape: f32[1,64,32], index: 12, kind: output, shape index: {}]
  %s13 = sld [smem:[#allocation0]]
  $region62: #{tpu_custom_call.1} parent=0
    _
  %s15 = ssub.s32 1, %s13
  %s16 = scalar_select 0, %s15, %s13
  $region1: #{tpu_custom_call.1} parent=0
    #allocation6 [shape = 'u8[16384]{0}', space=vmem, size = 0x4000, scoped, tag = 'input window, operand 8, single buffered']
    #allocation7 [shape = 's32[1]{0}', space=sflag, size = 0x4, scoped, tag = 'scoped memory for tpu_custom_call.1']
    %17 = vsyncpa [#allocation7], 0
    // Predicated region
    $region2: #{tpu_custom_call.1} parent=1 // pred_check
      _
    $region3: #{tpu_custom_call.1} parent=1 // pred_check_branch
      %19 = sbr.rel (0) target = $region5
    $region4: #{tpu_custom_call.1} parent=1 // pred_region
      _
    $region5: #{tpu_custom_call.1} parent=1 // pred_fallthru
      _
    // Predicated region
    $region6: #{tpu_custom_call.1} parent=1 // pred_check
      _
    $region7: #{tpu_custom_call.1} parent=1 // pred_check_branch
      %21 = sbr.rel (0) target = $region9
    $region8: #{tpu_custom_call.1} parent=1 // pred_region
      _
    $region9: #{tpu_custom_call.1} parent=1 // pred_fallthru
      _
    // Predicated region
    $region10: #{tpu_custom_call.1} parent=1 // pred_check
      _
    $region11: #{tpu_custom_call.1} parent=1 // pred_check_branch
      %23 = sbr.rel (0) target = $region13
    $region12: #{tpu_custom_call.1} parent=1 // pred_region
      _
    $region13: #{tpu_custom_call.1} parent=1 // pred_fallthru
      _
    // Predicated region
    $region14: #{tpu_custom_call.1} parent=1 // pred_check
      _
    $region15: #{tpu_custom_call.1} parent=1 // pred_check_branch
      %25 = sbr.rel (0) target = $region17
    $region16: #{tpu_custom_call.1} parent=1 // pred_region
      _
    $region17: #{tpu_custom_call.1} parent=1 // pred_fallthru
      _
    // Predicated region
    $region18: #{tpu_custom_call.1} parent=1 // pred_check
      _
    $region19: #{tpu_custom_call.1} parent=1 // pred_check_branch
      %27 = sbr.rel (0) target = $region21
    $region20: #{tpu_custom_call.1} parent=1 // pred_region
      _
    $region21: #{tpu_custom_call.1} parent=1 // pred_fallthru
      _
    // Predicated region
    $region22: #{tpu_custom_call.1} parent=1 // pred_check
      _
    $region23: #{tpu_custom_call.1} parent=1 // pred_check_branch
      %29 = sbr.rel (0) target = $region25
    $region24: #{tpu_custom_call.1} parent=1 // pred_region
      _
    $region25: #{tpu_custom_call.1} parent=1 // pred_fallthru
      _
    // Predicated region
    $region26: #{tpu_custom_call.1} parent=1 // pred_check
      _
    $region27: #{tpu_custom_call.1} parent=1 // pred_check_branch
      %31 = sbr.rel (0) target = $region29
    $region28: #{tpu_custom_call.1} parent=1 // pred_region
      _
    $region29: #{tpu_custom_call.1} parent=1 // pred_fallthru
      _
    // Predicated region
    $region30: #{tpu_custom_call.1} parent=1 // pred_check
      _
    $region31: #{tpu_custom_call.1} parent=1 // pred_check_branch
      %33 = sbr.rel (0) target = $region33
    $region32: #{tpu_custom_call.1} parent=1 // pred_region
      _
    $region33: #{tpu_custom_call.1} parent=1 // pred_fallthru
      _
    // Predicated region
    $region34: #{tpu_custom_call.1} parent=1 // pred_check
      _
    $region35: #{tpu_custom_call.1} parent=1 // pred_check_branch
      %35 = sbr.rel (0) target = $region37
    $region36: #{tpu_custom_call.1} parent=1 // pred_region
      %s37 = ssub.s32 512, 512
      %38 = vsyncadd [#allocation7], %s37
      %s39 = sshll.u32 [#allocation6], 4
      %s40 = int_to_ptr.vmem [resolvable:$true] %s39
      %45 = dma.hbm_to_vmem [thread:$0]  %s8, 512, %s40, [#allocation7], 128, 128, 8
    $region37: #{tpu_custom_call.1} parent=1 // pred_fallthru
      _
    // Predicated region
    $region38: #{tpu_custom_call.1} parent=1 // pred_check
      _
    $region39: #{tpu_custom_call.1} parent=1 // pred_check_branch
      %47 = sbr.rel (0) target = $region41
    $region40: #{tpu_custom_call.1} parent=1 // pred_region
      _
    $region41: #{tpu_custom_call.1} parent=1 // pred_fallthru
      _
    // Predicated region
    $region42: #{tpu_custom_call.1} parent=1 // pred_check
      _
    $region43: #{tpu_custom_call.1} parent=1 // pred_check_branch
      %49 = sbr.rel (0) target = $region45
    $region44: #{tpu_custom_call.1} parent=1 // pred_region
      _
    $region45: #{tpu_custom_call.1} parent=1 // pred_fallthru
      _
    // Predicated region
    $region46: #{tpu_custom_call.1} parent=1 // pred_check
      _
    $region47: #{tpu_custom_call.1} parent=1 // pred_check_branch
      %51 = sbr.rel (0) target = $region49
    $region48: #{tpu_custom_call.1} parent=1 // pred_region
      _
    $region49: #{tpu_custom_call.1} parent=1 // pred_fallthru
      _
    // Predicated region
    $region50: #{tpu_custom_call.1} parent=1 // pred_check
      _
    $region51: #{tpu_custom_call.1} parent=1 // pred_check_branch
      %53 = sbr.rel (0) target = $region53
    $region52: #{tpu_custom_call.1} parent=1 // pred_region
      %54 = dma.done [#allocation7], 512
    $region53: #{tpu_custom_call.1} parent=1 // pred_fallthru
      _
    %v55 = vld [vmem:[%s0] sm:$0xff]
    %v56 = vld [vmem:[%s0 + $0x8] sm:$0xff]
    %v57 = vld [vmem:[%s0 + $0x10] sm:$0xff]
    %v58 = vld [vmem:[%s0 + $0x18] sm:$0xff]
    %v59 = vld [vmem:[%s0 + $0x20] sm:$0xff]
    %v60 = vld [vmem:[%s0 + $0x28] sm:$0xff]
    %v61 = vld [vmem:[%s0 + $0x30] sm:$0xff]
    %v62 = vld [vmem:[%s0 + $0x38] sm:$0xff]
    %v63 = vld [vmem:[%s1] sm:$0xff]
    %v64 = vld [vmem:[%s1 + $0x8] sm:$0xff]
    %v65 = vld [vmem:[%s1 + $0x10] sm:$0xff]
    %v66 = vld [vmem:[%s1 + $0x18] sm:$0xff]
    %v67 = vld [vmem:[%s3] sm:$0x1]
    %v69 = vlaneseq
    %v70 = vshrl.u32 %v69, 7
    %v71 = vsub.s32 0, %v70
    %v72 = vrot.slane %v67, %v71
    %vm74 = vcmask 261120
    %v76 = vsel %vm74, %v55, 0
    %v79 = vsel %vm74, %v56, 0
    %v82 = vsel %vm74, %v57, 0
    %v85 = vsel %vm74, %v58, 0
    %v88 = vsel %vm74, %v59, 0
    %v91 = vsel %vm74, %v60, 0
    %v94 = vsel %vm74, %v61, 0
    %v97 = vsel %vm74, %v62, 0
    %99 = vmatprep.subr.mxu0 0.0
    %100 = vmatpush1.msra.mxu0 %v63
    %101 = vmatprep.subr.mxu0 0.0
    %102 = vmatpush1.msra.mxu0 %v64
    %103 = vmatprep.subr.mxu0 0.0
    %104 = vmatpush1.msra.mxu0 %v65
    %105 = vmatprep.subr.mxu0 0.0
    %106 = vmatpush1.msra.mxu0 %v66
    %107 = vmatprep.subr.mxu0 0.0
    %108 = vmatpush1.msra.mxu0 0.0
    %109 = vmatprep.subr.mxu0 0.0
    %110 = vmatpush1.msra.mxu0 0.0
    %111 = vmatprep.subr.mxu0 0.0
    %112 = vmatpush1.msra.mxu0 0.0
    %113 = vmatprep.subr.mxu0 0.0
    %114 = vmatpush1.msra.mxu0 0.0
    %115 = vmatprep.subr.mxu0 0.0
    %116 = vmatpush1.msra.mxu0 0.0
    %117 = vmatprep.subr.mxu0 0.0
    %118 = vmatpush1.msra.mxu0 0.0
    %119 = vmatprep.subr.mxu0 0.0
    %120 = vmatpush1.msra.mxu0 0.0
    %121 = vmatprep.subr.mxu0 0.0
    %122 = vmatpush1.msra.mxu0 0.0
    %123 = vmatprep.subr.mxu0 0.0
    %124 = vmatpush1.msra.mxu0 0.0
    %125 = vmatprep.subr.mxu0 0.0
    %126 = vmatpush1.msra.mxu0 0.0
    %127 = vmatprep.subr.mxu0 0.0
    %128 = vmatpush1.msra.mxu0 0.0
    %129 = vmatprep.subr.mxu0 0.0
    %130 = vmatpush1.msra.mxu0 0.0
    %131 = vmatprep.subr.mxu0 0.0
    %132 = vmatpush1.msra.mxu0 0.0
    %133 = vmatprep.subr.mxu0 0.0
    %134 = vmatpush1.msra.mxu0 0.0
    %135 = vmatprep.subr.mxu0 0.0
    %136 = vmatpush1.msra.mxu0 0.0
    %137 = vmatprep.subr.mxu0 0.0
    %138 = vmatpush1.msra.mxu0 0.0
    %139 = vmatprep.subr.mxu0 0.0
    %140 = vmatpush1.msra.mxu0 0.0
    %141 = vmatprep.subr.mxu0 0.0
    %142 = vmatpush1.msra.mxu0 0.0
    %143 = vmatprep.subr.mxu0 0.0
    %144 = vmatpush1.msra.mxu0 0.0
    %145 = vmatprep.subr.mxu0 0.0
    %146 = vmatpush1.msra.mxu0 0.0
    %147 = vmatprep.subr.mxu0 0.0
    %148 = vmatpush1.msra.mxu0 0.0
    %149 = vmatprep.subr.mxu0 0.0
    %150 = vmatpush1.msra.mxu0 0.0
    %151 = vmatprep.subr.mxu0 0.0
    %152 = vmatpush1.msra.mxu0 0.0
    %153 = vmatprep.subr.mxu0 0.0
    %154 = vmatpush1.msra.mxu0 0.0
    %155 = vmatprep.subr.mxu0 0.0
    %156 = vmatpush1.msra.mxu0 0.0
    %157 = vmatprep.subr.mxu0 0.0
    %158 = vmatpush1.msra.mxu0 0.0
    %159 = vmatprep.subr.mxu0 0.0
    %160 = vmatpush1.msra.mxu0 0.0
    %161 = vmatprep.subr.mxu0 0.0
    %162 = vmatpush1.msra.mxu0 0.0
    %163 = vmatprep.mubr.f32.mxu0 0.0
    %164 = vmatmul.mubr.f32.gmra.mrb[0].mxu0 %v76
    %v165 = vpop.f32.mrb[0].mxu0
    %v166 = vadd.f32 %v72, %v165
    %v167 = vpop.f32.mrb[0].mxu0
    %168 = vmatprep.mubr.f32.mxu0 0.0
    %169 = vmatmul.mubr.f32.gmra.mrb[0].mxu0 %v79
    %v170 = vpop.f32.mrb[0].mxu0
    %v171 = vadd.f32 %v72, %v170
    %v172 = vpop.f32.mrb[0].mxu0
    %173 = vmatprep.mubr.f32.mxu0 0.0
    %174 = vmatmul.mubr.f32.gmra.mrb[0].mxu0 %v82
    %v175 = vpop.f32.mrb[0].mxu0
    %v176 = vadd.f32 %v72, %v175
    %v177 = vpop.f32.mrb[0].mxu0
    %178 = vmatprep.mubr.f32.mxu0 0.0
    %179 = vmatmul.mubr.f32.gmra.mrb[0].mxu0 %v85
    %v180 = vpop.f32.mrb[0].mxu0
    %v181 = vadd.f32 %v72, %v180
    %v182 = vpop.f32.mrb[0].mxu0
    %183 = vmatprep.mubr.f32.mxu0 0.0
    %184 = vmatmul.mubr.f32.gmra.mrb[0].mxu0 %v88
    %v185 = vpop.f32.mrb[0].mxu0
    %v186 = vadd.f32 %v72, %v185
    %v187 = vpop.f32.mrb[0].mxu0
    %188 = vmatprep.mubr.f32.mxu0 0.0
    %189 = vmatmul.mubr.f32.gmra.mrb[0].mxu0 %v91
    %v190 = vpop.f32.mrb[0].mxu0
    %v191 = vadd.f32 %v72, %v190
    %v192 = vpop.f32.mrb[0].mxu0
    %193 = vmatprep.mubr.f32.mxu0 0.0
    %194 = vmatmul.mubr.f32.gmra.mrb[0].mxu0 %v94
    %v195 = vpop.f32.mrb[0].mxu0
    %v196 = vadd.f32 %v72, %v195
    %v197 = vpop.f32.mrb[0].mxu0
    %198 = vmatprep.mubr.f32.mxu0 0.0
    %199 = vmatmul.mubr.f32.gmra.mrb[0].mxu0 %v97
    %v200 = vpop.f32.mrb[0].mxu0
    %v201 = vadd.f32 %v72, %v200
    %v202 = vpop.f32.mrb[0].mxu0
    %203 = vdwg.mxu0
    %204 = vst [vmem:[#allocation2] sm:$0xff] %v166
    %205 = vst [vmem:[#allocation2 + $0x8] sm:$0xff] %v171
    %206 = vst [vmem:[#allocation2 + $0x10] sm:$0xff] %v176
    %207 = vst [vmem:[#allocation2 + $0x18] sm:$0xff] %v181
    %208 = vst [vmem:[#allocation2 + $0x20] sm:$0xff] %v186
    %209 = vst [vmem:[#allocation2 + $0x28] sm:$0xff] %v191
    %210 = vst [vmem:[#allocation2 + $0x30] sm:$0xff] %v196
    %211 = vst [vmem:[#allocation2 + $0x38] sm:$0xff] %v201
    %v212 = vld [vmem:[%s4] sm:$0xff]
    %v213 = vld [vmem:[%s4 + $0x8] sm:$0xff]
    %v214 = vld [vmem:[%s4 + $0x10] sm:$0xff]
    %v215 = vld [vmem:[%s4 + $0x18] sm:$0xff]
    %v216 = vld [vmem:[%s6] sm:$0x1]
    %v218 = vlaneseq
    %v219 = vshrl.u32 %v218, 7
    %v220 = vsub.s32 0, %v219
    %v221 = vrot.slane %v216, %v220
    %223 = vmatprep.subr.mxu0 0.0
    %224 = vmatpush1.msra.mxu0 %v212
    %225 = vmatprep.subr.mxu0 0.0
    %226 = vmatpush1.msra.mxu0 %v213
    %227 = vmatprep.subr.mxu0 0.0
    %228 = vmatpush1.msra.mxu0 %v214
    %229 = vmatprep.subr.mxu0 0.0
    %230 = vmatpush1.msra.mxu0 %v215
    %231 = vmatprep.subr.mxu0 0.0
    %232 = vmatpush1.msra.mxu0 0.0
    %233 = vmatprep.subr.mxu0 0.0
    %234 = vmatpush1.msra.mxu0 0.0
    %235 = vmatprep.subr.mxu0 0.0
    %236 = vmatpush1.msra.mxu0 0.0
    %237 = vmatprep.subr.mxu0 0.0
    %238 = vmatpush1.msra.mxu0 0.0
    %239 = vmatprep.subr.mxu0 0.0
    %240 = vmatpush1.msra.mxu0 0.0
    %241 = vmatprep.subr.mxu0 0.0
    %242 = vmatpush1.msra.mxu0 0.0
    %243 = vmatprep.subr.mxu0 0.0
    %244 = vmatpush1.msra.mxu0 0.0
    %245 = vmatprep.subr.mxu0 0.0
    %246 = vmatpush1.msra.mxu0 0.0
    %247 = vmatprep.subr.mxu0 0.0
    %248 = vmatpush1.msra.mxu0 0.0
    %249 = vmatprep.subr.mxu0 0.0
    %250 = vmatpush1.msra.mxu0 0.0
    %251 = vmatprep.subr.mxu0 0.0
    %252 = vmatpush1.msra.mxu0 0.0
    %253 = vmatprep.subr.mxu0 0.0
    %254 = vmatpush1.msra.mxu0 0.0
    %255 = vmatprep.subr.mxu0 0.0
    %256 = vmatpush1.msra.mxu0 0.0
    %257 = vmatprep.subr.mxu0 0.0
    %258 = vmatpush1.msra.mxu0 0.0
    %259 = vmatprep.subr.mxu0 0.0
    %260 = vmatpush1.msra.mxu0 0.0
    %261 = vmatprep.subr.mxu0 0.0
    %262 = vmatpush1.msra.mxu0 0.0
    %263 = vmatprep.subr.mxu0 0.0
    %264 = vmatpush1.msra.mxu0 0.0
    %265 = vmatprep.subr.mxu0 0.0
    %266 = vmatpush1.msra.mxu0 0.0
    %267 = vmatprep.subr.mxu0 0.0
    %268 = vmatpush1.msra.mxu0 0.0
    %269 = vmatprep.subr.mxu0 0.0
    %270 = vmatpush1.msra.mxu0 0.0
    %271 = vmatprep.subr.mxu0 0.0
    %272 = vmatpush1.msra.mxu0 0.0
    %273 = vmatprep.subr.mxu0 0.0
    %274 = vmatpush1.msra.mxu0 0.0
    %275 = vmatprep.subr.mxu0 0.0
    %276 = vmatpush1.msra.mxu0 0.0
    %277 = vmatprep.subr.mxu0 0.0
    %278 = vmatpush1.msra.mxu0 0.0
    %279 = vmatprep.subr.mxu0 0.0
    %280 = vmatpush1.msra.mxu0 0.0
    %281 = vmatprep.subr.mxu0 0.0
    %282 = vmatpush1.msra.mxu0 0.0
    %283 = vmatprep.subr.mxu0 0.0
    %284 = vmatpush1.msra.mxu0 0.0
    %285 = vmatprep.subr.mxu0 0.0
    %286 = vmatpush1.msra.mxu0 0.0
    %287 = vmatprep.mubr.f32.mxu0 0.0
    %288 = vmatmul.mubr.f32.gmra.mrb[0].mxu0 %v76
    %v289 = vpop.f32.mrb[0].mxu0
    %v290 = vadd.f32 %v221, %v289
    %v291 = vpop.f32.mrb[0].mxu0
    %292 = vmatprep.mubr.f32.mxu0 0.0
    %293 = vmatmul.mubr.f32.gmra.mrb[0].mxu0 %v79
    %v294 = vpop.f32.mrb[0].mxu0
    %v295 = vadd.f32 %v221, %v294
    %v296 = vpop.f32.mrb[0].mxu0
    %297 = vmatprep.mubr.f32.mxu0 0.0
    %298 = vmatmul.mubr.f32.gmra.mrb[0].mxu0 %v82
    %v299 = vpop.f32.mrb[0].mxu0
    %v300 = vadd.f32 %v221, %v299
    %v301 = vpop.f32.mrb[0].mxu0
    %302 = vmatprep.mubr.f32.mxu0 0.0
    %303 = vmatmul.mubr.f32.gmra.mrb[0].mxu0 %v85
    %v304 = vpop.f32.mrb[0].mxu0
    %v305 = vadd.f32 %v221, %v304
    %v306 = vpop.f32.mrb[0].mxu0
    %307 = vmatprep.mubr.f32.mxu0 0.0
    %308 = vmatmul.mubr.f32.gmra.mrb[0].mxu0 %v88
    %v309 = vpop.f32.mrb[0].mxu0
    %v310 = vadd.f32 %v221, %v309
    %v311 = vpop.f32.mrb[0].mxu0
    %312 = vmatprep.mubr.f32.mxu0 0.0
    %313 = vmatmul.mubr.f32.gmra.mrb[0].mxu0 %v91
    %v314 = vpop.f32.mrb[0].mxu0
    %v315 = vadd.f32 %v221, %v314
    %v316 = vpop.f32.mrb[0].mxu0
    %317 = vmatprep.mubr.f32.mxu0 0.0
    %318 = vmatmul.mubr.f32.gmra.mrb[0].mxu0 %v94
    %v319 = vpop.f32.mrb[0].mxu0
    %v320 = vadd.f32 %v221, %v319
    %v321 = vpop.f32.mrb[0].mxu0
    %322 = vmatprep.mubr.f32.mxu0 0.0
    %323 = vmatmul.mubr.f32.gmra.mrb[0].mxu0 %v97
    %v324 = vpop.f32.mrb[0].mxu0
    %v325 = vadd.f32 %v221, %v324
    %v326 = vpop.f32.mrb[0].mxu0
    %327 = vdwg.mxu0
    %328 = vst [vmem:[#allocation3] sm:$0xff] %v290
    %329 = vst [vmem:[#allocation3 + $0x8] sm:$0xff] %v295
    %330 = vst [vmem:[#allocation3 + $0x10] sm:$0xff] %v300
    %331 = vst [vmem:[#allocation3 + $0x18] sm:$0xff] %v305
    %332 = vst [vmem:[#allocation3 + $0x20] sm:$0xff] %v310
    %333 = vst [vmem:[#allocation3 + $0x28] sm:$0xff] %v315
    %334 = vst [vmem:[#allocation3 + $0x30] sm:$0xff] %v320
    %335 = vst [vmem:[#allocation3 + $0x38] sm:$0xff] %v325
    %v336 = vld [vmem:[%s2] sm:$0xff]
    %v337 = vld [vmem:[%s2 + $0x8] sm:$0xff]
    %v338 = vld [vmem:[%s2 + $0x10] sm:$0xff]
    %v339 = vld [vmem:[%s2 + $0x18] sm:$0xff]
    %v340 = vld [vmem:[%s5] sm:$0xff]
    %v341 = vld [vmem:[%s5 + $0x8] sm:$0xff]
    %v342 = vld [vmem:[%s5 + $0x10] sm:$0xff]
    %v343 = vld [vmem:[%s5 + $0x18] sm:$0xff]
    %s344 = scalar_lea.vmem [#allocation3], 56
    %v345 = vld [vmem:[%s344] sm:$0xff]
    %v347 = vsel %vm74, 0.0, 0
    %349 = vmatprep.subr.mxu0 0.0
    %350 = vmatpush1.msra.mxu0 %v340
    %351 = vmatprep.subr.mxu0 0.0
    %352 = vmatpush1.msra.mxu0 %v341
    %353 = vmatprep.subr.mxu0 0.0
    %354 = vmatpush1.msra.mxu0 %v342
    %355 = vmatprep.subr.mxu0 0.0
    %356 = vmatpush1.msra.mxu0 %v343
    %357 = vmatprep.subr.mxu0 0.0
    %358 = vmatpush1.msra.mxu0 0.0
    %359 = vmatprep.subr.mxu0 0.0
    %360 = vmatpush1.msra.mxu0 0.0
    %361 = vmatprep.subr.mxu0 0.0
    %362 = vmatpush1.msra.mxu0 0.0
    %363 = vmatprep.subr.mxu0 0.0
    %364 = vmatpush1.msra.mxu0 0.0
    %365 = vmatprep.subr.mxu0 0.0
    %366 = vmatpush1.msra.mxu0 0.0
    %367 = vmatprep.subr.mxu0 0.0
    %368 = vmatpush1.msra.mxu0 0.0
    %369 = vmatprep.subr.mxu0 0.0
    %370 = vmatpush1.msra.mxu0 0.0
    %371 = vmatprep.subr.mxu0 0.0
    %372 = vmatpush1.msra.mxu0 0.0
    %373 = vmatprep.subr.mxu0 0.0
    %374 = vmatpush1.msra.mxu0 0.0
    %375 = vmatprep.subr.mxu0 0.0
    %376 = vmatpush1.msra.mxu0 0.0
    %377 = vmatprep.subr.mxu0 0.0
    %378 = vmatpush1.msra.mxu0 0.0
    %379 = vmatprep.subr.mxu0 0.0
    %380 = vmatpush1.msra.mxu0 0.0
    %381 = vmatprep.subr.mxu0 0.0
    %382 = vmatpush1.msra.mxu0 0.0
    %383 = vmatprep.subr.mxu0 0.0
    %384 = vmatpush1.msra.mxu0 0.0
    %385 = vmatprep.subr.mxu0 0.0
    %386 = vmatpush1.msra.mxu0 0.0
    %387 = vmatprep.subr.mxu0 0.0
    %388 = vmatpush1.msra.mxu0 0.0
    %389 = vmatprep.subr.mxu0 0.0
    %390 = vmatpush1.msra.mxu0 0.0
    %391 = vmatprep.subr.mxu0 0.0
    %392 = vmatpush1.msra.mxu0 0.0
    %393 = vmatprep.subr.mxu0 0.0
    %394 = vmatpush1.msra.mxu0 0.0
    %395 = vmatprep.subr.mxu0 0.0
    %396 = vmatpush1.msra.mxu0 0.0
    %397 = vmatprep.subr.mxu0 0.0
    %398 = vmatpush1.msra.mxu0 0.0
    %399 = vmatprep.subr.mxu0 0.0
    %400 = vmatpush1.msra.mxu0 0.0
    %401 = vmatprep.subr.mxu0 0.0
    %402 = vmatpush1.msra.mxu0 0.0
    %403 = vmatprep.subr.mxu0 0.0
    %404 = vmatpush1.msra.mxu0 0.0
    %405 = vmatprep.subr.mxu0 0.0
    %406 = vmatpush1.msra.mxu0 0.0
    %407 = vmatprep.subr.mxu0 0.0
    %408 = vmatpush1.msra.mxu0 0.0
    %409 = vmatprep.subr.mxu0 0.0
    %410 = vmatpush1.msra.mxu0 0.0
    %411 = vmatprep.subr.mxu0 0.0
    %412 = vmatpush1.msra.mxu0 0.0
    %413 = vmatprep.mubr.f32.mxu0 0.0
    %414 = vmatmul.mubr.f32.gmra.mrb[0].mxu0 %v347
    %v415 = vpop.f32.mrb[0].mxu0
    %v416 = vadd.f32 0.0, %v415
    %v417 = vpop.f32.mrb[0].mxu0
    %418 = vdwg.mxu0
    %v419 = vadd.f32 %v345, %v416
    %v420 = vmul.f32 %v419, 0.5
    %v421 = vtanh.pop %v420
    %v422 = vadd.f32 %v421, 1.0
    %v423 = vmul.f32 %v422, 0.5
    %v424 = vtanh.pop %v419
    %v425 = vmul.f32 %v423, 0.0
    %427 = vrot.lane.b32.xlu0 %v424, 32
    %v428 = vpop.permute.xlu0 %427
    %v430 = vmul.f32 %v423, %v428
    %432 = vrot.lane.b32.xlu0 %v430, 32
    %v433 = vpop.permute.xlu0 %432
    %v435 = vadd.f32 %v425, %v433
    %v436 = vtanh.pop %v435
    %438 = vrot.lane.b32.xlu0 %v436, 32
    %v439 = vpop.permute.xlu0 %438
    %v441 = vmul.f32 %v423, %v439
    %443 = vrot.lane.b32.xlu0 %v441, 64
    %v444 = vpop.permute.xlu0 %443
    %s446 = scalar_lea.vmem [#allocation5], 56
    %447 = vst.msk [vmem:[%s446] sm:$0xff] %vm74, %v444
    %s448 = scalar_lea.vmem [#allocation3], 48
    %v449 = vld [vmem:[%s448] sm:$0xff]
    %v450 = vsel %vm74, %v444, 0
    %452 = vmatprep.subr.mxu0 0.0
    %453 = vmatpush1.msra.mxu0 %v340
    %454 = vmatprep.subr.mxu0 0.0
    %455 = vmatpush1.msra.mxu0 %v341
    %456 = vmatprep.subr.mxu0 0.0
    %457 = vmatpush1.msra.mxu0 %v342
    %458 = vmatprep.subr.mxu0 0.0
    %459 = vmatpush1.msra.mxu0 %v343
    %460 = vmatprep.subr.mxu0 0.0
    %461 = vmatpush1.msra.mxu0 0.0
    %462 = vmatprep.subr.mxu0 0.0
    %463 = vmatpush1.msra.mxu0 0.0
    %464 = vmatprep.subr.mxu0 0.0
    %465 = vmatpush1.msra.mxu0 0.0
    %466 = vmatprep.subr.mxu0 0.0
    %467 = vmatpush1.msra.mxu0 0.0
    %468 = vmatprep.subr.mxu0 0.0
    %469 = vmatpush1.msra.mxu0 0.0
    %470 = vmatprep.subr.mxu0 0.0
    %471 = vmatpush1.msra.mxu0 0.0
    %472 = vmatprep.subr.mxu0 0.0
    %473 = vmatpush1.msra.mxu0 0.0
    %474 = vmatprep.subr.mxu0 0.0
    %475 = vmatpush1.msra.mxu0 0.0
    %476 = vmatprep.subr.mxu0 0.0
    %477 = vmatpush1.msra.mxu0 0.0
    %478 = vmatprep.subr.mxu0 0.0
    %479 = vmatpush1.msra.mxu0 0.0
    %480 = vmatprep.subr.mxu0 0.0
    %481 = vmatpush1.msra.mxu0 0.0
    %482 = vmatprep.subr.mxu0 0.0
    %483 = vmatpush1.msra.mxu0 0.0
    %484 = vmatprep.subr.mxu0 0.0
    %485 = vmatpush1.msra.mxu0 0.0
    %486 = vmatprep.subr.mxu0 0.0
    %487 = vmatpush1.msra.mxu0 0.0
    %488 = vmatprep.subr.mxu0 0.0
    %489 = vmatpush1.msra.mxu0 0.0
    %490 = vmatprep.subr.mxu0 0.0
    %491 = vmatpush1.msra.mxu0 0.0
    %492 = vmatprep.subr.mxu0 0.0
    %493 = vmatpush1.msra.mxu0 0.0
    %494 = vmatprep.subr.mxu0 0.0
    %495 = vmatpush1.msra.mxu0 0.0
    %496 = vmatprep.subr.mxu0 0.0
    %497 = vmatpush1.msra.mxu0 0.0
    %498 = vmatprep.subr.mxu0 0.0
    %499 = vmatpush1.msra.mxu0 0.0
    %500 = vmatprep.subr.mxu0 0.0
    %501 = vmatpush1.msra.mxu0 0.0
    %502 = vmatprep.subr.mxu0 0.0
    %503 = vmatpush1.msra.mxu0 0.0
    %504 = vmatprep.subr.mxu0 0.0
    %505 = vmatpush1.msra.mxu0 0.0
    %506 = vmatprep.subr.mxu0 0.0
    %507 = vmatpush1.msra.mxu0 0.0
    %508 = vmatprep.subr.mxu0 0.0
    %509 = vmatpush1.msra.mxu0 0.0
    %510 = vmatprep.subr.mxu0 0.0
    %511 = vmatpush1.msra.mxu0 0.0
    %512 = vmatprep.subr.mxu0 0.0
    %513 = vmatpush1.msra.mxu0 0.0
    %514 = vmatprep.subr.mxu0 0.0
    %515 = vmatpush1.msra.mxu0 0.0
    %516 = vmatprep.mubr.f32.mxu0 0.0
    %517 = vmatmul.mubr.f32.gmra.mrb[0].mxu0 %v450
    %v518 = vpop.f32.mrb[0].mxu0
    %v519 = vadd.f32 0.0, %v518
    %v520 = vpop.f32.mrb[0].mxu0
    %521 = vdwg.mxu0
    %v522 = vadd.f32 %v449, %v519
    %v523 = vmul.f32 %v522, 0.5
    %v524 = vtanh.pop %v523
    %v525 = vadd.f32 %v524, 1.0
    %v526 = vmul.f32 %v525, 0.5
    %v527 = vtanh.pop %v522
    %v528 = vmul.f32 %v526, %v435
    %530 = vrot.lane.b32.xlu0 %v527, 32
    %v531 = vpop.permute.xlu0 %530
    %v533 = vmul.f32 %v526, %v531
    %535 = vrot.lane.b32.xlu0 %v533, 32
    %v536 = vpop.permute.xlu0 %535
    %v538 = vadd.f32 %v528, %v536
    %v539 = vtanh.pop %v538
    %541 = vrot.lane.b32.xlu0 %v539, 32
    %v542 = vpop.permute.xlu0 %541
    %v544 = vmul.f32 %v526, %v542
    %546 = vrot.lane.b32.xlu0 %v544, 64
    %v547 = vpop.permute.xlu0 %546
    %s549 = scalar_lea.vmem [#allocation5], 48
    %550 = vst.msk [vmem:[%s549] sm:$0xff] %vm74, %v547
    %s551 = scalar_lea.vmem [#allocation3], 40
    %v552 = vld [vmem:[%s551] sm:$0xff]
    %v553 = vsel %vm74, %v547, 0
    %555 = vmatprep.subr.mxu0 0.0
    %556 = vmatpush1.msra.mxu0 %v340
    %557 = vmatprep.subr.mxu0 0.0
    %558 = vmatpush1.msra.mxu0 %v341
    %559 = vmatprep.subr.mxu0 0.0
    %560 = vmatpush1.msra.mxu0 %v342
    %561 = vmatprep.subr.mxu0 0.0
    %562 = vmatpush1.msra.mxu0 %v343
    %563 = vmatprep.subr.mxu0 0.0
    %564 = vmatpush1.msra.mxu0 0.0
    %565 = vmatprep.subr.mxu0 0.0
    %566 = vmatpush1.msra.mxu0 0.0
    %567 = vmatprep.subr.mxu0 0.0
    %568 = vmatpush1.msra.mxu0 0.0
    %569 = vmatprep.subr.mxu0 0.0
    %570 = vmatpush1.msra.mxu0 0.0
    %571 = vmatprep.subr.mxu0 0.0
    %572 = vmatpush1.msra.mxu0 0.0
    %573 = vmatprep.subr.mxu0 0.0
    %574 = vmatpush1.msra.mxu0 0.0
    %575 = vmatprep.subr.mxu0 0.0
    %576 = vmatpush1.msra.mxu0 0.0
    %577 = vmatprep.subr.mxu0 0.0
    %578 = vmatpush1.msra.mxu0 0.0
    %579 = vmatprep.subr.mxu0 0.0
    %580 = vmatpush1.msra.mxu0 0.0
    %581 = vmatprep.subr.mxu0 0.0
    %582 = vmatpush1.msra.mxu0 0.0
    %583 = vmatprep.subr.mxu0 0.0
    %584 = vmatpush1.msra.mxu0 0.0
    %585 = vmatprep.subr.mxu0 0.0
    %586 = vmatpush1.msra.mxu0 0.0
    %587 = vmatprep.subr.mxu0 0.0
    %588 = vmatpush1.msra.mxu0 0.0
    %589 = vmatprep.subr.mxu0 0.0
    %590 = vmatpush1.msra.mxu0 0.0
    %591 = vmatprep.subr.mxu0 0.0
    %592 = vmatpush1.msra.mxu0 0.0
    %593 = vmatprep.subr.mxu0 0.0
    %594 = vmatpush1.msra.mxu0 0.0
    %595 = vmatprep.subr.mxu0 0.0
    %596 = vmatpush1.msra.mxu0 0.0
    %597 = vmatprep.subr.mxu0 0.0
    %598 = vmatpush1.msra.mxu0 0.0
    %599 = vmatprep.subr.mxu0 0.0
    %600 = vmatpush1.msra.mxu0 0.0
    %601 = vmatprep.subr.mxu0 0.0
    %602 = vmatpush1.msra.mxu0 0.0
    %603 = vmatprep.subr.mxu0 0.0
    %604 = vmatpush1.msra.mxu0 0.0
    %605 = vmatprep.subr.mxu0 0.0
    %606 = vmatpush1.msra.mxu0 0.0
    %607 = vmatprep.subr.mxu0 0.0
    %608 = vmatpush1.msra.mxu0 0.0
    %609 = vmatprep.subr.mxu0 0.0
    %610 = vmatpush1.msra.mxu0 0.0
    %611 = vmatprep.subr.mxu0 0.0
    %612 = vmatpush1.msra.mxu0 0.0
    %613 = vmatprep.subr.mxu0 0.0
    %614 = vmatpush1.msra.mxu0 0.0
    %615 = vmatprep.subr.mxu0 0.0
    %616 = vmatpush1.msra.mxu0 0.0
    %617 = vmatprep.subr.mxu0 0.0
    %618 = vmatpush1.msra.mxu0 0.0
    %619 = vmatprep.mubr.f32.mxu0 0.0
    %620 = vmatmul.mubr.f32.gmra.mrb[0].mxu0 %v553
    %v621 = vpop.f32.mrb[0].mxu0
    %v622 = vadd.f32 0.0, %v621
    %v623 = vpop.f32.mrb[0].mxu0
    %624 = vdwg.mxu0
    %v625 = vadd.f32 %v552, %v622
    %v626 = vmul.f32 %v625, 0.5
    %v627 = vtanh.pop %v626
    %v628 = vadd.f32 %v627, 1.0
    %v629 = vmul.f32 %v628, 0.5
    %v630 = vtanh.pop %v625
    %v631 = vmul.f32 %v629, %v538
    %633 = vrot.lane.b32.xlu0 %v630, 32
    %v634 = vpop.permute.xlu0 %633
    %v636 = vmul.f32 %v629, %v634
    %638 = vrot.lane.b32.xlu0 %v636, 32
    %v639 = vpop.permute.xlu0 %638
    %v641 = vadd.f32 %v631, %v639
    %v642 = vtanh.pop %v641
    %644 = vrot.lane.b32.xlu0 %v642, 32
    %v645 = vpop.permute.xlu0 %644
    %v647 = vmul.f32 %v629, %v645
    %649 = vrot.lane.b32.xlu0 %v647, 64
    %v650 = vpop.permute.xlu0 %649
    %s652 = scalar_lea.vmem [#allocation5], 40
    %653 = vst.msk [vmem:[%s652] sm:$0xff] %vm74, %v650
    %s654 = scalar_lea.vmem [#allocation3], 32
    %v655 = vld [vmem:[%s654] sm:$0xff]
    %v656 = vsel %vm74, %v650, 0
    %658 = vmatprep.subr.mxu0 0.0
    %659 = vmatpush1.msra.mxu0 %v340
    %660 = vmatprep.subr.mxu0 0.0
    %661 = vmatpush1.msra.mxu0 %v341
    %662 = vmatprep.subr.mxu0 0.0
    %663 = vmatpush1.msra.mxu0 %v342
    %664 = vmatprep.subr.mxu0 0.0
    %665 = vmatpush1.msra.mxu0 %v343
    %666 = vmatprep.subr.mxu0 0.0
    %667 = vmatpush1.msra.mxu0 0.0
    %668 = vmatprep.subr.mxu0 0.0
    %669 = vmatpush1.msra.mxu0 0.0
    %670 = vmatprep.subr.mxu0 0.0
    %671 = vmatpush1.msra.mxu0 0.0
    %672 = vmatprep.subr.mxu0 0.0
    %673 = vmatpush1.msra.mxu0 0.0
    %674 = vmatprep.subr.mxu0 0.0
    %675 = vmatpush1.msra.mxu0 0.0
    %676 = vmatprep.subr.mxu0 0.0
    %677 = vmatpush1.msra.mxu0 0.0
    %678 = vmatprep.subr.mxu0 0.0
    %679 = vmatpush1.msra.mxu0 0.0
    %680 = vmatprep.subr.mxu0 0.0
    %681 = vmatpush1.msra.mxu0 0.0
    %682 = vmatprep.subr.mxu0 0.0
    %683 = vmatpush1.msra.mxu0 0.0
    %684 = vmatprep.subr.mxu0 0.0
    %685 = vmatpush1.msra.mxu0 0.0
    %686 = vmatprep.subr.mxu0 0.0
    %687 = vmatpush1.msra.mxu0 0.0
    %688 = vmatprep.subr.mxu0 0.0
    %689 = vmatpush1.msra.mxu0 0.0
    %690 = vmatprep.subr.mxu0 0.0
    %691 = vmatpush1.msra.mxu0 0.0
    %692 = vmatprep.subr.mxu0 0.0
    %693 = vmatpush1.msra.mxu0 0.0
    %694 = vmatprep.subr.mxu0 0.0
    %695 = vmatpush1.msra.mxu0 0.0
    %696 = vmatprep.subr.mxu0 0.0
    %697 = vmatpush1.msra.mxu0 0.0
    %698 = vmatprep.subr.mxu0 0.0
    %699 = vmatpush1.msra.mxu0 0.0
    %700 = vmatprep.subr.mxu0 0.0
    %701 = vmatpush1.msra.mxu0 0.0
    %702 = vmatprep.subr.mxu0 0.0
    %703 = vmatpush1.msra.mxu0 0.0
    %704 = vmatprep.subr.mxu0 0.0
    %705 = vmatpush1.msra.mxu0 0.0
    %706 = vmatprep.subr.mxu0 0.0
    %707 = vmatpush1.msra.mxu0 0.0
    %708 = vmatprep.subr.mxu0 0.0
    %709 = vmatpush1.msra.mxu0 0.0
    %710 = vmatprep.subr.mxu0 0.0
    %711 = vmatpush1.msra.mxu0 0.0
    %712 = vmatprep.subr.mxu0 0.0
    %713 = vmatpush1.msra.mxu0 0.0
    %714 = vmatprep.subr.mxu0 0.0
    %715 = vmatpush1.msra.mxu0 0.0
    %716 = vmatprep.subr.mxu0 0.0
    %717 = vmatpush1.msra.mxu0 0.0
    %718 = vmatprep.subr.mxu0 0.0
    %719 = vmatpush1.msra.mxu0 0.0
    %720 = vmatprep.subr.mxu0 0.0
    %721 = vmatpush1.msra.mxu0 0.0
    %722 = vmatprep.mubr.f32.mxu0 0.0
    %723 = vmatmul.mubr.f32.gmra.mrb[0].mxu0 %v656
    %v724 = vpop.f32.mrb[0].mxu0
    %v725 = vadd.f32 0.0, %v724
    %v726 = vpop.f32.mrb[0].mxu0
    %727 = vdwg.mxu0
    %v728 = vadd.f32 %v655, %v725
    %v729 = vmul.f32 %v728, 0.5
    %v730 = vtanh.pop %v729
    %v731 = vadd.f32 %v730, 1.0
    %v732 = vmul.f32 %v731, 0.5
    %v733 = vtanh.pop %v728
    %v734 = vmul.f32 %v732, %v641
    %736 = vrot.lane.b32.xlu0 %v733, 32
    %v737 = vpop.permute.xlu0 %736
    %v739 = vmul.f32 %v732, %v737
    %741 = vrot.lane.b32.xlu0 %v739, 32
    %v742 = vpop.permute.xlu0 %741
    %v744 = vadd.f32 %v734, %v742
    %v745 = vtanh.pop %v744
    %747 = vrot.lane.b32.xlu0 %v745, 32
    %v748 = vpop.permute.xlu0 %747
    %v750 = vmul.f32 %v732, %v748
    %752 = vrot.lane.b32.xlu0 %v750, 64
    %v753 = vpop.permute.xlu0 %752
    %s755 = scalar_lea.vmem [#allocation5], 32
    %756 = vst.msk [vmem:[%s755] sm:$0xff] %vm74, %v753
    %s757 = scalar_lea.vmem [#allocation3], 24
    %v758 = vld [vmem:[%s757] sm:$0xff]
    %v759 = vsel %vm74, %v753, 0
    %761 = vmatprep.subr.mxu0 0.0
    %762 = vmatpush1.msra.mxu0 %v340
    %763 = vmatprep.subr.mxu0 0.0
    %764 = vmatpush1.msra.mxu0 %v341
    %765 = vmatprep.subr.mxu0 0.0
    %766 = vmatpush1.msra.mxu0 %v342
    %767 = vmatprep.subr.mxu0 0.0
    %768 = vmatpush1.msra.mxu0 %v343
    %769 = vmatprep.subr.mxu0 0.0
    %770 = vmatpush1.msra.mxu0 0.0
    %771 = vmatprep.subr.mxu0 0.0
    %772 = vmatpush1.msra.mxu0 0.0
    %773 = vmatprep.subr.mxu0 0.0
    %774 = vmatpush1.msra.mxu0 0.0
    %775 = vmatprep.subr.mxu0 0.0
    %776 = vmatpush1.msra.mxu0 0.0
    %777 = vmatprep.subr.mxu0 0.0
    %778 = vmatpush1.msra.mxu0 0.0
    %779 = vmatprep.subr.mxu0 0.0
    %780 = vmatpush1.msra.mxu0 0.0
    %781 = vmatprep.subr.mxu0 0.0
    %782 = vmatpush1.msra.mxu0 0.0
    %783 = vmatprep.subr.mxu0 0.0
    %784 = vmatpush1.msra.mxu0 0.0
    %785 = vmatprep.subr.mxu0 0.0
    %786 = vmatpush1.msra.mxu0 0.0
    %787 = vmatprep.subr.mxu0 0.0
    %788 = vmatpush1.msra.mxu0 0.0
    %789 = vmatprep.subr.mxu0 0.0
    %790 = vmatpush1.msra.mxu0 0.0
    %791 = vmatprep.subr.mxu0 0.0
    %792 = vmatpush1.msra.mxu0 0.0
    %793 = vmatprep.subr.mxu0 0.0
    %794 = vmatpush1.msra.mxu0 0.0
    %795 = vmatprep.subr.mxu0 0.0
    %796 = vmatpush1.msra.mxu0 0.0
    %797 = vmatprep.subr.mxu0 0.0
    %798 = vmatpush1.msra.mxu0 0.0
    %799 = vmatprep.subr.mxu0 0.0
    %800 = vmatpush1.msra.mxu0 0.0
    %801 = vmatprep.subr.mxu0 0.0
    %802 = vmatpush1.msra.mxu0 0.0
    %803 = vmatprep.subr.mxu0 0.0
    %804 = vmatpush1.msra.mxu0 0.0
    %805 = vmatprep.subr.mxu0 0.0
    %806 = vmatpush1.msra.mxu0 0.0
    %807 = vmatprep.subr.mxu0 0.0
    %808 = vmatpush1.msra.mxu0 0.0
    %809 = vmatprep.subr.mxu0 0.0
    %810 = vmatpush1.msra.mxu0 0.0
    %811 = vmatprep.subr.mxu0 0.0
    %812 = vmatpush1.msra.mxu0 0.0
    %813 = vmatprep.subr.mxu0 0.0
    %814 = vmatpush1.msra.mxu0 0.0
    %815 = vmatprep.subr.mxu0 0.0
    %816 = vmatpush1.msra.mxu0 0.0
    %817 = vmatprep.subr.mxu0 0.0
    %818 = vmatpush1.msra.mxu0 0.0
    %819 = vmatprep.subr.mxu0 0.0
    %820 = vmatpush1.msra.mxu0 0.0
    %821 = vmatprep.subr.mxu0 0.0
    %822 = vmatpush1.msra.mxu0 0.0
    %823 = vmatprep.subr.mxu0 0.0
    %824 = vmatpush1.msra.mxu0 0.0
    %825 = vmatprep.mubr.f32.mxu0 0.0
    %826 = vmatmul.mubr.f32.gmra.mrb[0].mxu0 %v759
    %v827 = vpop.f32.mrb[0].mxu0
    %v828 = vadd.f32 0.0, %v827
    %v829 = vpop.f32.mrb[0].mxu0
    %830 = vdwg.mxu0
    %v831 = vadd.f32 %v758, %v828
    %v832 = vmul.f32 %v831, 0.5
    %v833 = vtanh.pop %v832
    %v834 = vadd.f32 %v833, 1.0
    %v835 = vmul.f32 %v834, 0.5
    %v836 = vtanh.pop %v831
    %v837 = vmul.f32 %v835, %v744
    %839 = vrot.lane.b32.xlu0 %v836, 32
    %v840 = vpop.permute.xlu0 %839
    %v842 = vmul.f32 %v835, %v840
    %844 = vrot.lane.b32.xlu0 %v842, 32
    %v845 = vpop.permute.xlu0 %844
    %v847 = vadd.f32 %v837, %v845
    %v848 = vtanh.pop %v847
    %850 = vrot.lane.b32.xlu0 %v848, 32
    %v851 = vpop.permute.xlu0 %850
    %v853 = vmul.f32 %v835, %v851
    %855 = vrot.lane.b32.xlu0 %v853, 64
    %v856 = vpop.permute.xlu0 %855
    %s858 = scalar_lea.vmem [#allocation5], 24
    %859 = vst.msk [vmem:[%s858] sm:$0xff] %vm74, %v856
    %s860 = scalar_lea.vmem [#allocation3], 16
    %v861 = vld [vmem:[%s860] sm:$0xff]
    %v862 = vsel %vm74, %v856, 0
    %864 = vmatprep.subr.mxu0 0.0
    %865 = vmatpush1.msra.mxu0 %v340
    %866 = vmatprep.subr.mxu0 0.0
    %867 = vmatpush1.msra.mxu0 %v341
    %868 = vmatprep.subr.mxu0 0.0
    %869 = vmatpush1.msra.mxu0 %v342
    %870 = vmatprep.subr.mxu0 0.0
    %871 = vmatpush1.msra.mxu0 %v343
    %872 = vmatprep.subr.mxu0 0.0
    %873 = vmatpush1.msra.mxu0 0.0
    %874 = vmatprep.subr.mxu0 0.0
    %875 = vmatpush1.msra.mxu0 0.0
    %876 = vmatprep.subr.mxu0 0.0
    %877 = vmatpush1.msra.mxu0 0.0
    %878 = vmatprep.subr.mxu0 0.0
    %879 = vmatpush1.msra.mxu0 0.0
    %880 = vmatprep.subr.mxu0 0.0
    %881 = vmatpush1.msra.mxu0 0.0
    %882 = vmatprep.subr.mxu0 0.0
    %883 = vmatpush1.msra.mxu0 0.0
    %884 = vmatprep.subr.mxu0 0.0
    %885 = vmatpush1.msra.mxu0 0.0
    %886 = vmatprep.subr.mxu0 0.0
    %887 = vmatpush1.msra.mxu0 0.0
    %888 = vmatprep.subr.mxu0 0.0
    %889 = vmatpush1.msra.mxu0 0.0
    %890 = vmatprep.subr.mxu0 0.0
    %891 = vmatpush1.msra.mxu0 0.0
    %892 = vmatprep.subr.mxu0 0.0
    %893 = vmatpush1.msra.mxu0 0.0
    %894 = vmatprep.subr.mxu0 0.0
    %895 = vmatpush1.msra.mxu0 0.0
    %896 = vmatprep.subr.mxu0 0.0
    %897 = vmatpush1.msra.mxu0 0.0
    %898 = vmatprep.subr.mxu0 0.0
    %899 = vmatpush1.msra.mxu0 0.0
    %900 = vmatprep.subr.mxu0 0.0
    %901 = vmatpush1.msra.mxu0 0.0
    %902 = vmatprep.subr.mxu0 0.0
    %903 = vmatpush1.msra.mxu0 0.0
    %904 = vmatprep.subr.mxu0 0.0
    %905 = vmatpush1.msra.mxu0 0.0
    %906 = vmatprep.subr.mxu0 0.0
    %907 = vmatpush1.msra.mxu0 0.0
    %908 = vmatprep.subr.mxu0 0.0
    %909 = vmatpush1.msra.mxu0 0.0
    %910 = vmatprep.subr.mxu0 0.0
    %911 = vmatpush1.msra.mxu0 0.0
    %912 = vmatprep.subr.mxu0 0.0
    %913 = vmatpush1.msra.mxu0 0.0
    %914 = vmatprep.subr.mxu0 0.0
    %915 = vmatpush1.msra.mxu0 0.0
    %916 = vmatprep.subr.mxu0 0.0
    %917 = vmatpush1.msra.mxu0 0.0
    %918 = vmatprep.subr.mxu0 0.0
    %919 = vmatpush1.msra.mxu0 0.0
    %920 = vmatprep.subr.mxu0 0.0
    %921 = vmatpush1.msra.mxu0 0.0
    %922 = vmatprep.subr.mxu0 0.0
    %923 = vmatpush1.msra.mxu0 0.0
    %924 = vmatprep.subr.mxu0 0.0
    %925 = vmatpush1.msra.mxu0 0.0
    %926 = vmatprep.subr.mxu0 0.0
    %927 = vmatpush1.msra.mxu0 0.0
    %928 = vmatprep.mubr.f32.mxu0 0.0
    %929 = vmatmul.mubr.f32.gmra.mrb[0].mxu0 %v862
    %v930 = vpop.f32.mrb[0].mxu0
    %v931 = vadd.f32 0.0, %v930
    %v932 = vpop.f32.mrb[0].mxu0
    %933 = vdwg.mxu0
    %v934 = vadd.f32 %v861, %v931
    %v935 = vmul.f32 %v934, 0.5
    %v936 = vtanh.pop %v935
    %v937 = vadd.f32 %v936, 1.0
    %v938 = vmul.f32 %v937, 0.5
    %v939 = vtanh.pop %v934
    %v940 = vmul.f32 %v938, %v847
    %942 = vrot.lane.b32.xlu0 %v939, 32
    %v943 = vpop.permute.xlu0 %942
    %v945 = vmul.f32 %v938, %v943
    %947 = vrot.lane.b32.xlu0 %v945, 32
    %v948 = vpop.permute.xlu0 %947
    %v950 = vadd.f32 %v940, %v948
    %v951 = vtanh.pop %v950
    %953 = vrot.lane.b32.xlu0 %v951, 32
    %v954 = vpop.permute.xlu0 %953
    %v956 = vmul.f32 %v938, %v954
    %958 = vrot.lane.b32.xlu0 %v956, 64
    %v959 = vpop.permute.xlu0 %958
    %s961 = scalar_lea.vmem [#allocation5], 16
    %962 = vst.msk [vmem:[%s961] sm:$0xff] %vm74, %v959
    %s963 = scalar_lea.vmem [#allocation3], 8
    %v964 = vld [vmem:[%s963] sm:$0xff]
    %v965 = vsel %vm74, %v959, 0
    %967 = vmatprep.subr.mxu0 0.0
    %968 = vmatpush1.msra.mxu0 %v340
    %969 = vmatprep.subr.mxu0 0.0
    %970 = vmatpush1.msra.mxu0 %v341
    %971 = vmatprep.subr.mxu0 0.0
    %972 = vmatpush1.msra.mxu0 %v342
    %973 = vmatprep.subr.mxu0 0.0
    %974 = vmatpush1.msra.mxu0 %v343
    %975 = vmatprep.subr.mxu0 0.0
    %976 = vmatpush1.msra.mxu0 0.0
    %977 = vmatprep.subr.mxu0 0.0
    %978 = vmatpush1.msra.mxu0 0.0
    %979 = vmatprep.subr.mxu0 0.0
    %980 = vmatpush1.msra.mxu0 0.0
    %981 = vmatprep.subr.mxu0 0.0
    %982 = vmatpush1.msra.mxu0 0.0
    %983 = vmatprep.subr.mxu0 0.0
    %984 = vmatpush1.msra.mxu0 0.0
    %985 = vmatprep.subr.mxu0 0.0
    %986 = vmatpush1.msra.mxu0 0.0
    %987 = vmatprep.subr.mxu0 0.0
    %988 = vmatpush1.msra.mxu0 0.0
    %989 = vmatprep.subr.mxu0 0.0
    %990 = vmatpush1.msra.mxu0 0.0
    %991 = vmatprep.subr.mxu0 0.0
    %992 = vmatpush1.msra.mxu0 0.0
    %993 = vmatprep.subr.mxu0 0.0
    %994 = vmatpush1.msra.mxu0 0.0
    %995 = vmatprep.subr.mxu0 0.0
    %996 = vmatpush1.msra.mxu0 0.0
    %997 = vmatprep.subr.mxu0 0.0
    %998 = vmatpush1.msra.mxu0 0.0
    %999 = vmatprep.subr.mxu0 0.0
    %1000 = vmatpush1.msra.mxu0 0.0
    %1001 = vmatprep.subr.mxu0 0.0
    %1002 = vmatpush1.msra.mxu0 0.0
    %1003 = vmatprep.subr.mxu0 0.0
    %1004 = vmatpush1.msra.mxu0 0.0
    %1005 = vmatprep.subr.mxu0 0.0
    %1006 = vmatpush1.msra.mxu0 0.0
    %1007 = vmatprep.subr.mxu0 0.0
    %1008 = vmatpush1.msra.mxu0 0.0
    %1009 = vmatprep.subr.mxu0 0.0
    %1010 = vmatpush1.msra.mxu0 0.0
    %1011 = vmatprep.subr.mxu0 0.0
    %1012 = vmatpush1.msra.mxu0 0.0
    %1013 = vmatprep.subr.mxu0 0.0
    %1014 = vmatpush1.msra.mxu0 0.0
    %1015 = vmatprep.subr.mxu0 0.0
    %1016 = vmatpush1.msra.mxu0 0.0
    %1017 = vmatprep.subr.mxu0 0.0
    %1018 = vmatpush1.msra.mxu0 0.0
    %1019 = vmatprep.subr.mxu0 0.0
    %1020 = vmatpush1.msra.mxu0 0.0
    %1021 = vmatprep.subr.mxu0 0.0
    %1022 = vmatpush1.msra.mxu0 0.0
    %1023 = vmatprep.subr.mxu0 0.0
    %1024 = vmatpush1.msra.mxu0 0.0
    %1025 = vmatprep.subr.mxu0 0.0
    %1026 = vmatpush1.msra.mxu0 0.0
    %1027 = vmatprep.subr.mxu0 0.0
    %1028 = vmatpush1.msra.mxu0 0.0
    %1029 = vmatprep.subr.mxu0 0.0
    %1030 = vmatpush1.msra.mxu0 0.0
    %1031 = vmatprep.mubr.f32.mxu0 0.0
    %1032 = vmatmul.mubr.f32.gmra.mrb[0].mxu0 %v965
    %v1033 = vpop.f32.mrb[0].mxu0
    %v1034 = vadd.f32 0.0, %v1033
    %v1035 = vpop.f32.mrb[0].mxu0
    %1036 = vdwg.mxu0
    %v1037 = vadd.f32 %v964, %v1034
    %v1038 = vmul.f32 %v1037, 0.5
    %v1039 = vtanh.pop %v1038
    %v1040 = vadd.f32 %v1039, 1.0
    %v1041 = vmul.f32 %v1040, 0.5
    %v1042 = vtanh.pop %v1037
    %v1043 = vmul.f32 %v1041, %v950
    %1045 = vrot.lane.b32.xlu0 %v1042, 32
    %v1046 = vpop.permute.xlu0 %1045
    %v1048 = vmul.f32 %v1041, %v1046
    %1050 = vrot.lane.b32.xlu0 %v1048, 32
    %v1051 = vpop.permute.xlu0 %1050
    %v1053 = vadd.f32 %v1043, %v1051
    %v1054 = vtanh.pop %v1053
    %1056 = vrot.lane.b32.xlu0 %v1054, 32
    %v1057 = vpop.permute.xlu0 %1056
    %v1059 = vmul.f32 %v1041, %v1057
    %1061 = vrot.lane.b32.xlu0 %v1059, 64
    %v1062 = vpop.permute.xlu0 %1061
    %s1064 = scalar_lea.vmem [#allocation5], 8
    %1065 = vst.msk [vmem:[%s1064] sm:$0xff] %vm74, %v1062
    %v1066 = vld [vmem:[#allocation3] sm:$0xff]
    %v1067 = vsel %vm74, %v1062, 0
    %1069 = vmatprep.subr.mxu0 0.0
    %1070 = vmatpush1.msra.mxu0 %v340
    %1071 = vmatprep.subr.mxu0 0.0
    %1072 = vmatpush1.msra.mxu0 %v341
    %1073 = vmatprep.subr.mxu0 0.0
    %1074 = vmatpush1.msra.mxu0 %v342
    %1075 = vmatprep.subr.mxu0 0.0
    %1076 = vmatpush1.msra.mxu0 %v343
    %1077 = vmatprep.subr.mxu0 0.0
    %1078 = vmatpush1.msra.mxu0 0.0
    %1079 = vmatprep.subr.mxu0 0.0
    %1080 = vmatpush1.msra.mxu0 0.0
    %1081 = vmatprep.subr.mxu0 0.0
    %1082 = vmatpush1.msra.mxu0 0.0
    %1083 = vmatprep.subr.mxu0 0.0
    %1084 = vmatpush1.msra.mxu0 0.0
    %1085 = vmatprep.subr.mxu0 0.0
    %1086 = vmatpush1.msra.mxu0 0.0
    %1087 = vmatprep.subr.mxu0 0.0
    %1088 = vmatpush1.msra.mxu0 0.0
    %1089 = vmatprep.subr.mxu0 0.0
    %1090 = vmatpush1.msra.mxu0 0.0
    %1091 = vmatprep.subr.mxu0 0.0
    %1092 = vmatpush1.msra.mxu0 0.0
    %1093 = vmatprep.subr.mxu0 0.0
    %1094 = vmatpush1.msra.mxu0 0.0
    %1095 = vmatprep.subr.mxu0 0.0
    %1096 = vmatpush1.msra.mxu0 0.0
    %1097 = vmatprep.subr.mxu0 0.0
    %1098 = vmatpush1.msra.mxu0 0.0
    %1099 = vmatprep.subr.mxu0 0.0
    %1100 = vmatpush1.msra.mxu0 0.0
    %1101 = vmatprep.subr.mxu0 0.0
    %1102 = vmatpush1.msra.mxu0 0.0
    %1103 = vmatprep.subr.mxu0 0.0
    %1104 = vmatpush1.msra.mxu0 0.0
    %1105 = vmatprep.subr.mxu0 0.0
    %1106 = vmatpush1.msra.mxu0 0.0
    %1107 = vmatprep.subr.mxu0 0.0
    %1108 = vmatpush1.msra.mxu0 0.0
    %1109 = vmatprep.subr.mxu0 0.0
    %1110 = vmatpush1.msra.mxu0 0.0
    %1111 = vmatprep.subr.mxu0 0.0
    %1112 = vmatpush1.msra.mxu0 0.0
    %1113 = vmatprep.subr.mxu0 0.0
    %1114 = vmatpush1.msra.mxu0 0.0
    %1115 = vmatprep.subr.mxu0 0.0
    %1116 = vmatpush1.msra.mxu0 0.0
    %1117 = vmatprep.subr.mxu0 0.0
    %1118 = vmatpush1.msra.mxu0 0.0
    %1119 = vmatprep.subr.mxu0 0.0
    %1120 = vmatpush1.msra.mxu0 0.0
    %1121 = vmatprep.subr.mxu0 0.0
    %1122 = vmatpush1.msra.mxu0 0.0
    %1123 = vmatprep.subr.mxu0 0.0
    %1124 = vmatpush1.msra.mxu0 0.0
    %1125 = vmatprep.subr.mxu0 0.0
    %1126 = vmatpush1.msra.mxu0 0.0
    %1127 = vmatprep.subr.mxu0 0.0
    %1128 = vmatpush1.msra.mxu0 0.0
    %1129 = vmatprep.subr.mxu0 0.0
    %1130 = vmatpush1.msra.mxu0 0.0
    %1131 = vmatprep.subr.mxu0 0.0
    %1132 = vmatpush1.msra.mxu0 0.0
    %1133 = vmatprep.mubr.f32.mxu0 0.0
    %1134 = vmatmul.mubr.f32.gmra.mrb[0].mxu0 %v1067
    %v1135 = vpop.f32.mrb[0].mxu0
    %v1136 = vadd.f32 0.0, %v1135
    %v1137 = vpop.f32.mrb[0].mxu0
    %1138 = vdwg.mxu0
    %v1139 = vadd.f32 %v1066, %v1136
    %v1140 = vmul.f32 %v1139, 0.5
    %v1141 = vtanh.pop %v1140
    %v1142 = vadd.f32 %v1141, 1.0
    %v1143 = vmul.f32 %v1142, 0.5
    %v1144 = vtanh.pop %v1139
    %v1145 = vmul.f32 %v1143, %v1053
    %1147 = vrot.lane.b32.xlu0 %v1144, 32
    %v1148 = vpop.permute.xlu0 %1147
    %v1150 = vmul.f32 %v1143, %v1148
    %1152 = vrot.lane.b32.xlu0 %v1150, 32
    %v1153 = vpop.permute.xlu0 %1152
    %v1155 = vadd.f32 %v1145, %v1153
    %v1156 = vtanh.pop %v1155
    %1158 = vrot.lane.b32.xlu0 %v1156, 32
    %v1159 = vpop.permute.xlu0 %1158
    %v1161 = vmul.f32 %v1143, %v1159
    %1163 = vrot.lane.b32.xlu0 %v1161, 64
    %v1164 = vpop.permute.xlu0 %1163
    %1166 = vst.msk [vmem:[#allocation5] sm:$0xff] %vm74, %v1164
    %v1167 = vld [vmem:[#allocation2] sm:$0xff]
    %1168 = vmatprep.subr.mxu0 0.0
    %1169 = vmatpush1.msra.mxu0 %v336
    %1170 = vmatprep.subr.mxu0 0.0
    %1171 = vmatpush1.msra.mxu0 %v337
    %1172 = vmatprep.subr.mxu0 0.0
    %1173 = vmatpush1.msra.mxu0 %v338
    %1174 = vmatprep.subr.mxu0 0.0
    %1175 = vmatpush1.msra.mxu0 %v339
    %1176 = vmatprep.subr.mxu0 0.0
    %1177 = vmatpush1.msra.mxu0 0.0
    %1178 = vmatprep.subr.mxu0 0.0
    %1179 = vmatpush1.msra.mxu0 0.0
    %1180 = vmatprep.subr.mxu0 0.0
    %1181 = vmatpush1.msra.mxu0 0.0
    %1182 = vmatprep.subr.mxu0 0.0
    %1183 = vmatpush1.msra.mxu0 0.0
    %1184 = vmatprep.subr.mxu0 0.0
    %1185 = vmatpush1.msra.mxu0 0.0
    %1186 = vmatprep.subr.mxu0 0.0
    %1187 = vmatpush1.msra.mxu0 0.0
    %1188 = vmatprep.subr.mxu0 0.0
    %1189 = vmatpush1.msra.mxu0 0.0
    %1190 = vmatprep.subr.mxu0 0.0
    %1191 = vmatpush1.msra.mxu0 0.0
    %1192 = vmatprep.subr.mxu0 0.0
    %1193 = vmatpush1.msra.mxu0 0.0
    %1194 = vmatprep.subr.mxu0 0.0
    %1195 = vmatpush1.msra.mxu0 0.0
    %1196 = vmatprep.subr.mxu0 0.0
    %1197 = vmatpush1.msra.mxu0 0.0
    %1198 = vmatprep.subr.mxu0 0.0
    %1199 = vmatpush1.msra.mxu0 0.0
    %1200 = vmatprep.subr.mxu0 0.0
    %1201 = vmatpush1.msra.mxu0 0.0
    %1202 = vmatprep.subr.mxu0 0.0
    %1203 = vmatpush1.msra.mxu0 0.0
    %1204 = vmatprep.subr.mxu0 0.0
    %1205 = vmatpush1.msra.mxu0 0.0
    %1206 = vmatprep.subr.mxu0 0.0
    %1207 = vmatpush1.msra.mxu0 0.0
    %1208 = vmatprep.subr.mxu0 0.0
    %1209 = vmatpush1.msra.mxu0 0.0
    %1210 = vmatprep.subr.mxu0 0.0
    %1211 = vmatpush1.msra.mxu0 0.0
    %1212 = vmatprep.subr.mxu0 0.0
    %1213 = vmatpush1.msra.mxu0 0.0
    %1214 = vmatprep.subr.mxu0 0.0
    %1215 = vmatpush1.msra.mxu0 0.0
    %1216 = vmatprep.subr.mxu0 0.0
    %1217 = vmatpush1.msra.mxu0 0.0
    %1218 = vmatprep.subr.mxu0 0.0
    %1219 = vmatpush1.msra.mxu0 0.0
    %1220 = vmatprep.subr.mxu0 0.0
    %1221 = vmatpush1.msra.mxu0 0.0
    %1222 = vmatprep.subr.mxu0 0.0
    %1223 = vmatpush1.msra.mxu0 0.0
    %1224 = vmatprep.subr.mxu0 0.0
    %1225 = vmatpush1.msra.mxu0 0.0
    %1226 = vmatprep.subr.mxu0 0.0
    %1227 = vmatpush1.msra.mxu0 0.0
    %1228 = vmatprep.subr.mxu0 0.0
    %1229 = vmatpush1.msra.mxu0 0.0
    %1230 = vmatprep.subr.mxu0 0.0
    %1231 = vmatpush1.msra.mxu0 0.0
    %1232 = vmatprep.mubr.f32.mxu0 0.0
    %1233 = vmatmul.mubr.f32.gmra.mrb[0].mxu0 %v347
    %v1234 = vpop.f32.mrb[0].mxu0
    %v1235 = vadd.f32 0.0, %v1234
    %v1236 = vpop.f32.mrb[0].mxu0
    %1237 = vdwg.mxu0
    %v1238 = vadd.f32 %v1167, %v1235
    %v1239 = vmul.f32 %v1238, 0.5
    %v1240 = vtanh.pop %v1239
    %v1241 = vadd.f32 %v1240, 1.0
    %v1242 = vmul.f32 %v1241, 0.5
    %v1243 = vtanh.pop %v1238
    %v1244 = vmul.f32 %v1242, 0.0
    %1246 = vrot.lane.b32.xlu0 %v1243, 32
    %v1247 = vpop.permute.xlu0 %1246
    %v1249 = vmul.f32 %v1242, %v1247
    %1251 = vrot.lane.b32.xlu0 %v1249, 32
    %v1252 = vpop.permute.xlu0 %1251
    %v1254 = vadd.f32 %v1244, %v1252
    %v1255 = vtanh.pop %v1254
    %1257 = vrot.lane.b32.xlu0 %v1255, 32
    %v1258 = vpop.permute.xlu0 %1257
    %v1260 = vmul.f32 %v1242, %v1258
    %1262 = vrot.lane.b32.xlu0 %v1260, 64
    %v1263 = vpop.permute.xlu0 %1262
    %1265 = vst.msk [vmem:[#allocation4] sm:$0xff] %vm74, %v1263
    %s1266 = scalar_lea.vmem [#allocation2], 8
    %v1267 = vld [vmem:[%s1266] sm:$0xff]
    %v1268 = vsel %vm74, %v1263, 0
    %1270 = vmatprep.subr.mxu0 0.0
    %1271 = vmatpush1.msra.mxu0 %v336
    %1272 = vmatprep.subr.mxu0 0.0
    %1273 = vmatpush1.msra.mxu0 %v337
    %1274 = vmatprep.subr.mxu0 0.0
    %1275 = vmatpush1.msra.mxu0 %v338
    %1276 = vmatprep.subr.mxu0 0.0
    %1277 = vmatpush1.msra.mxu0 %v339
    %1278 = vmatprep.subr.mxu0 0.0
    %1279 = vmatpush1.msra.mxu0 0.0
    %1280 = vmatprep.subr.mxu0 0.0
    %1281 = vmatpush1.msra.mxu0 0.0
    %1282 = vmatprep.subr.mxu0 0.0
    %1283 = vmatpush1.msra.mxu0 0.0
    %1284 = vmatprep.subr.mxu0 0.0
    %1285 = vmatpush1.msra.mxu0 0.0
    %1286 = vmatprep.subr.mxu0 0.0
    %1287 = vmatpush1.msra.mxu0 0.0
    %1288 = vmatprep.subr.mxu0 0.0
    %1289 = vmatpush1.msra.mxu0 0.0
    %1290 = vmatprep.subr.mxu0 0.0
    %1291 = vmatpush1.msra.mxu0 0.0
    %1292 = vmatprep.subr.mxu0 0.0
    %1293 = vmatpush1.msra.mxu0 0.0
    %1294 = vmatprep.subr.mxu0 0.0
    %1295 = vmatpush1.msra.mxu0 0.0
    %1296 = vmatprep.subr.mxu0 0.0
    %1297 = vmatpush1.msra.mxu0 0.0
    %1298 = vmatprep.subr.mxu0 0.0
    %1299 = vmatpush1.msra.mxu0 0.0
    %1300 = vmatprep.subr.mxu0 0.0
    %1301 = vmatpush1.msra.mxu0 0.0
    %1302 = vmatprep.subr.mxu0 0.0
    %1303 = vmatpush1.msra.mxu0 0.0
    %1304 = vmatprep.subr.mxu0 0.0
    %1305 = vmatpush1.msra.mxu0 0.0
    %1306 = vmatprep.subr.mxu0 0.0
    %1307 = vmatpush1.msra.mxu0 0.0
    %1308 = vmatprep.subr.mxu0 0.0
    %1309 = vmatpush1.msra.mxu0 0.0
    %1310 = vmatprep.subr.mxu0 0.0
    %1311 = vmatpush1.msra.mxu0 0.0
    %1312 = vmatprep.subr.mxu0 0.0
    %1313 = vmatpush1.msra.mxu0 0.0
    %1314 = vmatprep.subr.mxu0 0.0
    %1315 = vmatpush1.msra.mxu0 0.0
    %1316 = vmatprep.subr.mxu0 0.0
    %1317 = vmatpush1.msra.mxu0 0.0
    %1318 = vmatprep.subr.mxu0 0.0
    %1319 = vmatpush1.msra.mxu0 0.0
    %1320 = vmatprep.subr.mxu0 0.0
    %1321 = vmatpush1.msra.mxu0 0.0
    %1322 = vmatprep.subr.mxu0 0.0
    %1323 = vmatpush1.msra.mxu0 0.0
    %1324 = vmatprep.subr.mxu0 0.0
    %1325 = vmatpush1.msra.mxu0 0.0
    %1326 = vmatprep.subr.mxu0 0.0
    %1327 = vmatpush1.msra.mxu0 0.0
    %1328 = vmatprep.subr.mxu0 0.0
    %1329 = vmatpush1.msra.mxu0 0.0
    %1330 = vmatprep.subr.mxu0 0.0
    %1331 = vmatpush1.msra.mxu0 0.0
    %1332 = vmatprep.subr.mxu0 0.0
    %1333 = vmatpush1.msra.mxu0 0.0
    %1334 = vmatprep.mubr.f32.mxu0 0.0
    %1335 = vmatmul.mubr.f32.gmra.mrb[0].mxu0 %v1268
    %v1336 = vpop.f32.mrb[0].mxu0
    %v1337 = vadd.f32 0.0, %v1336
    %v1338 = vpop.f32.mrb[0].mxu0
    %1339 = vdwg.mxu0
    %v1340 = vadd.f32 %v1267, %v1337
    %v1341 = vmul.f32 %v1340, 0.5
    %v1342 = vtanh.pop %v1341
    %v1343 = vadd.f32 %v1342, 1.0
    %v1344 = vmul.f32 %v1343, 0.5
    %v1345 = vtanh.pop %v1340
    %v1346 = vmul.f32 %v1344, %v1254
    %1348 = vrot.lane.b32.xlu0 %v1345, 32
    %v1349 = vpop.permute.xlu0 %1348
    %v1351 = vmul.f32 %v1344, %v1349
    %1353 = vrot.lane.b32.xlu0 %v1351, 32
    %v1354 = vpop.permute.xlu0 %1353
    %v1356 = vadd.f32 %v1346, %v1354
    %v1357 = vtanh.pop %v1356
    %1359 = vrot.lane.b32.xlu0 %v1357, 32
    %v1360 = vpop.permute.xlu0 %1359
    %v1362 = vmul.f32 %v1344, %v1360
    %1364 = vrot.lane.b32.xlu0 %v1362, 64
    %v1365 = vpop.permute.xlu0 %1364
    %s1367 = scalar_lea.vmem [#allocation4], 8
    %1368 = vst.msk [vmem:[%s1367] sm:$0xff] %vm74, %v1365
    %s1369 = scalar_lea.vmem [#allocation2], 16
    %v1370 = vld [vmem:[%s1369] sm:$0xff]
    %v1371 = vsel %vm74, %v1365, 0
    %1373 = vmatprep.subr.mxu0 0.0
    %1374 = vmatpush1.msra.mxu0 %v336
    %1375 = vmatprep.subr.mxu0 0.0
    %1376 = vmatpush1.msra.mxu0 %v337
    %1377 = vmatprep.subr.mxu0 0.0
    %1378 = vmatpush1.msra.mxu0 %v338
    %1379 = vmatprep.subr.mxu0 0.0
    %1380 = vmatpush1.msra.mxu0 %v339
    %1381 = vmatprep.subr.mxu0 0.0
    %1382 = vmatpush1.msra.mxu0 0.0
    %1383 = vmatprep.subr.mxu0 0.0
    %1384 = vmatpush1.msra.mxu0 0.0
    %1385 = vmatprep.subr.mxu0 0.0
    %1386 = vmatpush1.msra.mxu0 0.0
    %1387 = vmatprep.subr.mxu0 0.0
    %1388 = vmatpush1.msra.mxu0 0.0
    %1389 = vmatprep.subr.mxu0 0.0
    %1390 = vmatpush1.msra.mxu0 0.0
    %1391 = vmatprep.subr.mxu0 0.0
    %1392 = vmatpush1.msra.mxu0 0.0
    %1393 = vmatprep.subr.mxu0 0.0
    %1394 = vmatpush1.msra.mxu0 0.0
    %1395 = vmatprep.subr.mxu0 0.0
    %1396 = vmatpush1.msra.mxu0 0.0
    %1397 = vmatprep.subr.mxu0 0.0
    %1398 = vmatpush1.msra.mxu0 0.0
    %1399 = vmatprep.subr.mxu0 0.0
    %1400 = vmatpush1.msra.mxu0 0.0
    %1401 = vmatprep.subr.mxu0 0.0
    %1402 = vmatpush1.msra.mxu0 0.0
    %1403 = vmatprep.subr.mxu0 0.0
    %1404 = vmatpush1.msra.mxu0 0.0
    %1405 = vmatprep.subr.mxu0 0.0
    %1406 = vmatpush1.msra.mxu0 0.0
    %1407 = vmatprep.subr.mxu0 0.0
    %1408 = vmatpush1.msra.mxu0 0.0
    %1409 = vmatprep.subr.mxu0 0.0
    %1410 = vmatpush1.msra.mxu0 0.0
    %1411 = vmatprep.subr.mxu0 0.0
    %1412 = vmatpush1.msra.mxu0 0.0
    %1413 = vmatprep.subr.mxu0 0.0
    %1414 = vmatpush1.msra.mxu0 0.0
    %1415 = vmatprep.subr.mxu0 0.0
    %1416 = vmatpush1.msra.mxu0 0.0
    %1417 = vmatprep.subr.mxu0 0.0
    %1418 = vmatpush1.msra.mxu0 0.0
    %1419 = vmatprep.subr.mxu0 0.0
    %1420 = vmatpush1.msra.mxu0 0.0
    %1421 = vmatprep.subr.mxu0 0.0
    %1422 = vmatpush1.msra.mxu0 0.0
    %1423 = vmatprep.subr.mxu0 0.0
    %1424 = vmatpush1.msra.mxu0 0.0
    %1425 = vmatprep.subr.mxu0 0.0
    %1426 = vmatpush1.msra.mxu0 0.0
    %1427 = vmatprep.subr.mxu0 0.0
    %1428 = vmatpush1.msra.mxu0 0.0
    %1429 = vmatprep.subr.mxu0 0.0
    %1430 = vmatpush1.msra.mxu0 0.0
    %1431 = vmatprep.subr.mxu0 0.0
    %1432 = vmatpush1.msra.mxu0 0.0
    %1433 = vmatprep.subr.mxu0 0.0
    %1434 = vmatpush1.msra.mxu0 0.0
    %1435 = vmatprep.subr.mxu0 0.0
    %1436 = vmatpush1.msra.mxu0 0.0
    %1437 = vmatprep.mubr.f32.mxu0 0.0
    %1438 = vmatmul.mubr.f32.gmra.mrb[0].mxu0 %v1371
    %v1439 = vpop.f32.mrb[0].mxu0
    %v1440 = vadd.f32 0.0, %v1439
    %v1441 = vpop.f32.mrb[0].mxu0
    %1442 = vdwg.mxu0
    %v1443 = vadd.f32 %v1370, %v1440
    %v1444 = vmul.f32 %v1443, 0.5
    %v1445 = vtanh.pop %v1444
    %v1446 = vadd.f32 %v1445, 1.0
    %v1447 = vmul.f32 %v1446, 0.5
    %v1448 = vtanh.pop %v1443
    %v1449 = vmul.f32 %v1447, %v1356
    %1451 = vrot.lane.b32.xlu0 %v1448, 32
    %v1452 = vpop.permute.xlu0 %1451
    %v1454 = vmul.f32 %v1447, %v1452
    %1456 = vrot.lane.b32.xlu0 %v1454, 32
    %v1457 = vpop.permute.xlu0 %1456
    %v1459 = vadd.f32 %v1449, %v1457
    %v1460 = vtanh.pop %v1459
    %1462 = vrot.lane.b32.xlu0 %v1460, 32
    %v1463 = vpop.permute.xlu0 %1462
    %v1465 = vmul.f32 %v1447, %v1463
    %1467 = vrot.lane.b32.xlu0 %v1465, 64
    %v1468 = vpop.permute.xlu0 %1467
    %s1470 = scalar_lea.vmem [#allocation4], 16
    %1471 = vst.msk [vmem:[%s1470] sm:$0xff] %vm74, %v1468
    %s1472 = scalar_lea.vmem [#allocation2], 24
    %v1473 = vld [vmem:[%s1472] sm:$0xff]
    %v1474 = vsel %vm74, %v1468, 0
    %1476 = vmatprep.subr.mxu0 0.0
    %1477 = vmatpush1.msra.mxu0 %v336
    %1478 = vmatprep.subr.mxu0 0.0
    %1479 = vmatpush1.msra.mxu0 %v337
    %1480 = vmatprep.subr.mxu0 0.0
    %1481 = vmatpush1.msra.mxu0 %v338
    %1482 = vmatprep.subr.mxu0 0.0
    %1483 = vmatpush1.msra.mxu0 %v339
    %1484 = vmatprep.subr.mxu0 0.0
    %1485 = vmatpush1.msra.mxu0 0.0
    %1486 = vmatprep.subr.mxu0 0.0
    %1487 = vmatpush1.msra.mxu0 0.0
    %1488 = vmatprep.subr.mxu0 0.0
    %1489 = vmatpush1.msra.mxu0 0.0
    %1490 = vmatprep.subr.mxu0 0.0
    %1491 = vmatpush1.msra.mxu0 0.0
    %1492 = vmatprep.subr.mxu0 0.0
    %1493 = vmatpush1.msra.mxu0 0.0
    %1494 = vmatprep.subr.mxu0 0.0
    %1495 = vmatpush1.msra.mxu0 0.0
    %1496 = vmatprep.subr.mxu0 0.0
    %1497 = vmatpush1.msra.mxu0 0.0
    %1498 = vmatprep.subr.mxu0 0.0
    %1499 = vmatpush1.msra.mxu0 0.0
    %1500 = vmatprep.subr.mxu0 0.0
    %1501 = vmatpush1.msra.mxu0 0.0
    %1502 = vmatprep.subr.mxu0 0.0
    %1503 = vmatpush1.msra.mxu0 0.0
    %1504 = vmatprep.subr.mxu0 0.0
    %1505 = vmatpush1.msra.mxu0 0.0
    %1506 = vmatprep.subr.mxu0 0.0
    %1507 = vmatpush1.msra.mxu0 0.0
    %1508 = vmatprep.subr.mxu0 0.0
    %1509 = vmatpush1.msra.mxu0 0.0
    %1510 = vmatprep.subr.mxu0 0.0
    %1511 = vmatpush1.msra.mxu0 0.0
    %1512 = vmatprep.subr.mxu0 0.0
    %1513 = vmatpush1.msra.mxu0 0.0
    %1514 = vmatprep.subr.mxu0 0.0
    %1515 = vmatpush1.msra.mxu0 0.0
    %1516 = vmatprep.subr.mxu0 0.0
    %1517 = vmatpush1.msra.mxu0 0.0
    %1518 = vmatprep.subr.mxu0 0.0
    %1519 = vmatpush1.msra.mxu0 0.0
    %1520 = vmatprep.subr.mxu0 0.0
    %1521 = vmatpush1.msra.mxu0 0.0
    %1522 = vmatprep.subr.mxu0 0.0
    %1523 = vmatpush1.msra.mxu0 0.0
    %1524 = vmatprep.subr.mxu0 0.0
    %1525 = vmatpush1.msra.mxu0 0.0
    %1526 = vmatprep.subr.mxu0 0.0
    %1527 = vmatpush1.msra.mxu0 0.0
    %1528 = vmatprep.subr.mxu0 0.0
    %1529 = vmatpush1.msra.mxu0 0.0
    %1530 = vmatprep.subr.mxu0 0.0
    %1531 = vmatpush1.msra.mxu0 0.0
    %1532 = vmatprep.subr.mxu0 0.0
    %1533 = vmatpush1.msra.mxu0 0.0
    %1534 = vmatprep.subr.mxu0 0.0
    %1535 = vmatpush1.msra.mxu0 0.0
    %1536 = vmatprep.subr.mxu0 0.0
    %1537 = vmatpush1.msra.mxu0 0.0
    %1538 = vmatprep.subr.mxu0 0.0
    %1539 = vmatpush1.msra.mxu0 0.0
    %1540 = vmatprep.mubr.f32.mxu0 0.0
    %1541 = vmatmul.mubr.f32.gmra.mrb[0].mxu0 %v1474
    %v1542 = vpop.f32.mrb[0].mxu0
    %v1543 = vadd.f32 0.0, %v1542
    %v1544 = vpop.f32.mrb[0].mxu0
    %1545 = vdwg.mxu0
    %v1546 = vadd.f32 %v1473, %v1543
    %v1547 = vmul.f32 %v1546, 0.5
    %v1548 = vtanh.pop %v1547
    %v1549 = vadd.f32 %v1548, 1.0
    %v1550 = vmul.f32 %v1549, 0.5
    %v1551 = vtanh.pop %v1546
    %v1552 = vmul.f32 %v1550, %v1459
    %1554 = vrot.lane.b32.xlu0 %v1551, 32
    %v1555 = vpop.permute.xlu0 %1554
    %v1557 = vmul.f32 %v1550, %v1555
    %1559 = vrot.lane.b32.xlu0 %v1557, 32
    %v1560 = vpop.permute.xlu0 %1559
    %v1562 = vadd.f32 %v1552, %v1560
    %v1563 = vtanh.pop %v1562
    %1565 = vrot.lane.b32.xlu0 %v1563, 32
    %v1566 = vpop.permute.xlu0 %1565
    %v1568 = vmul.f32 %v1550, %v1566
    %1570 = vrot.lane.b32.xlu0 %v1568, 64
    %v1571 = vpop.permute.xlu0 %1570
    %s1573 = scalar_lea.vmem [#allocation4], 24
    %1574 = vst.msk [vmem:[%s1573] sm:$0xff] %vm74, %v1571
    %s1575 = scalar_lea.vmem [#allocation2], 32
    %v1576 = vld [vmem:[%s1575] sm:$0xff]
    %v1577 = vsel %vm74, %v1571, 0
    %1579 = vmatprep.subr.mxu0 0.0
    %1580 = vmatpush1.msra.mxu0 %v336
    %1581 = vmatprep.subr.mxu0 0.0
    %1582 = vmatpush1.msra.mxu0 %v337
    %1583 = vmatprep.subr.mxu0 0.0
    %1584 = vmatpush1.msra.mxu0 %v338
    %1585 = vmatprep.subr.mxu0 0.0
    %1586 = vmatpush1.msra.mxu0 %v339
    %1587 = vmatprep.subr.mxu0 0.0
    %1588 = vmatpush1.msra.mxu0 0.0
    %1589 = vmatprep.subr.mxu0 0.0
    %1590 = vmatpush1.msra.mxu0 0.0
    %1591 = vmatprep.subr.mxu0 0.0
    %1592 = vmatpush1.msra.mxu0 0.0
    %1593 = vmatprep.subr.mxu0 0.0
    %1594 = vmatpush1.msra.mxu0 0.0
    %1595 = vmatprep.subr.mxu0 0.0
    %1596 = vmatpush1.msra.mxu0 0.0
    %1597 = vmatprep.subr.mxu0 0.0
    %1598 = vmatpush1.msra.mxu0 0.0
    %1599 = vmatprep.subr.mxu0 0.0
    %1600 = vmatpush1.msra.mxu0 0.0
    %1601 = vmatprep.subr.mxu0 0.0
    %1602 = vmatpush1.msra.mxu0 0.0
    %1603 = vmatprep.subr.mxu0 0.0
    %1604 = vmatpush1.msra.mxu0 0.0
    %1605 = vmatprep.subr.mxu0 0.0
    %1606 = vmatpush1.msra.mxu0 0.0
    %1607 = vmatprep.subr.mxu0 0.0
    %1608 = vmatpush1.msra.mxu0 0.0
    %1609 = vmatprep.subr.mxu0 0.0
    %1610 = vmatpush1.msra.mxu0 0.0
    %1611 = vmatprep.subr.mxu0 0.0
    %1612 = vmatpush1.msra.mxu0 0.0
    %1613 = vmatprep.subr.mxu0 0.0
    %1614 = vmatpush1.msra.mxu0 0.0
    %1615 = vmatprep.subr.mxu0 0.0
    %1616 = vmatpush1.msra.mxu0 0.0
    %1617 = vmatprep.subr.mxu0 0.0
    %1618 = vmatpush1.msra.mxu0 0.0
    %1619 = vmatprep.subr.mxu0 0.0
    %1620 = vmatpush1.msra.mxu0 0.0
    %1621 = vmatprep.subr.mxu0 0.0
    %1622 = vmatpush1.msra.mxu0 0.0
    %1623 = vmatprep.subr.mxu0 0.0
    %1624 = vmatpush1.msra.mxu0 0.0
    %1625 = vmatprep.subr.mxu0 0.0
    %1626 = vmatpush1.msra.mxu0 0.0
    %1627 = vmatprep.subr.mxu0 0.0
    %1628 = vmatpush1.msra.mxu0 0.0
    %1629 = vmatprep.subr.mxu0 0.0
    %1630 = vmatpush1.msra.mxu0 0.0
    %1631 = vmatprep.subr.mxu0 0.0
    %1632 = vmatpush1.msra.mxu0 0.0
    %1633 = vmatprep.subr.mxu0 0.0
    %1634 = vmatpush1.msra.mxu0 0.0
    %1635 = vmatprep.subr.mxu0 0.0
    %1636 = vmatpush1.msra.mxu0 0.0
    %1637 = vmatprep.subr.mxu0 0.0
    %1638 = vmatpush1.msra.mxu0 0.0
    %1639 = vmatprep.subr.mxu0 0.0
    %1640 = vmatpush1.msra.mxu0 0.0
    %1641 = vmatprep.subr.mxu0 0.0
    %1642 = vmatpush1.msra.mxu0 0.0
    %1643 = vmatprep.mubr.f32.mxu0 0.0
    %1644 = vmatmul.mubr.f32.gmra.mrb[0].mxu0 %v1577
    %v1645 = vpop.f32.mrb[0].mxu0
    %v1646 = vadd.f32 0.0, %v1645
    %v1647 = vpop.f32.mrb[0].mxu0
    %1648 = vdwg.mxu0
    %v1649 = vadd.f32 %v1576, %v1646
    %v1650 = vmul.f32 %v1649, 0.5
    %v1651 = vtanh.pop %v1650
    %v1652 = vadd.f32 %v1651, 1.0
    %v1653 = vmul.f32 %v1652, 0.5
    %v1654 = vtanh.pop %v1649
    %v1655 = vmul.f32 %v1653, %v1562
    %1657 = vrot.lane.b32.xlu0 %v1654, 32
    %v1658 = vpop.permute.xlu0 %1657
    %v1660 = vmul.f32 %v1653, %v1658
    %1662 = vrot.lane.b32.xlu0 %v1660, 32
    %v1663 = vpop.permute.xlu0 %1662
    %v1665 = vadd.f32 %v1655, %v1663
    %v1666 = vtanh.pop %v1665
    %1668 = vrot.lane.b32.xlu0 %v1666, 32
    %v1669 = vpop.permute.xlu0 %1668
    %v1671 = vmul.f32 %v1653, %v1669
    %1673 = vrot.lane.b32.xlu0 %v1671, 64
    %v1674 = vpop.permute.xlu0 %1673
    %s1676 = scalar_lea.vmem [#allocation4], 32
    %1677 = vst.msk [vmem:[%s1676] sm:$0xff] %vm74, %v1674
    %s1678 = scalar_lea.vmem [#allocation2], 40
    %v1679 = vld [vmem:[%s1678] sm:$0xff]
    %v1680 = vsel %vm74, %v1674, 0
    %1682 = vmatprep.subr.mxu0 0.0
    %1683 = vmatpush1.msra.mxu0 %v336
    %1684 = vmatprep.subr.mxu0 0.0
    %1685 = vmatpush1.msra.mxu0 %v337
    %1686 = vmatprep.subr.mxu0 0.0
    %1687 = vmatpush1.msra.mxu0 %v338
    %1688 = vmatprep.subr.mxu0 0.0
    %1689 = vmatpush1.msra.mxu0 %v339
    %1690 = vmatprep.subr.mxu0 0.0
    %1691 = vmatpush1.msra.mxu0 0.0
    %1692 = vmatprep.subr.mxu0 0.0
    %1693 = vmatpush1.msra.mxu0 0.0
    %1694 = vmatprep.subr.mxu0 0.0
    %1695 = vmatpush1.msra.mxu0 0.0
    %1696 = vmatprep.subr.mxu0 0.0
    %1697 = vmatpush1.msra.mxu0 0.0
    %1698 = vmatprep.subr.mxu0 0.0
    %1699 = vmatpush1.msra.mxu0 0.0
    %1700 = vmatprep.subr.mxu0 0.0
    %1701 = vmatpush1.msra.mxu0 0.0
    %1702 = vmatprep.subr.mxu0 0.0
    %1703 = vmatpush1.msra.mxu0 0.0
    %1704 = vmatprep.subr.mxu0 0.0
    %1705 = vmatpush1.msra.mxu0 0.0
    %1706 = vmatprep.subr.mxu0 0.0
    %1707 = vmatpush1.msra.mxu0 0.0
    %1708 = vmatprep.subr.mxu0 0.0
    %1709 = vmatpush1.msra.mxu0 0.0
    %1710 = vmatprep.subr.mxu0 0.0
    %1711 = vmatpush1.msra.mxu0 0.0
    %1712 = vmatprep.subr.mxu0 0.0
    %1713 = vmatpush1.msra.mxu0 0.0
    %1714 = vmatprep.subr.mxu0 0.0
    %1715 = vmatpush1.msra.mxu0 0.0
    %1716 = vmatprep.subr.mxu0 0.0
    %1717 = vmatpush1.msra.mxu0 0.0
    %1718 = vmatprep.subr.mxu0 0.0
    %1719 = vmatpush1.msra.mxu0 0.0
    %1720 = vmatprep.subr.mxu0 0.0
    %1721 = vmatpush1.msra.mxu0 0.0
    %1722 = vmatprep.subr.mxu0 0.0
    %1723 = vmatpush1.msra.mxu0 0.0
    %1724 = vmatprep.subr.mxu0 0.0
    %1725 = vmatpush1.msra.mxu0 0.0
    %1726 = vmatprep.subr.mxu0 0.0
    %1727 = vmatpush1.msra.mxu0 0.0
    %1728 = vmatprep.subr.mxu0 0.0
    %1729 = vmatpush1.msra.mxu0 0.0
    %1730 = vmatprep.subr.mxu0 0.0
    %1731 = vmatpush1.msra.mxu0 0.0
    %1732 = vmatprep.subr.mxu0 0.0
    %1733 = vmatpush1.msra.mxu0 0.0
    %1734 = vmatprep.subr.mxu0 0.0
    %1735 = vmatpush1.msra.mxu0 0.0
    %1736 = vmatprep.subr.mxu0 0.0
    %1737 = vmatpush1.msra.mxu0 0.0
    %1738 = vmatprep.subr.mxu0 0.0
    %1739 = vmatpush1.msra.mxu0 0.0
    %1740 = vmatprep.subr.mxu0 0.0
    %1741 = vmatpush1.msra.mxu0 0.0
    %1742 = vmatprep.subr.mxu0 0.0
    %1743 = vmatpush1.msra.mxu0 0.0
    %1744 = vmatprep.subr.mxu0 0.0
    %1745 = vmatpush1.msra.mxu0 0.0
    %1746 = vmatprep.mubr.f32.mxu0 0.0
    %1747 = vmatmul.mubr.f32.gmra.mrb[0].mxu0 %v1680
    %v1748 = vpop.f32.mrb[0].mxu0
    %v1749 = vadd.f32 0.0, %v1748
    %v1750 = vpop.f32.mrb[0].mxu0
    %1751 = vdwg.mxu0
    %v1752 = vadd.f32 %v1679, %v1749
    %v1753 = vmul.f32 %v1752, 0.5
    %v1754 = vtanh.pop %v1753
    %v1755 = vadd.f32 %v1754, 1.0
    %v1756 = vmul.f32 %v1755, 0.5
    %v1757 = vtanh.pop %v1752
    %v1758 = vmul.f32 %v1756, %v1665
    %1760 = vrot.lane.b32.xlu0 %v1757, 32
    %v1761 = vpop.permute.xlu0 %1760
    %v1763 = vmul.f32 %v1756, %v1761
    %1765 = vrot.lane.b32.xlu0 %v1763, 32
    %v1766 = vpop.permute.xlu0 %1765
    %v1768 = vadd.f32 %v1758, %v1766
    %v1769 = vtanh.pop %v1768
    %1771 = vrot.lane.b32.xlu0 %v1769, 32
    %v1772 = vpop.permute.xlu0 %1771
    %v1774 = vmul.f32 %v1756, %v1772
    %1776 = vrot.lane.b32.xlu0 %v1774, 64
    %v1777 = vpop.permute.xlu0 %1776
    %s1779 = scalar_lea.vmem [#allocation4], 40
    %1780 = vst.msk [vmem:[%s1779] sm:$0xff] %vm74, %v1777
    %s1781 = scalar_lea.vmem [#allocation2], 48
    %v1782 = vld [vmem:[%s1781] sm:$0xff]
    %v1783 = vsel %vm74, %v1777, 0
    %1785 = vmatprep.subr.mxu0 0.0
    %1786 = vmatpush1.msra.mxu0 %v336
    %1787 = vmatprep.subr.mxu0 0.0
    %1788 = vmatpush1.msra.mxu0 %v337
    %1789 = vmatprep.subr.mxu0 0.0
    %1790 = vmatpush1.msra.mxu0 %v338
    %1791 = vmatprep.subr.mxu0 0.0
    %1792 = vmatpush1.msra.mxu0 %v339
    %1793 = vmatprep.subr.mxu0 0.0
    %1794 = vmatpush1.msra.mxu0 0.0
    %1795 = vmatprep.subr.mxu0 0.0
    %1796 = vmatpush1.msra.mxu0 0.0
    %1797 = vmatprep.subr.mxu0 0.0
    %1798 = vmatpush1.msra.mxu0 0.0
    %1799 = vmatprep.subr.mxu0 0.0
    %1800 = vmatpush1.msra.mxu0 0.0
    %1801 = vmatprep.subr.mxu0 0.0
    %1802 = vmatpush1.msra.mxu0 0.0
    %1803 = vmatprep.subr.mxu0 0.0
    %1804 = vmatpush1.msra.mxu0 0.0
    %1805 = vmatprep.subr.mxu0 0.0
    %1806 = vmatpush1.msra.mxu0 0.0
    %1807 = vmatprep.subr.mxu0 0.0
    %1808 = vmatpush1.msra.mxu0 0.0
    %1809 = vmatprep.subr.mxu0 0.0
    %1810 = vmatpush1.msra.mxu0 0.0
    %1811 = vmatprep.subr.mxu0 0.0
    %1812 = vmatpush1.msra.mxu0 0.0
    %1813 = vmatprep.subr.mxu0 0.0
    %1814 = vmatpush1.msra.mxu0 0.0
    %1815 = vmatprep.subr.mxu0 0.0
    %1816 = vmatpush1.msra.mxu0 0.0
    %1817 = vmatprep.subr.mxu0 0.0
    %1818 = vmatpush1.msra.mxu0 0.0
    %1819 = vmatprep.subr.mxu0 0.0
    %1820 = vmatpush1.msra.mxu0 0.0
    %1821 = vmatprep.subr.mxu0 0.0
    %1822 = vmatpush1.msra.mxu0 0.0
    %1823 = vmatprep.subr.mxu0 0.0
    %1824 = vmatpush1.msra.mxu0 0.0
    %1825 = vmatprep.subr.mxu0 0.0
    %1826 = vmatpush1.msra.mxu0 0.0
    %1827 = vmatprep.subr.mxu0 0.0
    %1828 = vmatpush1.msra.mxu0 0.0
    %1829 = vmatprep.subr.mxu0 0.0
    %1830 = vmatpush1.msra.mxu0 0.0
    %1831 = vmatprep.subr.mxu0 0.0
    %1832 = vmatpush1.msra.mxu0 0.0
    %1833 = vmatprep.subr.mxu0 0.0
    %1834 = vmatpush1.msra.mxu0 0.0
    %1835 = vmatprep.subr.mxu0 0.0
    %1836 = vmatpush1.msra.mxu0 0.0
    %1837 = vmatprep.subr.mxu0 0.0
    %1838 = vmatpush1.msra.mxu0 0.0
    %1839 = vmatprep.subr.mxu0 0.0
    %1840 = vmatpush1.msra.mxu0 0.0
    %1841 = vmatprep.subr.mxu0 0.0
    %1842 = vmatpush1.msra.mxu0 0.0
    %1843 = vmatprep.subr.mxu0 0.0
    %1844 = vmatpush1.msra.mxu0 0.0
    %1845 = vmatprep.subr.mxu0 0.0
    %1846 = vmatpush1.msra.mxu0 0.0
    %1847 = vmatprep.subr.mxu0 0.0
    %1848 = vmatpush1.msra.mxu0 0.0
    %1849 = vmatprep.mubr.f32.mxu0 0.0
    %1850 = vmatmul.mubr.f32.gmra.mrb[0].mxu0 %v1783
    %v1851 = vpop.f32.mrb[0].mxu0
    %v1852 = vadd.f32 0.0, %v1851
    %v1853 = vpop.f32.mrb[0].mxu0
    %1854 = vdwg.mxu0
    %v1855 = vadd.f32 %v1782, %v1852
    %v1856 = vmul.f32 %v1855, 0.5
    %v1857 = vtanh.pop %v1856
    %v1858 = vadd.f32 %v1857, 1.0
    %v1859 = vmul.f32 %v1858, 0.5
    %v1860 = vtanh.pop %v1855
    %v1861 = vmul.f32 %v1859, %v1768
    %1863 = vrot.lane.b32.xlu0 %v1860, 32
    %v1864 = vpop.permute.xlu0 %1863
    %v1866 = vmul.f32 %v1859, %v1864
    %1868 = vrot.lane.b32.xlu0 %v1866, 32
    %v1869 = vpop.permute.xlu0 %1868
    %v1871 = vadd.f32 %v1861, %v1869
    %v1872 = vtanh.pop %v1871
    %1874 = vrot.lane.b32.xlu0 %v1872, 32
    %v1875 = vpop.permute.xlu0 %1874
    %v1877 = vmul.f32 %v1859, %v1875
    %1879 = vrot.lane.b32.xlu0 %v1877, 64
    %v1880 = vpop.permute.xlu0 %1879
    %s1882 = scalar_lea.vmem [#allocation4], 48
    %1883 = vst.msk [vmem:[%s1882] sm:$0xff] %vm74, %v1880
    %s1884 = scalar_lea.vmem [#allocation2], 56
    %v1885 = vld [vmem:[%s1884] sm:$0xff]
    %v1886 = vsel %vm74, %v1880, 0
    %1888 = vmatprep.subr.mxu0 0.0
    %1889 = vmatpush1.msra.mxu0 %v336
    %1890 = vmatprep.subr.mxu0 0.0
    %1891 = vmatpush1.msra.mxu0 %v337
    %1892 = vmatprep.subr.mxu0 0.0
    %1893 = vmatpush1.msra.mxu0 %v338
    %1894 = vmatprep.subr.mxu0 0.0
    %1895 = vmatpush1.msra.mxu0 %v339
    %1896 = vmatprep.subr.mxu0 0.0
    %1897 = vmatpush1.msra.mxu0 0.0
    %1898 = vmatprep.subr.mxu0 0.0
    %1899 = vmatpush1.msra.mxu0 0.0
    %1900 = vmatprep.subr.mxu0 0.0
    %1901 = vmatpush1.msra.mxu0 0.0
    %1902 = vmatprep.subr.mxu0 0.0
    %1903 = vmatpush1.msra.mxu0 0.0
    %1904 = vmatprep.subr.mxu0 0.0
    %1905 = vmatpush1.msra.mxu0 0.0
    %1906 = vmatprep.subr.mxu0 0.0
    %1907 = vmatpush1.msra.mxu0 0.0
    %1908 = vmatprep.subr.mxu0 0.0
    %1909 = vmatpush1.msra.mxu0 0.0
    %1910 = vmatprep.subr.mxu0 0.0
    %1911 = vmatpush1.msra.mxu0 0.0
    %1912 = vmatprep.subr.mxu0 0.0
    %1913 = vmatpush1.msra.mxu0 0.0
    %1914 = vmatprep.subr.mxu0 0.0
    %1915 = vmatpush1.msra.mxu0 0.0
    %1916 = vmatprep.subr.mxu0 0.0
    %1917 = vmatpush1.msra.mxu0 0.0
    %1918 = vmatprep.subr.mxu0 0.0
    %1919 = vmatpush1.msra.mxu0 0.0
    %1920 = vmatprep.subr.mxu0 0.0
    %1921 = vmatpush1.msra.mxu0 0.0
    %1922 = vmatprep.subr.mxu0 0.0
    %1923 = vmatpush1.msra.mxu0 0.0
    %1924 = vmatprep.subr.mxu0 0.0
    %1925 = vmatpush1.msra.mxu0 0.0
    %1926 = vmatprep.subr.mxu0 0.0
    %1927 = vmatpush1.msra.mxu0 0.0
    %1928 = vmatprep.subr.mxu0 0.0
    %1929 = vmatpush1.msra.mxu0 0.0
    %1930 = vmatprep.subr.mxu0 0.0
    %1931 = vmatpush1.msra.mxu0 0.0
    %1932 = vmatprep.subr.mxu0 0.0
    %1933 = vmatpush1.msra.mxu0 0.0
    %1934 = vmatprep.subr.mxu0 0.0
    %1935 = vmatpush1.msra.mxu0 0.0
    %1936 = vmatprep.subr.mxu0 0.0
    %1937 = vmatpush1.msra.mxu0 0.0
    %1938 = vmatprep.subr.mxu0 0.0
    %1939 = vmatpush1.msra.mxu0 0.0
    %1940 = vmatprep.subr.mxu0 0.0
    %1941 = vmatpush1.msra.mxu0 0.0
    %1942 = vmatprep.subr.mxu0 0.0
    %1943 = vmatpush1.msra.mxu0 0.0
    %1944 = vmatprep.subr.mxu0 0.0
    %1945 = vmatpush1.msra.mxu0 0.0
    %1946 = vmatprep.subr.mxu0 0.0
    %1947 = vmatpush1.msra.mxu0 0.0
    %1948 = vmatprep.subr.mxu0 0.0
    %1949 = vmatpush1.msra.mxu0 0.0
    %1950 = vmatprep.subr.mxu0 0.0
    %1951 = vmatpush1.msra.mxu0 0.0
    %1952 = vmatprep.mubr.f32.mxu0 0.0
    %1953 = vmatmul.mubr.f32.gmra.mrb[0].mxu0 %v1886
    %v1954 = vpop.f32.mrb[0].mxu0
    %v1955 = vadd.f32 0.0, %v1954
    %v1956 = vpop.f32.mrb[0].mxu0
    %1957 = vdwg.mxu0
    %v1958 = vadd.f32 %v1885, %v1955
    %v1959 = vmul.f32 %v1958, 0.5
    %v1960 = vtanh.pop %v1959
    %v1961 = vadd.f32 %v1960, 1.0
    %v1962 = vmul.f32 %v1961, 0.5
    %v1963 = vtanh.pop %v1958
    %v1964 = vmul.f32 %v1962, %v1871
    %1966 = vrot.lane.b32.xlu0 %v1963, 32
    %v1967 = vpop.permute.xlu0 %1966
    %v1969 = vmul.f32 %v1962, %v1967
    %1971 = vrot.lane.b32.xlu0 %v1969, 32
    %v1972 = vpop.permute.xlu0 %1971
    %v1974 = vadd.f32 %v1964, %v1972
    %v1975 = vtanh.pop %v1974
    %1977 = vrot.lane.b32.xlu0 %v1975, 32
    %v1978 = vpop.permute.xlu0 %1977
    %v1980 = vmul.f32 %v1962, %v1978
    %1982 = vrot.lane.b32.xlu0 %v1980, 64
    %v1983 = vpop.permute.xlu0 %1982
    %s1985 = scalar_lea.vmem [#allocation4], 56
    %1986 = vst.msk [vmem:[%s1985] sm:$0xff] %vm74, %v1983
    %v1987 = vld [vmem:[#allocation4] sm:$0xff]
    %v1988 = vld [vmem:[#allocation4 + $0x8] sm:$0xff]
    %v1989 = vld [vmem:[#allocation4 + $0x10] sm:$0xff]
    %v1990 = vld [vmem:[#allocation4 + $0x18] sm:$0xff]
    %v1991 = vld [vmem:[#allocation4 + $0x20] sm:$0xff]
    %v1992 = vld [vmem:[#allocation4 + $0x28] sm:$0xff]
    %v1993 = vld [vmem:[#allocation4 + $0x30] sm:$0xff]
    %v1994 = vld [vmem:[#allocation4 + $0x38] sm:$0xff]
    %v1995 = vld [vmem:[#allocation5] sm:$0xff]
    %v1996 = vld [vmem:[#allocation5 + $0x8] sm:$0xff]
    %v1997 = vld [vmem:[#allocation5 + $0x10] sm:$0xff]
    %v1998 = vld [vmem:[#allocation5 + $0x18] sm:$0xff]
    %v1999 = vld [vmem:[#allocation5 + $0x20] sm:$0xff]
    %v2000 = vld [vmem:[#allocation5 + $0x28] sm:$0xff]
    %v2001 = vld [vmem:[#allocation5 + $0x30] sm:$0xff]
    %v2002 = vld [vmem:[#allocation5 + $0x38] sm:$0xff]
    %v2003 = vld [vmem:[%s7] sm:$0xff]
    %v2004 = vld [vmem:[%s7 + $0x8] sm:$0xff]
    %v2005 = vld [vmem:[%s7 + $0x10] sm:$0xff]
    %v2006 = vld [vmem:[%s7 + $0x18] sm:$0xff]
    %v2007 = vld [vmem:[#allocation6] sm:$0xff]
    %v2008 = vld [vmem:[#allocation6 + $0x8] sm:$0xff]
    %v2009 = vld [vmem:[#allocation6 + $0x10] sm:$0xff]
    %v2010 = vld [vmem:[#allocation6 + $0x18] sm:$0xff]
    %v2012 = vsel %vm74, %v1995, 0
    %v2015 = vsel %vm74, %v1996, 0
    %v2018 = vsel %vm74, %v1997, 0
    %v2021 = vsel %vm74, %v1998, 0
    %v2024 = vsel %vm74, %v1999, 0
    %v2027 = vsel %vm74, %v2000, 0
    %v2030 = vsel %vm74, %v2001, 0
    %v2033 = vsel %vm74, %v2002, 0
    %2035 = vmatprep.subr.mxu0 0.0
    %2036 = vmatpush1.msra.mxu0 %v2007
    %2037 = vmatprep.subr.mxu0 0.0
    %2038 = vmatpush1.msra.mxu0 %v2008
    %2039 = vmatprep.subr.mxu0 0.0
    %2040 = vmatpush1.msra.mxu0 %v2009
    %2041 = vmatprep.subr.mxu0 0.0
    %2042 = vmatpush1.msra.mxu0 %v2010
    %2043 = vmatprep.subr.mxu0 0.0
    %2044 = vmatpush1.msra.mxu0 0.0
    %2045 = vmatprep.subr.mxu0 0.0
    %2046 = vmatpush1.msra.mxu0 0.0
    %2047 = vmatprep.subr.mxu0 0.0
    %2048 = vmatpush1.msra.mxu0 0.0
    %2049 = vmatprep.subr.mxu0 0.0
    %2050 = vmatpush1.msra.mxu0 0.0
    %2051 = vmatprep.subr.mxu0 0.0
    %2052 = vmatpush1.msra.mxu0 0.0
    %2053 = vmatprep.subr.mxu0 0.0
    %2054 = vmatpush1.msra.mxu0 0.0
    %2055 = vmatprep.subr.mxu0 0.0
    %2056 = vmatpush1.msra.mxu0 0.0
    %2057 = vmatprep.subr.mxu0 0.0
    %2058 = vmatpush1.msra.mxu0 0.0
    %2059 = vmatprep.subr.mxu0 0.0
    %2060 = vmatpush1.msra.mxu0 0.0
    %2061 = vmatprep.subr.mxu0 0.0
    %2062 = vmatpush1.msra.mxu0 0.0
    %2063 = vmatprep.subr.mxu0 0.0
    %2064 = vmatpush1.msra.mxu0 0.0
    %2065 = vmatprep.subr.mxu0 0.0
    %2066 = vmatpush1.msra.mxu0 0.0
    %2067 = vmatprep.subr.mxu0 0.0
    %2068 = vmatpush1.msra.mxu0 0.0
    %2069 = vmatprep.subr.mxu0 0.0
    %2070 = vmatpush1.msra.mxu0 0.0
    %2071 = vmatprep.subr.mxu0 0.0
    %2072 = vmatpush1.msra.mxu0 0.0
    %2073 = vmatprep.subr.mxu0 0.0
    %2074 = vmatpush1.msra.mxu0 0.0
    %2075 = vmatprep.subr.mxu0 0.0
    %2076 = vmatpush1.msra.mxu0 0.0
    %2077 = vmatprep.subr.mxu0 0.0
    %2078 = vmatpush1.msra.mxu0 0.0
    %2079 = vmatprep.subr.mxu0 0.0
    %2080 = vmatpush1.msra.mxu0 0.0
    %2081 = vmatprep.subr.mxu0 0.0
    %2082 = vmatpush1.msra.mxu0 0.0
    %2083 = vmatprep.subr.mxu0 0.0
    %2084 = vmatpush1.msra.mxu0 0.0
    %2085 = vmatprep.subr.mxu0 0.0
    %2086 = vmatpush1.msra.mxu0 0.0
    %2087 = vmatprep.subr.mxu0 0.0
    %2088 = vmatpush1.msra.mxu0 0.0
    %2089 = vmatprep.subr.mxu0 0.0
    %2090 = vmatpush1.msra.mxu0 0.0
    %2091 = vmatprep.subr.mxu0 0.0
    %2092 = vmatpush1.msra.mxu0 0.0
    %2093 = vmatprep.subr.mxu0 0.0
    %2094 = vmatpush1.msra.mxu0 0.0
    %2095 = vmatprep.subr.mxu0 0.0
    %2096 = vmatpush1.msra.mxu0 0.0
    %2097 = vmatprep.subr.mxu0 0.0
    %2098 = vmatpush1.msra.mxu0 0.0
    %2099 = vmatprep.mubr.f32.mxu0 0.0
    %2100 = vmatmul.mubr.f32.gmra.mrb[0].mxu0 %v2012
    %v2101 = vpop.f32.mrb[0].mxu0
    %v2102 = vadd.f32 0.0, %v2101
    %v2103 = vpop.f32.mrb[0].mxu0
    %2104 = vmatprep.mubr.f32.mxu0 0.0
    %2105 = vmatmul.mubr.f32.gmra.mrb[0].mxu0 %v2015
    %v2106 = vpop.f32.mrb[0].mxu0
    %v2107 = vadd.f32 0.0, %v2106
    %v2108 = vpop.f32.mrb[0].mxu0
    %2109 = vmatprep.mubr.f32.mxu0 0.0
    %2110 = vmatmul.mubr.f32.gmra.mrb[0].mxu0 %v2018
    %v2111 = vpop.f32.mrb[0].mxu0
    %v2112 = vadd.f32 0.0, %v2111
    %v2113 = vpop.f32.mrb[0].mxu0
    %2114 = vmatprep.mubr.f32.mxu0 0.0
    %2115 = vmatmul.mubr.f32.gmra.mrb[0].mxu0 %v2021
    %v2116 = vpop.f32.mrb[0].mxu0
    %v2117 = vadd.f32 0.0, %v2116
    %v2118 = vpop.f32.mrb[0].mxu0
    %2119 = vmatprep.mubr.f32.mxu0 0.0
    %2120 = vmatmul.mubr.f32.gmra.mrb[0].mxu0 %v2024
    %v2121 = vpop.f32.mrb[0].mxu0
    %v2122 = vadd.f32 0.0, %v2121
    %v2123 = vpop.f32.mrb[0].mxu0
    %2124 = vmatprep.mubr.f32.mxu0 0.0
    %2125 = vmatmul.mubr.f32.gmra.mrb[0].mxu0 %v2027
    %v2126 = vpop.f32.mrb[0].mxu0
    %v2127 = vadd.f32 0.0, %v2126
    %v2128 = vpop.f32.mrb[0].mxu0
    %2129 = vmatprep.mubr.f32.mxu0 0.0
    %2130 = vmatmul.mubr.f32.gmra.mrb[0].mxu0 %v2030
    %v2131 = vpop.f32.mrb[0].mxu0
    %v2132 = vadd.f32 0.0, %v2131
    %v2133 = vpop.f32.mrb[0].mxu0
    %2134 = vmatprep.mubr.f32.mxu0 0.0
    %2135 = vmatmul.mubr.f32.gmra.mrb[0].mxu0 %v2033
    %v2136 = vpop.f32.mrb[0].mxu0
    %v2137 = vadd.f32 0.0, %v2136
    %v2138 = vpop.f32.mrb[0].mxu0
    %2139 = vdwg.mxu0
    %v2141 = vsel %vm74, %v1987, 0
    %v2144 = vsel %vm74, %v1988, 0
    %v2147 = vsel %vm74, %v1989, 0
    %v2150 = vsel %vm74, %v1990, 0
    %v2153 = vsel %vm74, %v1991, 0
    %v2156 = vsel %vm74, %v1992, 0
    %v2159 = vsel %vm74, %v1993, 0
    %v2162 = vsel %vm74, %v1994, 0
    %2164 = vmatprep.subr.mxu0 0.0
    %2165 = vmatpush1.msra.mxu0 %v2003
    %2166 = vmatprep.subr.mxu0 0.0
    %2167 = vmatpush1.msra.mxu0 %v2004
    %2168 = vmatprep.subr.mxu0 0.0
    %2169 = vmatpush1.msra.mxu0 %v2005
    %2170 = vmatprep.subr.mxu0 0.0
    %2171 = vmatpush1.msra.mxu0 %v2006
    %2172 = vmatprep.subr.mxu0 0.0
    %2173 = vmatpush1.msra.mxu0 0.0
    %2174 = vmatprep.subr.mxu0 0.0
    %2175 = vmatpush1.msra.mxu0 0.0
    %2176 = vmatprep.subr.mxu0 0.0
    %2177 = vmatpush1.msra.mxu0 0.0
    %2178 = vmatprep.subr.mxu0 0.0
    %2179 = vmatpush1.msra.mxu0 0.0
    %2180 = vmatprep.subr.mxu0 0.0
    %2181 = vmatpush1.msra.mxu0 0.0
    %2182 = vmatprep.subr.mxu0 0.0
    %2183 = vmatpush1.msra.mxu0 0.0
    %2184 = vmatprep.subr.mxu0 0.0
    %2185 = vmatpush1.msra.mxu0 0.0
    %2186 = vmatprep.subr.mxu0 0.0
    %2187 = vmatpush1.msra.mxu0 0.0
    %2188 = vmatprep.subr.mxu0 0.0
    %2189 = vmatpush1.msra.mxu0 0.0
    %2190 = vmatprep.subr.mxu0 0.0
    %2191 = vmatpush1.msra.mxu0 0.0
    %2192 = vmatprep.subr.mxu0 0.0
    %2193 = vmatpush1.msra.mxu0 0.0
    %2194 = vmatprep.subr.mxu0 0.0
    %2195 = vmatpush1.msra.mxu0 0.0
    %2196 = vmatprep.subr.mxu0 0.0
    %2197 = vmatpush1.msra.mxu0 0.0
    %2198 = vmatprep.subr.mxu0 0.0
    %2199 = vmatpush1.msra.mxu0 0.0
    %2200 = vmatprep.subr.mxu0 0.0
    %2201 = vmatpush1.msra.mxu0 0.0
    %2202 = vmatprep.subr.mxu0 0.0
    %2203 = vmatpush1.msra.mxu0 0.0
    %2204 = vmatprep.subr.mxu0 0.0
    %2205 = vmatpush1.msra.mxu0 0.0
    %2206 = vmatprep.subr.mxu0 0.0
    %2207 = vmatpush1.msra.mxu0 0.0
    %2208 = vmatprep.subr.mxu0 0.0
    %2209 = vmatpush1.msra.mxu0 0.0
    %2210 = vmatprep.subr.mxu0 0.0
    %2211 = vmatpush1.msra.mxu0 0.0
    %2212 = vmatprep.subr.mxu0 0.0
    %2213 = vmatpush1.msra.mxu0 0.0
    %2214 = vmatprep.subr.mxu0 0.0
    %2215 = vmatpush1.msra.mxu0 0.0
    %2216 = vmatprep.subr.mxu0 0.0
    %2217 = vmatpush1.msra.mxu0 0.0
    %2218 = vmatprep.subr.mxu0 0.0
    %2219 = vmatpush1.msra.mxu0 0.0
    %2220 = vmatprep.subr.mxu0 0.0
    %2221 = vmatpush1.msra.mxu0 0.0
    %2222 = vmatprep.subr.mxu0 0.0
    %2223 = vmatpush1.msra.mxu0 0.0
    %2224 = vmatprep.subr.mxu0 0.0
    %2225 = vmatpush1.msra.mxu0 0.0
    %2226 = vmatprep.subr.mxu0 0.0
    %2227 = vmatpush1.msra.mxu0 0.0
    %2228 = vmatprep.mubr.f32.mxu0 0.0
    %2229 = vmatmul.mubr.f32.gmra.mrb[0].mxu0 %v2141
    %v2230 = vpop.f32.mrb[0].mxu0
    %v2231 = vadd.f32 %v2102, %v2230
    %v2232 = vpop.f32.mrb[0].mxu0
    %2233 = vmatprep.mubr.f32.mxu0 0.0
    %2234 = vmatmul.mubr.f32.gmra.mrb[0].mxu0 %v2144
    %v2235 = vpop.f32.mrb[0].mxu0
    %v2236 = vadd.f32 %v2107, %v2235
    %v2237 = vpop.f32.mrb[0].mxu0
    %2238 = vmatprep.mubr.f32.mxu0 0.0
    %2239 = vmatmul.mubr.f32.gmra.mrb[0].mxu0 %v2147
    %v2240 = vpop.f32.mrb[0].mxu0
    %v2241 = vadd.f32 %v2112, %v2240
    %v2242 = vpop.f32.mrb[0].mxu0
    %2243 = vmatprep.mubr.f32.mxu0 0.0
    %2244 = vmatmul.mubr.f32.gmra.mrb[0].mxu0 %v2150
    %v2245 = vpop.f32.mrb[0].mxu0
    %v2246 = vadd.f32 %v2117, %v2245
    %v2247 = vpop.f32.mrb[0].mxu0
    %2248 = vmatprep.mubr.f32.mxu0 0.0
    %2249 = vmatmul.mubr.f32.gmra.mrb[0].mxu0 %v2153
    %v2250 = vpop.f32.mrb[0].mxu0
    %v2251 = vadd.f32 %v2122, %v2250
    %v2252 = vpop.f32.mrb[0].mxu0
    %2253 = vmatprep.mubr.f32.mxu0 0.0
    %2254 = vmatmul.mubr.f32.gmra.mrb[0].mxu0 %v2156
    %v2255 = vpop.f32.mrb[0].mxu0
    %v2256 = vadd.f32 %v2127, %v2255
    %v2257 = vpop.f32.mrb[0].mxu0
    %2258 = vmatprep.mubr.f32.mxu0 0.0
    %2259 = vmatmul.mubr.f32.gmra.mrb[0].mxu0 %v2159
    %v2260 = vpop.f32.mrb[0].mxu0
    %v2261 = vadd.f32 %v2132, %v2260
    %v2262 = vpop.f32.mrb[0].mxu0
    %2263 = vmatprep.mubr.f32.mxu0 0.0
    %2264 = vmatmul.mubr.f32.gmra.mrb[0].mxu0 %v2162
    %v2265 = vpop.f32.mrb[0].mxu0
    %v2266 = vadd.f32 %v2137, %v2265
    %v2267 = vpop.f32.mrb[0].mxu0
    %2268 = vdwg.mxu0
    %v2269 = vld [vmem:[%s9] sm:$0x1]
    %v2271 = vlaneseq
    %v2272 = vshrl.u32 %v2271, 7
    %v2273 = vsub.s32 0, %v2272
    %v2274 = vrot.slane %v2269, %v2273
    %v2276 = vadd.f32 %v2231, %v2274
    %v2277 = vadd.f32 %v2236, %v2274
    %v2278 = vadd.f32 %v2241, %v2274
    %v2279 = vadd.f32 %v2246, %v2274
    %v2280 = vadd.f32 %v2251, %v2274
    %v2281 = vadd.f32 %v2256, %v2274
    %v2282 = vadd.f32 %v2261, %v2274
    %v2283 = vadd.f32 %v2266, %v2274
    %v2284 = vmax.f32 %v2276, 0.0
    %v2285 = vmax.f32 %v2277, 0.0
    %v2286 = vmax.f32 %v2278, 0.0
    %v2287 = vmax.f32 %v2279, 0.0
    %v2288 = vmax.f32 %v2280, 0.0
    %v2289 = vmax.f32 %v2281, 0.0
    %v2290 = vmax.f32 %v2282, 0.0
    %v2291 = vmax.f32 %v2283, 0.0
    %v2292 = vld [vmem:[%s10] sm:$0xff]
    %v2293 = vld [vmem:[%s10 + $0x8] sm:$0xff]
    %v2294 = vld [vmem:[%s10 + $0x10] sm:$0xff]
    %v2295 = vld [vmem:[%s10 + $0x18] sm:$0xff]
    %v2296 = vld [vmem:[%s10 + $0x20] sm:$0xff]
    %v2297 = vld [vmem:[%s10 + $0x28] sm:$0xff]
    %v2298 = vld [vmem:[%s10 + $0x30] sm:$0xff]
    %v2299 = vld [vmem:[%s10 + $0x38] sm:$0xff]
    %v2300 = vld [vmem:[%s11] sm:$0x1]
    %v2302 = vlaneseq
    %v2303 = vshrl.u32 %v2302, 7
    %v2304 = vsub.s32 0, %v2303
    %v2305 = vrot.slane %v2300, %v2304
    %vm2307 = vcmask 523264
    %v2309 = vsel %vm2307, %v2284, 0
    %v2312 = vsel %vm2307, %v2285, 0
    %v2315 = vsel %vm2307, %v2286, 0
    %v2318 = vsel %vm2307, %v2287, 0
    %v2321 = vsel %vm2307, %v2288, 0
    %v2324 = vsel %vm2307, %v2289, 0
    %v2327 = vsel %vm2307, %v2290, 0
    %v2330 = vsel %vm2307, %v2291, 0
    %2332 = vmatprep.subr.mxu0 0.0
    %2333 = vmatpush1.msra.mxu0 %v2292
    %2334 = vmatprep.subr.mxu0 0.0
    %2335 = vmatpush1.msra.mxu0 %v2293
    %2336 = vmatprep.subr.mxu0 0.0
    %2337 = vmatpush1.msra.mxu0 %v2294
    %2338 = vmatprep.subr.mxu0 0.0
    %2339 = vmatpush1.msra.mxu0 %v2295
    %2340 = vmatprep.subr.mxu0 0.0
    %2341 = vmatpush1.msra.mxu0 %v2296
    %2342 = vmatprep.subr.mxu0 0.0
    %2343 = vmatpush1.msra.mxu0 %v2297
    %2344 = vmatprep.subr.mxu0 0.0
    %2345 = vmatpush1.msra.mxu0 %v2298
    %2346 = vmatprep.subr.mxu0 0.0
    %2347 = vmatpush1.msra.mxu0 %v2299
    %2348 = vmatprep.subr.mxu0 0.0
    %2349 = vmatpush1.msra.mxu0 0.0
    %2350 = vmatprep.subr.mxu0 0.0
    %2351 = vmatpush1.msra.mxu0 0.0
    %2352 = vmatprep.subr.mxu0 0.0
    %2353 = vmatpush1.msra.mxu0 0.0
    %2354 = vmatprep.subr.mxu0 0.0
    %2355 = vmatpush1.msra.mxu0 0.0
    %2356 = vmatprep.subr.mxu0 0.0
    %2357 = vmatpush1.msra.mxu0 0.0
    %2358 = vmatprep.subr.mxu0 0.0
    %2359 = vmatpush1.msra.mxu0 0.0
    %2360 = vmatprep.subr.mxu0 0.0
    %2361 = vmatpush1.msra.mxu0 0.0
    %2362 = vmatprep.subr.mxu0 0.0
    %2363 = vmatpush1.msra.mxu0 0.0
    %2364 = vmatprep.subr.mxu0 0.0
    %2365 = vmatpush1.msra.mxu0 0.0
    %2366 = vmatprep.subr.mxu0 0.0
    %2367 = vmatpush1.msra.mxu0 0.0
    %2368 = vmatprep.subr.mxu0 0.0
    %2369 = vmatpush1.msra.mxu0 0.0
    %2370 = vmatprep.subr.mxu0 0.0
    %2371 = vmatpush1.msra.mxu0 0.0
    %2372 = vmatprep.subr.mxu0 0.0
    %2373 = vmatpush1.msra.mxu0 0.0
    %2374 = vmatprep.subr.mxu0 0.0
    %2375 = vmatpush1.msra.mxu0 0.0
    %2376 = vmatprep.subr.mxu0 0.0
    %2377 = vmatpush1.msra.mxu0 0.0
    %2378 = vmatprep.subr.mxu0 0.0
    %2379 = vmatpush1.msra.mxu0 0.0
    %2380 = vmatprep.subr.mxu0 0.0
    %2381 = vmatpush1.msra.mxu0 0.0
    %2382 = vmatprep.subr.mxu0 0.0
    %2383 = vmatpush1.msra.mxu0 0.0
    %2384 = vmatprep.subr.mxu0 0.0
    %2385 = vmatpush1.msra.mxu0 0.0
    %2386 = vmatprep.subr.mxu0 0.0
    %2387 = vmatpush1.msra.mxu0 0.0
    %2388 = vmatprep.subr.mxu0 0.0
    %2389 = vmatpush1.msra.mxu0 0.0
    %2390 = vmatprep.subr.mxu0 0.0
    %2391 = vmatpush1.msra.mxu0 0.0
    %2392 = vmatprep.subr.mxu0 0.0
    %2393 = vmatpush1.msra.mxu0 0.0
    %2394 = vmatprep.subr.mxu0 0.0
    %2395 = vmatpush1.msra.mxu0 0.0
    %2396 = vmatprep.mubr.f32.mxu0 0.0
    %2397 = vmatmul.mubr.f32.gmra.mrb[0].mxu0 %v2309
    %v2398 = vpop.f32.mrb[0].mxu0
    %v2399 = vadd.f32 %v2305, %v2398
    %v2400 = vpop.f32.mrb[0].mxu0
    %2401 = vmatprep.mubr.f32.mxu0 0.0
    %2402 = vmatmul.mubr.f32.gmra.mrb[0].mxu0 %v2312
    %v2403 = vpop.f32.mrb[0].mxu0
    %v2404 = vadd.f32 %v2305, %v2403
    %v2405 = vpop.f32.mrb[0].mxu0
    %2406 = vmatprep.mubr.f32.mxu0 0.0
    %2407 = vmatmul.mubr.f32.gmra.mrb[0].mxu0 %v2315
    %v2408 = vpop.f32.mrb[0].mxu0
    %v2409 = vadd.f32 %v2305, %v2408
    %v2410 = vpop.f32.mrb[0].mxu0
    %2411 = vmatprep.mubr.f32.mxu0 0.0
    %2412 = vmatmul.mubr.f32.gmra.mrb[0].mxu0 %v2318
    %v2413 = vpop.f32.mrb[0].mxu0
    %v2414 = vadd.f32 %v2305, %v2413
    %v2415 = vpop.f32.mrb[0].mxu0
    %2416 = vmatprep.mubr.f32.mxu0 0.0
    %2417 = vmatmul.mubr.f32.gmra.mrb[0].mxu0 %v2321
    %v2418 = vpop.f32.mrb[0].mxu0
    %v2419 = vadd.f32 %v2305, %v2418
    %v2420 = vpop.f32.mrb[0].mxu0
    %2421 = vmatprep.mubr.f32.mxu0 0.0
    %2422 = vmatmul.mubr.f32.gmra.mrb[0].mxu0 %v2324
    %v2423 = vpop.f32.mrb[0].mxu0
    %v2424 = vadd.f32 %v2305, %v2423
    %v2425 = vpop.f32.mrb[0].mxu0
    %2426 = vmatprep.mubr.f32.mxu0 0.0
    %2427 = vmatmul.mubr.f32.gmra.mrb[0].mxu0 %v2327
    %v2428 = vpop.f32.mrb[0].mxu0
    %v2429 = vadd.f32 %v2305, %v2428
    %v2430 = vpop.f32.mrb[0].mxu0
    %2431 = vmatprep.mubr.f32.mxu0 0.0
    %2432 = vmatmul.mubr.f32.gmra.mrb[0].mxu0 %v2330
    %v2433 = vpop.f32.mrb[0].mxu0
    %v2434 = vadd.f32 %v2305, %v2433
    %v2435 = vpop.f32.mrb[0].mxu0
    %2436 = vdwg.mxu0
    %2437 = vst.msk [vmem:[%s12] sm:$0xff] %vm74, %v2399
    %2438 = vst.msk [vmem:[%s12 + $0x8] sm:$0xff] %vm74, %v2404
    %2439 = vst.msk [vmem:[%s12 + $0x10] sm:$0xff] %vm74, %v2409
    %2440 = vst.msk [vmem:[%s12 + $0x18] sm:$0xff] %vm74, %v2414
    %2441 = vst.msk [vmem:[%s12 + $0x20] sm:$0xff] %vm74, %v2419
    %2442 = vst.msk [vmem:[%s12 + $0x28] sm:$0xff] %vm74, %v2424
    %2443 = vst.msk [vmem:[%s12 + $0x30] sm:$0xff] %vm74, %v2429
    %2444 = vst.msk [vmem:[%s12 + $0x38] sm:$0xff] %vm74, %v2434
    // Predicated region
    $region54: #{tpu_custom_call.1} parent=1 // pred_check
      _
    $region55: #{tpu_custom_call.1} parent=1 // pred_check_branch
      %2446 = sbr.rel (0) target = $region57
    $region56: #{tpu_custom_call.1} parent=1 // pred_region
      _
    $region57: #{tpu_custom_call.1} parent=1 // pred_fallthru
      _
    // Predicated region
    $region58: #{tpu_custom_call.1} parent=1 // pred_check
      _
    $region59: #{tpu_custom_call.1} parent=1 // pred_check_branch
      %2448 = sbr.rel (0) target = $region61
    $region60: #{tpu_custom_call.1} parent=1 // pred_region
      _
    $region61: #{tpu_custom_call.1} parent=1 // pred_fallthru
      _
    %2449 = vsyncpa [#allocation7], 1

</llo_original>
